<compile_context>
chip_gen: v6e
topology: v6e:2x2x1
jax: 0.10.0
libtpu: 0.0.40
codegen_flags: <defaults>
</compile_context>

<pallas_src>
import math
import functools

import jax
import jax.numpy as jnp
from jax.experimental import pallas as pl
from jax.experimental.pallas import tpu as pltpu


# ----------------------------- math helpers ------------------------------
_ERF_P = 0.3275911
_ERF_A1 = 0.254829592
_ERF_A2 = -0.284496736
_ERF_A3 = 1.421413741
_ERF_A4 = -1.453152027
_ERF_A5 = 1.061405429


def _erf(x, recip=None):
    # Abramowitz & Stegun 7.1.26, |err| < 1.5e-7.  Uses only exp/mul/add and
    # one reciprocal, so it lowers cleanly inside the Mosaic kernel.
    if recip is None:
        recip = lambda v: 1.0 / v
    s = jnp.where(x >= 0.0, 1.0, -1.0)
    a = jnp.abs(x)
    t = recip(1.0 + _ERF_P * a)
    poly = ((((_ERF_A5 * t + _ERF_A4) * t + _ERF_A3) * t + _ERF_A2) * t + _ERF_A1) * t
    return s * (1.0 - poly * jnp.exp(-a * a))


def _gelu(x, recip=None):
    # PyTorch F.gelu default (erf-based, non-approximate).
    # TODO(synk): switch to an EUP-native erf once Mosaic exposes a lowering.
    return 0.5 * x * (1.0 + _erf(x * (1.0 / math.sqrt(2.0)), recip))


def _layernorm(x, w, b, eps=1e-5):
    mu = jnp.mean(x, axis=-1, keepdims=True)
    var = jnp.mean((x - mu) ** 2, axis=-1, keepdims=True)
    return (x - mu) * jax.lax.rsqrt(var + eps) * w + b


# ----------------------------- fused Pallas kernel -------------------------
def _fused_transformer_kernel(src_ref, w_ref, vec_ref, head_ref, o_ref, *,
                              batch, seq, nhead, nlayers, hidden_dim, d_ffp):
    """Entire TransformerModel forward for the whole batch in one invocation.

    w_ref   : (nlayers, D + dffp, 4D + dffp) packed per-layer matrices
              [0:D, 0:3D]=wqkv (Q block pre-scaled), [0:D, 3D:4D]=wo,
              [0:D, 4D:4D+dffp]=w1, [D:D+dffp, 0:D]=w2
    vec_ref : (nlayers, 8, 3D) packed per-layer vectors
              rows: bqkv, bo, ln1_w, ln1_b, b1, b2, ln2_w, ln2_b
    head_ref: (D + 8, max(D, O)) rows 0:D=w_out, D=ln_w, D+1=ln_b, D+2=b_out
    """
    B, L, D, H = batch, seq, hidden_dim, nhead
    E = D // H
    G = B * H
    BL = B * L
    dffp = d_ffp
    O = o_ref.shape[1]

    recip = lambda v: pl.reciprocal(v, approx=True)   # EUP, not VPU divide

    # Input is already feature-padded to D host-side.
    x = src_ref[...].astype(jnp.float32).reshape(BL, D)

    for l in range(nlayers):                           # fully unrolled (tiny)
        w_l = w_ref[l].astype(jnp.float32)             # (D + dffp, 4D + dffp)
        v_l = vec_ref[l].astype(jnp.float32)           # (8, 3D)

        wqkv = w_l[0:D, 0:3 * D]
        wo   = w_l[0:D, 3 * D:4 * D]
        w1   = w_l[0:D, 4 * D:4 * D + dffp]
        w2   = w_l[D:D + dffp, 0:D]
        bqkv = v_l[0:1, :]
        bo   = v_l[1:2, 0:D]
        ln1w = v_l[2:3, 0:D]
        ln1b = v_l[3:4, 0:D]
        b1   = v_l[4:5, 0:dffp]
        b2   = v_l[5:6, 0:D]
        ln2w = v_l[6:7, 0:D]
        ln2b = v_l[7:8, 0:D]

        # ---- fused Q/K/V projection (1/sqrt(E) pre-folded into Q block) ----
        qkv = jnp.dot(x, wqkv, preferred_element_type=jnp.float32) + bqkv  # (BL, 3D)

        # ---- rearrange to (B*H, L, E) operands (single swapaxes) ----
        qkvh = qkv.reshape(B, L, 3 * H, E)
        qkvh = jnp.swapaxes(qkvh, 1, 2).reshape(B, 3, H, L, E)
        q = qkvh[:, 0].reshape(G, L, E)
        k = qkvh[:, 1].reshape(G, L, E)
        v = qkvh[:, 2].reshape(G, L, E)

        # ---- batched full attention over (batch, head); softmax w/ EUP recip ----
        s = jnp.einsum('gqe,gke->gqk', q, k, preferred_element_type=jnp.float32)
        s = s - jnp.max(s, axis=-1, keepdims=True)
        p = jnp.exp(s)
        p = p * recip(jnp.sum(p, axis=-1, keepdims=True))
        ctx = jnp.einsum('gqk,gke->gqe', p, v, preferred_element_type=jnp.float32)

        # ---- heads back into lanes, ONE full-Wo matmul (== concat + Wo) ----
        ctx = jnp.swapaxes(ctx.reshape(B, H, L, E), 1, 2).reshape(BL, D)
        attn = jnp.dot(ctx, wo, preferred_element_type=jnp.float32) + bo

        # ---- residual + norm1, feed-forward (gelu), residual + norm2 ----
        x1 = _layernorm(x + attn, ln1w, ln1b)
        y = _gelu(jnp.dot(x1, w1, preferred_element_type=jnp.float32) + b1, recip)
        y = jnp.dot(y, w2, preferred_element_type=jnp.float32) + b2
        x = _layernorm(x1 + y, ln2w, ln2b)

    # ---- final encoder LayerNorm on cls rows + output Linear (fused head) ----
    hd = head_ref[...].astype(jnp.float32)
    w_out = hd[0:D, 0:O]
    lnf_w = hd[D:D + 1, 0:D]
    lnf_b = hd[D + 1:D + 2, 0:D]
    b_out = hd[D + 2:D + 3, 0:O]

    cls = x.reshape(B, L, D)[:, 0, :]                   # (B, D)
    h_cls = _layernorm(cls, lnf_w, lnf_b)
    out = jnp.dot(h_cls, w_out, preferred_element_type=jnp.float32) + b_out
    o_ref[...] = out.astype(o_ref.dtype)


# ----------------------------- wrapper --------------------------------------
def transformer_model_forward(src, packed, *, nhead):
    """Equivalent of TransformerModel.forward(src, length_mask=None)."""
    B, L, Din = src.shape
    w_slab = packed["w_slab"]
    vec_slab = packed["vec_slab"]
    head_slab = packed["head_slab"]
    nlayers = w_slab.shape[0]
    D = vec_slab.shape[2] // 3
    dffp = w_slab.shape[1] - D
    O = packed["out_dim"]

    # Host-side one-time feature padding (Din -> D); no in-kernel concat.
    if Din < D:
        src = jnp.pad(src, ((0, 0), (0, 0), (0, D - Din)))
    src = src.astype(jnp.float32)

    kernel = functools.partial(_fused_transformer_kernel,
                               batch=B, seq=L, nhead=nhead, nlayers=nlayers,
                               hidden_dim=D, d_ffp=dffp)
    vmem = pl.BlockSpec(memory_space=pltpu.MemorySpace.VMEM)
    return pl.pallas_call(
        kernel,
        out_shape=jax.ShapeDtypeStruct((B, O), jnp.float32),
        in_specs=[vmem, vmem, vmem, vmem],
        out_specs=vmem,
    )(src, w_slab, vec_slab, head_slab)


# ----------------------------- parameters ---------------------------------
def init_params(key, input_dim, hidden_dim, output_dim, nhead, nlayers):
    del input_dim  # feature padding handled host-side in the wrapper
    d_ff = nhead   # 3rd positional arg of TransformerEncoderLayer is d_ff

    def linear_init(k, din, dout, scale=0.05):
        kw, kb = jax.random.split(k)
        return (jax.random.normal(kw, (din, dout), jnp.float32) * scale,
                jax.random.normal(kb, (1, dout), jnp.float32) * scale)

    keys = jax.random.split(key, nlayers + 1)
    layers = []
    for l in range(nlayers):
        ks = jax.random.split(keys[l], 6)
        wq, bq = linear_init(ks[0], hidden_dim, hidden_dim)
        wk, bk = linear_init(ks[1], hidden_dim, hidden_dim)
        wv, bv = linear_init(ks[2], hidden_dim, hidden_dim)
        wo, bo = linear_init(ks[3], hidden_dim, hidden_dim)
        w1, b1 = linear_init(ks[4], hidden_dim, d_ff)
        w2, b2 = linear_init(ks[5], d_ff, hidden_dim)
        layers.append(dict(
            wq=wq, bq=bq, wk=wk, bk=bk, wv=wv, bv=bv, wo=wo, bo=bo,
            ln1_w=jnp.ones((1, hidden_dim), jnp.float32),
            ln1_b=jnp.zeros((1, hidden_dim), jnp.float32),
            w1=w1, b1=b1, w2=w2, b2=b2,
            ln2_w=jnp.ones((1, hidden_dim), jnp.float32),
            ln2_b=jnp.zeros((1, hidden_dim), jnp.float32),
        ))
    w_out, b_out = linear_init(keys[nlayers], hidden_dim, output_dim)
    head = dict(ln_w=jnp.ones((1, hidden_dim), jnp.float32),
                ln_b=jnp.zeros((1, hidden_dim), jnp.float32),
                w_out=w_out, b_out=b_out)
    return dict(layers=layers, head=head)


def pack_params(params, nhead):
    """One-time host-side packing into 3 VMEM slabs.

    - QKV fused into one (D, 3D) block with 1/sqrt(E) folded into the Q part.
    - d_ff padded to >= 8 (exact: gelu(0)=0 and padded w2 rows are zero).
    - All per-layer matrices in one slab, all per-layer vectors in another,
      head weights in a third -> 3 input DMAs for weights instead of 16.
    """
    layers = params["layers"]
    head = params["head"]
    nl = len(layers)
    D = layers[0]["wq"].shape[0]
    E = D // nhead
    d_ff = layers[0]["w1"].shape[1]
    dffp = max(8, ((d_ff + 7) // 8) * 8)
    scale = 1.0 / math.sqrt(E)

    R = D + dffp
    C = 4 * D + dffp
    w_slab = jnp.zeros((nl, R, C), jnp.float32)
    vec_slab = jnp.zeros((nl, 8, 3 * D), jnp.float32)
    for l, p in enumerate(layers):
        wqkv = jnp.concatenate([p["wq"] * scale, p["wk"], p["wv"]], axis=1)  # (D, 3D)
        bqkv = jnp.concatenate([p["bq"] * scale, p["bk"], p["bv"]], axis=1)  # (1, 3D)
        w_slab = w_slab.at[l, 0:D, 0:3 * D].set(wqkv)
        w_slab = w_slab.at[l, 0:D, 3 * D:4 * D].set(p["wo"])
        w_slab = w_slab.at[l, 0:D, 4 * D:4 * D + d_ff].set(p["w1"])
        w_slab = w_slab.at[l, D:D + d_ff, 0:D].set(p["w2"])

        vec_slab = vec_slab.at[l, 0, :].set(bqkv[0])
        vec_slab = vec_slab.at[l, 1, 0:D].set(p["bo"][0])
        vec_slab = vec_slab.at[l, 2, 0:D].set(p["ln1_w"][0])
        vec_slab = vec_slab.at[l, 3, 0:D].set(p["ln1_b"][0])
        vec_slab = vec_slab.at[l, 4, 0:d_ff].set(p["b1"][0])
        vec_slab = vec_slab.at[l, 5, 0:D].set(p["b2"][0])
        vec_slab = vec_slab.at[l, 6, 0:D].set(p["ln2_w"][0])
        vec_slab = vec_slab.at[l, 7, 0:D].set(p["ln2_b"][0])

    O = head["w_out"].shape[1]
    Wh = max(D, O)
    head_slab = jnp.zeros((D + 8, Wh), jnp.float32)
    head_slab = head_slab.at[0:D, 0:O].set(head["w_out"])
    head_slab = head_slab.at[D, 0:D].set(head["ln_w"][0])
    head_slab = head_slab.at[D + 1, 0:D].set(head["ln_b"][0])
    head_slab = head_slab.at[D + 2, 0:O].set(head["b_out"][0])

    return dict(w_slab=w_slab, vec_slab=vec_slab, head_slab=head_slab,
                out_dim=int(O))


# ----------------------------- pure-JAX reference --------------------------
def reference_forward(src, params, nhead):
    B, L, Din = src.shape
    D = params["layers"][0]["wq"].shape[0]
    x = jnp.concatenate([src, jnp.zeros((B, L, D - Din), src.dtype)], axis=2)
    E = D // nhead
    for p in params["layers"]:
        q = (x @ p["wq"] + p["bq"]).reshape(B, L, nhead, E)
        k = (x @ p["wk"] + p["bk"]).reshape(B, L, nhead, E)
        v = (x @ p["wv"] + p["bv"]).reshape(B, L, nhead, E)
        s = jnp.einsum("blhe,bshe->bhls", q, k) / math.sqrt(E)
        a = jax.nn.softmax(s, axis=-1)
        o = jnp.einsum("bhls,bshe->blhe", a, v).reshape(B, L, D)
        o = o @ p["wo"] + p["bo"]
        x1 = _layernorm(x + o, p["ln1_w"], p["ln1_b"])
        y = _gelu(x1 @ p["w1"] + p["b1"])
        y = y @ p["w2"] + p["b2"]
        x = _layernorm(x1 + y, p["ln2_w"], p["ln2_b"])
    h = params["head"]
    x = _layernorm(x, h["ln_w"], h["ln_b"])
    return x[:, 0, :] @ h["w_out"] + h["b_out"]


# ----------------------------- main ----------------------------------------
if __name__ == "__main__":
    # TODO(synk): dropout is modeled as identity (eval-mode); train-mode RNG
    # dropout is not reproduced.
    input_dim, hidden_dim, output_dim = 24, 32, 32
    nhead, nlayers = 4, 2
    batch, seq = 2, 8

    key = jax.random.PRNGKey(0)
    k_param, k_src = jax.random.split(key)
    params = init_params(k_param, input_dim, hidden_dim, output_dim, nhead, nlayers)
    packed = pack_params(params, nhead)      # one-time weight packing
    src = jax.random.normal(k_src, (batch, seq, input_dim), jnp.float32)

    out = transformer_model_forward(src, packed, nhead=nhead)
    out = jax.block_until_ready(out)

    ref = reference_forward(src, params, nhead)
    assert out.shape == (batch, output_dim), out.shape
    assert jnp.allclose(out, ref, atol=2e-3, rtol=2e-3), (out, ref)

    print("KERNEL_OK")
</pallas_src>

<mosaic_0001>
module attributes {stable_mosaic.version = 11 : i64} {
  func.func @_fused_transformer_kernel(%arg0: memref<2x8x32xf32, #tpu.memory_space<vmem>>, %arg1: memref<2x40x136xf32, #tpu.memory_space<vmem>>, %arg2: memref<2x8x96xf32, #tpu.memory_space<vmem>>, %arg3: memref<40x32xf32, #tpu.memory_space<vmem>>, %arg4: memref<2x32xf32, #tpu.memory_space<vmem>>) attributes {dimension_semantics = [], scalar_prefetch = 0 : i64, scratch_operands = 0 : i64, tpu.core_type = #tpu.core_type<tc>} {
    %c0 = arith.constant 0 : index
    %c0_0 = arith.constant 0 : index
    %c0_1 = arith.constant 0 : index
    %0 = vector.load %arg0[%c0, %c0_0, %c0_1] : memref<2x8x32xf32, #tpu.memory_space<vmem>>, vector<2x8x32xf32>
    %1 = vector.shape_cast %0 : vector<2x8x32xf32> to vector<16x32xf32>
    %c0_2 = arith.constant 0 : index
    %c0_3 = arith.constant 0 : index
    %c0_4 = arith.constant 0 : index
    %2 = vector.load %arg1[%c0_2, %c0_3, %c0_4] : memref<2x40x136xf32, #tpu.memory_space<vmem>>, vector<1x40x136xf32>
    %3 = vector.shape_cast %2 : vector<1x40x136xf32> to vector<40x136xf32>
    %c0_5 = arith.constant 0 : index
    %c0_6 = arith.constant 0 : index
    %c0_7 = arith.constant 0 : index
    %4 = vector.load %arg2[%c0_5, %c0_6, %c0_7] : memref<2x8x96xf32, #tpu.memory_space<vmem>>, vector<1x8x96xf32>
    %5 = vector.shape_cast %4 : vector<1x8x96xf32> to vector<8x96xf32>
    %6 = vector.extract_strided_slice %3 {offsets = [0, 0], sizes = [32, 96], strides = [1, 1]} : vector<40x136xf32> to vector<32x96xf32>
    %7 = vector.extract_strided_slice %3 {offsets = [0, 96], sizes = [32, 32], strides = [1, 1]} : vector<40x136xf32> to vector<32x32xf32>
    %8 = vector.extract_strided_slice %3 {offsets = [0, 128], sizes = [32, 8], strides = [1, 1]} : vector<40x136xf32> to vector<32x8xf32>
    %9 = vector.extract_strided_slice %3 {offsets = [32, 0], sizes = [8, 32], strides = [1, 1]} : vector<40x136xf32> to vector<8x32xf32>
    %10 = vector.extract_strided_slice %5 {offsets = [0, 0], sizes = [1, 96], strides = [1, 1]} : vector<8x96xf32> to vector<1x96xf32>
    %11 = vector.extract_strided_slice %5 {offsets = [1, 0], sizes = [1, 32], strides = [1, 1]} : vector<8x96xf32> to vector<1x32xf32>
    %12 = vector.extract_strided_slice %5 {offsets = [2, 0], sizes = [1, 32], strides = [1, 1]} : vector<8x96xf32> to vector<1x32xf32>
    %13 = vector.extract_strided_slice %5 {offsets = [3, 0], sizes = [1, 32], strides = [1, 1]} : vector<8x96xf32> to vector<1x32xf32>
    %14 = vector.extract_strided_slice %5 {offsets = [4, 0], sizes = [1, 8], strides = [1, 1]} : vector<8x96xf32> to vector<1x8xf32>
    %15 = vector.extract_strided_slice %5 {offsets = [5, 0], sizes = [1, 32], strides = [1, 1]} : vector<8x96xf32> to vector<1x32xf32>
    %16 = vector.extract_strided_slice %5 {offsets = [6, 0], sizes = [1, 32], strides = [1, 1]} : vector<8x96xf32> to vector<1x32xf32>
    %17 = vector.extract_strided_slice %5 {offsets = [7, 0], sizes = [1, 32], strides = [1, 1]} : vector<8x96xf32> to vector<1x32xf32>
    %cst = arith.constant dense<0.000000e+00> : vector<16x96xf32>
    %18 = tpu.matmul %1, %6, %cst {dimension_numbers = #tpu.dot_dimension_numbers<[1], [0], [0], [1], [0, 0, 1, 1], [], []>} : vector<16x32xf32>, vector<32x96xf32>, vector<16x96xf32> -> vector<16x96xf32>
    %19 = vector.broadcast %10 : vector<1x96xf32> to vector<16x96xf32>
    %20 = arith.addf %18, %19 : vector<16x96xf32>
    %21 = vector.shape_cast %20 : vector<16x96xf32> to vector<2x8x12x8xf32>
    %22 = tpu.transpose %21, [0, 2, 1, 3] : vector<2x8x12x8xf32> -> vector<2x12x8x8xf32>
    %23 = vector.shape_cast %22 : vector<2x12x8x8xf32> to vector<2x3x4x8x8xf32>
    %24 = vector.extract_strided_slice %23 {offsets = [0, 0, 0, 0, 0], sizes = [2, 1, 4, 8, 8], strides = [1, 1, 1, 1, 1]} : vector<2x3x4x8x8xf32> to vector<2x1x4x8x8xf32>
    %25 = vector.shape_cast %24 : vector<2x1x4x8x8xf32> to vector<2x4x8x8xf32>
    %26 = vector.shape_cast %25 : vector<2x4x8x8xf32> to vector<8x8x8xf32>
    %27 = vector.extract_strided_slice %23 {offsets = [0, 1, 0, 0, 0], sizes = [2, 1, 4, 8, 8], strides = [1, 1, 1, 1, 1]} : vector<2x3x4x8x8xf32> to vector<2x1x4x8x8xf32>
    %28 = vector.shape_cast %27 : vector<2x1x4x8x8xf32> to vector<2x4x8x8xf32>
    %29 = vector.shape_cast %28 : vector<2x4x8x8xf32> to vector<8x8x8xf32>
    %30 = vector.extract_strided_slice %23 {offsets = [0, 2, 0, 0, 0], sizes = [2, 1, 4, 8, 8], strides = [1, 1, 1, 1, 1]} : vector<2x3x4x8x8xf32> to vector<2x1x4x8x8xf32>
    %31 = vector.shape_cast %30 : vector<2x1x4x8x8xf32> to vector<2x4x8x8xf32>
    %32 = vector.shape_cast %31 : vector<2x4x8x8xf32> to vector<8x8x8xf32>
    "tpu.trace_start"() <{level = 10 : i32, message = "gqe,gke->gqk"}> : () -> ()
    %cst_8 = arith.constant dense<0.000000e+00> : vector<8x8x8xf32>
    %33 = tpu.matmul %26, %29, %cst_8 {dimension_numbers = #tpu.dot_dimension_numbers<[2], [2], [1], [1], [0, 0, 0, 1, 1, 1], [0], [0]>} : vector<8x8x8xf32>, vector<8x8x8xf32>, vector<8x8x8xf32> -> vector<8x8x8xf32>
    "tpu.trace_stop"() : () -> ()
    %cst_9 = arith.constant dense<0xFF800000> : vector<8x8xf32>
    %34 = vector.multi_reduction <maximumf>, %33, %cst_9 [2] : vector<8x8x8xf32> to vector<8x8xf32>
    %35 = vector.shape_cast %34 : vector<8x8xf32> to vector<8x8x1xf32>
    %36 = vector.broadcast %35 : vector<8x8x1xf32> to vector<8x8x8xf32>
    %37 = arith.subf %33, %36 : vector<8x8x8xf32>
    %38 = math.exp %37 : vector<8x8x8xf32>
    %cst_10 = arith.constant dense<0.000000e+00> : vector<8x8xf32>
    %39 = vector.multi_reduction <add>, %38, %cst_10 [2] : vector<8x8x8xf32> to vector<8x8xf32>
    %40 = vector.shape_cast %39 : vector<8x8xf32> to vector<8x8x1xf32>
    %41 = tpu.reciprocal %40 {approx = true} : vector<8x8x1xf32> -> vector<8x8x1xf32>
    %42 = vector.broadcast %41 : vector<8x8x1xf32> to vector<8x8x8xf32>
    %43 = arith.mulf %38, %42 : vector<8x8x8xf32>
    "tpu.trace_start"() <{level = 10 : i32, message = "gqk,gke->gqe"}> : () -> ()
    %cst_11 = arith.constant dense<0.000000e+00> : vector<8x8x8xf32>
    %44 = tpu.matmul %43, %32, %cst_11 {dimension_numbers = #tpu.dot_dimension_numbers<[2], [1], [1], [2], [0, 0, 0, 1, 1, 2], [0], [0]>} : vector<8x8x8xf32>, vector<8x8x8xf32>, vector<8x8x8xf32> -> vector<8x8x8xf32>
    "tpu.trace_stop"() : () -> ()
    %45 = vector.shape_cast %44 : vector<8x8x8xf32> to vector<2x4x8x8xf32>
    %46 = tpu.transpose %45, [0, 2, 1, 3] : vector<2x4x8x8xf32> -> vector<2x8x4x8xf32>
    %47 = vector.shape_cast %46 : vector<2x8x4x8xf32> to vector<16x32xf32>
    %cst_12 = arith.constant dense<0.000000e+00> : vector<16x32xf32>
    %48 = tpu.matmul %47, %7, %cst_12 {dimension_numbers = #tpu.dot_dimension_numbers<[1], [0], [0], [1], [0, 0, 1, 1], [], []>} : vector<16x32xf32>, vector<32x32xf32>, vector<16x32xf32> -> vector<16x32xf32>
    %49 = vector.broadcast %11 : vector<1x32xf32> to vector<16x32xf32>
    %50 = arith.addf %48, %49 : vector<16x32xf32>
    %51 = arith.addf %1, %50 : vector<16x32xf32>
    %cst_13 = arith.constant dense<0.000000e+00> : vector<16xf32>
    %52 = vector.multi_reduction <add>, %51, %cst_13 [1] : vector<16x32xf32> to vector<16xf32>
    %53 = vector.shape_cast %52 : vector<16xf32> to vector<16x1xf32>
    %cst_14 = arith.constant 3.200000e+01 : f32
    %54 = vector.broadcast %cst_14 : f32 to vector<16x1xf32>
    %55 = arith.divf %53, %54 : vector<16x1xf32>
    %56 = vector.broadcast %55 : vector<16x1xf32> to vector<16x32xf32>
    %57 = arith.subf %51, %56 : vector<16x32xf32>
    %58 = arith.mulf %57, %57 : vector<16x32xf32>
    %cst_15 = arith.constant dense<0.000000e+00> : vector<16xf32>
    %59 = vector.multi_reduction <add>, %58, %cst_15 [1] : vector<16x32xf32> to vector<16xf32>
    %60 = vector.shape_cast %59 : vector<16xf32> to vector<16x1xf32>
    %cst_16 = arith.constant 3.200000e+01 : f32
    %61 = vector.broadcast %cst_16 : f32 to vector<16x1xf32>
    %62 = arith.divf %60, %61 : vector<16x1xf32>
    %63 = vector.broadcast %55 : vector<16x1xf32> to vector<16x32xf32>
    %64 = arith.subf %51, %63 : vector<16x32xf32>
    %cst_17 = arith.constant 9.99999974E-6 : f32
    %65 = vector.broadcast %cst_17 : f32 to vector<16x1xf32>
    %66 = arith.addf %62, %65 : vector<16x1xf32>
    %67 = math.rsqrt %66 : vector<16x1xf32>
    %68 = vector.broadcast %67 : vector<16x1xf32> to vector<16x32xf32>
    %69 = arith.mulf %64, %68 : vector<16x32xf32>
    %70 = vector.broadcast %12 : vector<1x32xf32> to vector<16x32xf32>
    %71 = arith.mulf %69, %70 : vector<16x32xf32>
    %72 = vector.broadcast %13 : vector<1x32xf32> to vector<16x32xf32>
    %73 = arith.addf %71, %72 : vector<16x32xf32>
    %cst_18 = arith.constant dense<0.000000e+00> : vector<16x8xf32>
    %74 = tpu.matmul %73, %8, %cst_18 {dimension_numbers = #tpu.dot_dimension_numbers<[1], [0], [0], [1], [0, 0, 1, 1], [], []>} : vector<16x32xf32>, vector<32x8xf32>, vector<16x8xf32> -> vector<16x8xf32>
    %75 = vector.broadcast %14 : vector<1x8xf32> to vector<16x8xf32>
    %76 = arith.addf %74, %75 : vector<16x8xf32>
    %cst_19 = arith.constant 5.000000e-01 : f32
    %77 = vector.broadcast %cst_19 : f32 to vector<16x8xf32>
    %78 = arith.mulf %77, %76 : vector<16x8xf32>
    %cst_20 = arith.constant 0.707106769 : f32
    %79 = vector.broadcast %cst_20 : f32 to vector<16x8xf32>
    %80 = arith.mulf %76, %79 : vector<16x8xf32>
    %cst_21 = arith.constant 0.000000e+00 : f32
    %81 = vector.broadcast %cst_21 : f32 to vector<16x8xf32>
    %82 = arith.cmpf oge, %80, %81 : vector<16x8xf32>
    %cst_22 = arith.constant 1.000000e+00 : f32
    %cst_23 = arith.constant -1.000000e+00 : f32
    %83 = vector.broadcast %cst_22 : f32 to vector<16x8xf32>
    %84 = vector.broadcast %cst_23 : f32 to vector<16x8xf32>
    %85 = arith.select %82, %83, %84 : vector<16x8xi1>, vector<16x8xf32>
    %86 = math.absf %80 : vector<16x8xf32>
    %cst_24 = arith.constant 0.327591091 : f32
    %87 = vector.broadcast %cst_24 : f32 to vector<16x8xf32>
    %88 = arith.mulf %87, %86 : vector<16x8xf32>
    %cst_25 = arith.constant 1.000000e+00 : f32
    %89 = vector.broadcast %cst_25 : f32 to vector<16x8xf32>
    %90 = arith.addf %89, %88 : vector<16x8xf32>
    %91 = tpu.reciprocal %90 {approx = true} : vector<16x8xf32> -> vector<16x8xf32>
    %cst_26 = arith.constant 1.06140542 : f32
    %92 = vector.broadcast %cst_26 : f32 to vector<16x8xf32>
    %93 = arith.mulf %92, %91 : vector<16x8xf32>
    %cst_27 = arith.constant -1.45315206 : f32
    %94 = vector.broadcast %cst_27 : f32 to vector<16x8xf32>
    %95 = arith.addf %93, %94 : vector<16x8xf32>
    %96 = arith.mulf %95, %91 : vector<16x8xf32>
    %cst_28 = arith.constant 1.42141378 : f32
    %97 = vector.broadcast %cst_28 : f32 to vector<16x8xf32>
    %98 = arith.addf %96, %97 : vector<16x8xf32>
    %99 = arith.mulf %98, %91 : vector<16x8xf32>
    %cst_29 = arith.constant -0.284496725 : f32
    %100 = vector.broadcast %cst_29 : f32 to vector<16x8xf32>
    %101 = arith.addf %99, %100 : vector<16x8xf32>
    %102 = arith.mulf %101, %91 : vector<16x8xf32>
    %cst_30 = arith.constant 0.254829586 : f32
    %103 = vector.broadcast %cst_30 : f32 to vector<16x8xf32>
    %104 = arith.addf %102, %103 : vector<16x8xf32>
    %105 = arith.mulf %104, %91 : vector<16x8xf32>
    %cst_31 = arith.constant 0.000000e+00 : f32
    %106 = vector.broadcast %cst_31 : f32 to vector<16x8xf32>
    %107 = arith.subf %106, %86 : vector<16x8xf32>
    %108 = arith.mulf %107, %86 : vector<16x8xf32>
    %109 = math.exp %108 : vector<16x8xf32>
    %110 = arith.mulf %105, %109 : vector<16x8xf32>
    %cst_32 = arith.constant 1.000000e+00 : f32
    %111 = vector.broadcast %cst_32 : f32 to vector<16x8xf32>
    %112 = arith.subf %111, %110 : vector<16x8xf32>
    %113 = arith.mulf %85, %112 : vector<16x8xf32>
    %cst_33 = arith.constant 1.000000e+00 : f32
    %114 = vector.broadcast %cst_33 : f32 to vector<16x8xf32>
    %115 = arith.addf %114, %113 : vector<16x8xf32>
    %116 = arith.mulf %78, %115 : vector<16x8xf32>
    %cst_34 = arith.constant dense<0.000000e+00> : vector<16x32xf32>
    %117 = tpu.matmul %116, %9, %cst_34 {dimension_numbers = #tpu.dot_dimension_numbers<[1], [0], [0], [1], [0, 0, 1, 1], [], []>} : vector<16x8xf32>, vector<8x32xf32>, vector<16x32xf32> -> vector<16x32xf32>
    %118 = vector.broadcast %15 : vector<1x32xf32> to vector<16x32xf32>
    %119 = arith.addf %117, %118 : vector<16x32xf32>
    %120 = arith.addf %73, %119 : vector<16x32xf32>
    %cst_35 = arith.constant dense<0.000000e+00> : vector<16xf32>
    %121 = vector.multi_reduction <add>, %120, %cst_35 [1] : vector<16x32xf32> to vector<16xf32>
    %122 = vector.shape_cast %121 : vector<16xf32> to vector<16x1xf32>
    %cst_36 = arith.constant 3.200000e+01 : f32
    %123 = vector.broadcast %cst_36 : f32 to vector<16x1xf32>
    %124 = arith.divf %122, %123 : vector<16x1xf32>
    %125 = vector.broadcast %124 : vector<16x1xf32> to vector<16x32xf32>
    %126 = arith.subf %120, %125 : vector<16x32xf32>
    %127 = arith.mulf %126, %126 : vector<16x32xf32>
    %cst_37 = arith.constant dense<0.000000e+00> : vector<16xf32>
    %128 = vector.multi_reduction <add>, %127, %cst_37 [1] : vector<16x32xf32> to vector<16xf32>
    %129 = vector.shape_cast %128 : vector<16xf32> to vector<16x1xf32>
    %cst_38 = arith.constant 3.200000e+01 : f32
    %130 = vector.broadcast %cst_38 : f32 to vector<16x1xf32>
    %131 = arith.divf %129, %130 : vector<16x1xf32>
    %132 = vector.broadcast %124 : vector<16x1xf32> to vector<16x32xf32>
    %133 = arith.subf %120, %132 : vector<16x32xf32>
    %cst_39 = arith.constant 9.99999974E-6 : f32
    %134 = vector.broadcast %cst_39 : f32 to vector<16x1xf32>
    %135 = arith.addf %131, %134 : vector<16x1xf32>
    %136 = math.rsqrt %135 : vector<16x1xf32>
    %137 = vector.broadcast %136 : vector<16x1xf32> to vector<16x32xf32>
    %138 = arith.mulf %133, %137 : vector<16x32xf32>
    %139 = vector.broadcast %16 : vector<1x32xf32> to vector<16x32xf32>
    %140 = arith.mulf %138, %139 : vector<16x32xf32>
    %141 = vector.broadcast %17 : vector<1x32xf32> to vector<16x32xf32>
    %142 = arith.addf %140, %141 : vector<16x32xf32>
    %c1 = arith.constant 1 : index
    %c0_40 = arith.constant 0 : index
    %c0_41 = arith.constant 0 : index
    %143 = vector.load %arg1[%c1, %c0_40, %c0_41] : memref<2x40x136xf32, #tpu.memory_space<vmem>>, vector<1x40x136xf32>
    %144 = vector.shape_cast %143 : vector<1x40x136xf32> to vector<40x136xf32>
    %c1_42 = arith.constant 1 : index
    %c0_43 = arith.constant 0 : index
    %c0_44 = arith.constant 0 : index
    %145 = vector.load %arg2[%c1_42, %c0_43, %c0_44] : memref<2x8x96xf32, #tpu.memory_space<vmem>>, vector<1x8x96xf32>
    %146 = vector.shape_cast %145 : vector<1x8x96xf32> to vector<8x96xf32>
    %147 = vector.extract_strided_slice %144 {offsets = [0, 0], sizes = [32, 96], strides = [1, 1]} : vector<40x136xf32> to vector<32x96xf32>
    %148 = vector.extract_strided_slice %144 {offsets = [0, 96], sizes = [32, 32], strides = [1, 1]} : vector<40x136xf32> to vector<32x32xf32>
    %149 = vector.extract_strided_slice %144 {offsets = [0, 128], sizes = [32, 8], strides = [1, 1]} : vector<40x136xf32> to vector<32x8xf32>
    %150 = vector.extract_strided_slice %144 {offsets = [32, 0], sizes = [8, 32], strides = [1, 1]} : vector<40x136xf32> to vector<8x32xf32>
    %151 = vector.extract_strided_slice %146 {offsets = [0, 0], sizes = [1, 96], strides = [1, 1]} : vector<8x96xf32> to vector<1x96xf32>
    %152 = vector.extract_strided_slice %146 {offsets = [1, 0], sizes = [1, 32], strides = [1, 1]} : vector<8x96xf32> to vector<1x32xf32>
    %153 = vector.extract_strided_slice %146 {offsets = [2, 0], sizes = [1, 32], strides = [1, 1]} : vector<8x96xf32> to vector<1x32xf32>
    %154 = vector.extract_strided_slice %146 {offsets = [3, 0], sizes = [1, 32], strides = [1, 1]} : vector<8x96xf32> to vector<1x32xf32>
    %155 = vector.extract_strided_slice %146 {offsets = [4, 0], sizes = [1, 8], strides = [1, 1]} : vector<8x96xf32> to vector<1x8xf32>
    %156 = vector.extract_strided_slice %146 {offsets = [5, 0], sizes = [1, 32], strides = [1, 1]} : vector<8x96xf32> to vector<1x32xf32>
    %157 = vector.extract_strided_slice %146 {offsets = [6, 0], sizes = [1, 32], strides = [1, 1]} : vector<8x96xf32> to vector<1x32xf32>
    %158 = vector.extract_strided_slice %146 {offsets = [7, 0], sizes = [1, 32], strides = [1, 1]} : vector<8x96xf32> to vector<1x32xf32>
    %cst_45 = arith.constant dense<0.000000e+00> : vector<16x96xf32>
    %159 = tpu.matmul %142, %147, %cst_45 {dimension_numbers = #tpu.dot_dimension_numbers<[1], [0], [0], [1], [0, 0, 1, 1], [], []>} : vector<16x32xf32>, vector<32x96xf32>, vector<16x96xf32> -> vector<16x96xf32>
    %160 = vector.broadcast %151 : vector<1x96xf32> to vector<16x96xf32>
    %161 = arith.addf %159, %160 : vector<16x96xf32>
    %162 = vector.shape_cast %161 : vector<16x96xf32> to vector<2x8x12x8xf32>
    %163 = tpu.transpose %162, [0, 2, 1, 3] : vector<2x8x12x8xf32> -> vector<2x12x8x8xf32>
    %164 = vector.shape_cast %163 : vector<2x12x8x8xf32> to vector<2x3x4x8x8xf32>
    %165 = vector.extract_strided_slice %164 {offsets = [0, 0, 0, 0, 0], sizes = [2, 1, 4, 8, 8], strides = [1, 1, 1, 1, 1]} : vector<2x3x4x8x8xf32> to vector<2x1x4x8x8xf32>
    %166 = vector.shape_cast %165 : vector<2x1x4x8x8xf32> to vector<2x4x8x8xf32>
    %167 = vector.shape_cast %166 : vector<2x4x8x8xf32> to vector<8x8x8xf32>
    %168 = vector.extract_strided_slice %164 {offsets = [0, 1, 0, 0, 0], sizes = [2, 1, 4, 8, 8], strides = [1, 1, 1, 1, 1]} : vector<2x3x4x8x8xf32> to vector<2x1x4x8x8xf32>
    %169 = vector.shape_cast %168 : vector<2x1x4x8x8xf32> to vector<2x4x8x8xf32>
    %170 = vector.shape_cast %169 : vector<2x4x8x8xf32> to vector<8x8x8xf32>
    %171 = vector.extract_strided_slice %164 {offsets = [0, 2, 0, 0, 0], sizes = [2, 1, 4, 8, 8], strides = [1, 1, 1, 1, 1]} : vector<2x3x4x8x8xf32> to vector<2x1x4x8x8xf32>
    %172 = vector.shape_cast %171 : vector<2x1x4x8x8xf32> to vector<2x4x8x8xf32>
    %173 = vector.shape_cast %172 : vector<2x4x8x8xf32> to vector<8x8x8xf32>
    "tpu.trace_start"() <{level = 10 : i32, message = "gqe,gke->gqk"}> : () -> ()
    %cst_46 = arith.constant dense<0.000000e+00> : vector<8x8x8xf32>
    %174 = tpu.matmul %167, %170, %cst_46 {dimension_numbers = #tpu.dot_dimension_numbers<[2], [2], [1], [1], [0, 0, 0, 1, 1, 1], [0], [0]>} : vector<8x8x8xf32>, vector<8x8x8xf32>, vector<8x8x8xf32> -> vector<8x8x8xf32>
    "tpu.trace_stop"() : () -> ()
    %cst_47 = arith.constant dense<0xFF800000> : vector<8x8xf32>
    %175 = vector.multi_reduction <maximumf>, %174, %cst_47 [2] : vector<8x8x8xf32> to vector<8x8xf32>
    %176 = vector.shape_cast %175 : vector<8x8xf32> to vector<8x8x1xf32>
    %177 = vector.broadcast %176 : vector<8x8x1xf32> to vector<8x8x8xf32>
    %178 = arith.subf %174, %177 : vector<8x8x8xf32>
    %179 = math.exp %178 : vector<8x8x8xf32>
    %cst_48 = arith.constant dense<0.000000e+00> : vector<8x8xf32>
    %180 = vector.multi_reduction <add>, %179, %cst_48 [2] : vector<8x8x8xf32> to vector<8x8xf32>
    %181 = vector.shape_cast %180 : vector<8x8xf32> to vector<8x8x1xf32>
    %182 = tpu.reciprocal %181 {approx = true} : vector<8x8x1xf32> -> vector<8x8x1xf32>
    %183 = vector.broadcast %182 : vector<8x8x1xf32> to vector<8x8x8xf32>
    %184 = arith.mulf %179, %183 : vector<8x8x8xf32>
    "tpu.trace_start"() <{level = 10 : i32, message = "gqk,gke->gqe"}> : () -> ()
    %cst_49 = arith.constant dense<0.000000e+00> : vector<8x8x8xf32>
    %185 = tpu.matmul %184, %173, %cst_49 {dimension_numbers = #tpu.dot_dimension_numbers<[2], [1], [1], [2], [0, 0, 0, 1, 1, 2], [0], [0]>} : vector<8x8x8xf32>, vector<8x8x8xf32>, vector<8x8x8xf32> -> vector<8x8x8xf32>
    "tpu.trace_stop"() : () -> ()
    %186 = vector.shape_cast %185 : vector<8x8x8xf32> to vector<2x4x8x8xf32>
    %187 = tpu.transpose %186, [0, 2, 1, 3] : vector<2x4x8x8xf32> -> vector<2x8x4x8xf32>
    %188 = vector.shape_cast %187 : vector<2x8x4x8xf32> to vector<16x32xf32>
    %cst_50 = arith.constant dense<0.000000e+00> : vector<16x32xf32>
    %189 = tpu.matmul %188, %148, %cst_50 {dimension_numbers = #tpu.dot_dimension_numbers<[1], [0], [0], [1], [0, 0, 1, 1], [], []>} : vector<16x32xf32>, vector<32x32xf32>, vector<16x32xf32> -> vector<16x32xf32>
    %190 = vector.broadcast %152 : vector<1x32xf32> to vector<16x32xf32>
    %191 = arith.addf %189, %190 : vector<16x32xf32>
    %192 = arith.addf %142, %191 : vector<16x32xf32>
    %cst_51 = arith.constant dense<0.000000e+00> : vector<16xf32>
    %193 = vector.multi_reduction <add>, %192, %cst_51 [1] : vector<16x32xf32> to vector<16xf32>
    %194 = vector.shape_cast %193 : vector<16xf32> to vector<16x1xf32>
    %cst_52 = arith.constant 3.200000e+01 : f32
    %195 = vector.broadcast %cst_52 : f32 to vector<16x1xf32>
    %196 = arith.divf %194, %195 : vector<16x1xf32>
    %197 = vector.broadcast %196 : vector<16x1xf32> to vector<16x32xf32>
    %198 = arith.subf %192, %197 : vector<16x32xf32>
    %199 = arith.mulf %198, %198 : vector<16x32xf32>
    %cst_53 = arith.constant dense<0.000000e+00> : vector<16xf32>
    %200 = vector.multi_reduction <add>, %199, %cst_53 [1] : vector<16x32xf32> to vector<16xf32>
    %201 = vector.shape_cast %200 : vector<16xf32> to vector<16x1xf32>
    %cst_54 = arith.constant 3.200000e+01 : f32
    %202 = vector.broadcast %cst_54 : f32 to vector<16x1xf32>
    %203 = arith.divf %201, %202 : vector<16x1xf32>
    %204 = vector.broadcast %196 : vector<16x1xf32> to vector<16x32xf32>
    %205 = arith.subf %192, %204 : vector<16x32xf32>
    %cst_55 = arith.constant 9.99999974E-6 : f32
    %206 = vector.broadcast %cst_55 : f32 to vector<16x1xf32>
    %207 = arith.addf %203, %206 : vector<16x1xf32>
    %208 = math.rsqrt %207 : vector<16x1xf32>
    %209 = vector.broadcast %208 : vector<16x1xf32> to vector<16x32xf32>
    %210 = arith.mulf %205, %209 : vector<16x32xf32>
    %211 = vector.broadcast %153 : vector<1x32xf32> to vector<16x32xf32>
    %212 = arith.mulf %210, %211 : vector<16x32xf32>
    %213 = vector.broadcast %154 : vector<1x32xf32> to vector<16x32xf32>
    %214 = arith.addf %212, %213 : vector<16x32xf32>
    %cst_56 = arith.constant dense<0.000000e+00> : vector<16x8xf32>
    %215 = tpu.matmul %214, %149, %cst_56 {dimension_numbers = #tpu.dot_dimension_numbers<[1], [0], [0], [1], [0, 0, 1, 1], [], []>} : vector<16x32xf32>, vector<32x8xf32>, vector<16x8xf32> -> vector<16x8xf32>
    %216 = vector.broadcast %155 : vector<1x8xf32> to vector<16x8xf32>
    %217 = arith.addf %215, %216 : vector<16x8xf32>
    %cst_57 = arith.constant 5.000000e-01 : f32
    %218 = vector.broadcast %cst_57 : f32 to vector<16x8xf32>
    %219 = arith.mulf %218, %217 : vector<16x8xf32>
    %cst_58 = arith.constant 0.707106769 : f32
    %220 = vector.broadcast %cst_58 : f32 to vector<16x8xf32>
    %221 = arith.mulf %217, %220 : vector<16x8xf32>
    %cst_59 = arith.constant 0.000000e+00 : f32
    %222 = vector.broadcast %cst_59 : f32 to vector<16x8xf32>
    %223 = arith.cmpf oge, %221, %222 : vector<16x8xf32>
    %cst_60 = arith.constant 1.000000e+00 : f32
    %cst_61 = arith.constant -1.000000e+00 : f32
    %224 = vector.broadcast %cst_60 : f32 to vector<16x8xf32>
    %225 = vector.broadcast %cst_61 : f32 to vector<16x8xf32>
    %226 = arith.select %223, %224, %225 : vector<16x8xi1>, vector<16x8xf32>
    %227 = math.absf %221 : vector<16x8xf32>
    %cst_62 = arith.constant 0.327591091 : f32
    %228 = vector.broadcast %cst_62 : f32 to vector<16x8xf32>
    %229 = arith.mulf %228, %227 : vector<16x8xf32>
    %cst_63 = arith.constant 1.000000e+00 : f32
    %230 = vector.broadcast %cst_63 : f32 to vector<16x8xf32>
    %231 = arith.addf %230, %229 : vector<16x8xf32>
    %232 = tpu.reciprocal %231 {approx = true} : vector<16x8xf32> -> vector<16x8xf32>
    %cst_64 = arith.constant 1.06140542 : f32
    %233 = vector.broadcast %cst_64 : f32 to vector<16x8xf32>
    %234 = arith.mulf %233, %232 : vector<16x8xf32>
    %cst_65 = arith.constant -1.45315206 : f32
    %235 = vector.broadcast %cst_65 : f32 to vector<16x8xf32>
    %236 = arith.addf %234, %235 : vector<16x8xf32>
    %237 = arith.mulf %236, %232 : vector<16x8xf32>
    %cst_66 = arith.constant 1.42141378 : f32
    %238 = vector.broadcast %cst_66 : f32 to vector<16x8xf32>
    %239 = arith.addf %237, %238 : vector<16x8xf32>
    %240 = arith.mulf %239, %232 : vector<16x8xf32>
    %cst_67 = arith.constant -0.284496725 : f32
    %241 = vector.broadcast %cst_67 : f32 to vector<16x8xf32>
    %242 = arith.addf %240, %241 : vector<16x8xf32>
    %243 = arith.mulf %242, %232 : vector<16x8xf32>
    %cst_68 = arith.constant 0.254829586 : f32
    %244 = vector.broadcast %cst_68 : f32 to vector<16x8xf32>
    %245 = arith.addf %243, %244 : vector<16x8xf32>
    %246 = arith.mulf %245, %232 : vector<16x8xf32>
    %cst_69 = arith.constant 0.000000e+00 : f32
    %247 = vector.broadcast %cst_69 : f32 to vector<16x8xf32>
    %248 = arith.subf %247, %227 : vector<16x8xf32>
    %249 = arith.mulf %248, %227 : vector<16x8xf32>
    %250 = math.exp %249 : vector<16x8xf32>
    %251 = arith.mulf %246, %250 : vector<16x8xf32>
    %cst_70 = arith.constant 1.000000e+00 : f32
    %252 = vector.broadcast %cst_70 : f32 to vector<16x8xf32>
    %253 = arith.subf %252, %251 : vector<16x8xf32>
    %254 = arith.mulf %226, %253 : vector<16x8xf32>
    %cst_71 = arith.constant 1.000000e+00 : f32
    %255 = vector.broadcast %cst_71 : f32 to vector<16x8xf32>
    %256 = arith.addf %255, %254 : vector<16x8xf32>
    %257 = arith.mulf %219, %256 : vector<16x8xf32>
    %cst_72 = arith.constant dense<0.000000e+00> : vector<16x32xf32>
    %258 = tpu.matmul %257, %150, %cst_72 {dimension_numbers = #tpu.dot_dimension_numbers<[1], [0], [0], [1], [0, 0, 1, 1], [], []>} : vector<16x8xf32>, vector<8x32xf32>, vector<16x32xf32> -> vector<16x32xf32>
    %259 = vector.broadcast %156 : vector<1x32xf32> to vector<16x32xf32>
    %260 = arith.addf %258, %259 : vector<16x32xf32>
    %261 = arith.addf %214, %260 : vector<16x32xf32>
    %cst_73 = arith.constant dense<0.000000e+00> : vector<16xf32>
    %262 = vector.multi_reduction <add>, %261, %cst_73 [1] : vector<16x32xf32> to vector<16xf32>
    %263 = vector.shape_cast %262 : vector<16xf32> to vector<16x1xf32>
    %cst_74 = arith.constant 3.200000e+01 : f32
    %264 = vector.broadcast %cst_74 : f32 to vector<16x1xf32>
    %265 = arith.divf %263, %264 : vector<16x1xf32>
    %266 = vector.broadcast %265 : vector<16x1xf32> to vector<16x32xf32>
    %267 = arith.subf %261, %266 : vector<16x32xf32>
    %268 = arith.mulf %267, %267 : vector<16x32xf32>
    %cst_75 = arith.constant dense<0.000000e+00> : vector<16xf32>
    %269 = vector.multi_reduction <add>, %268, %cst_75 [1] : vector<16x32xf32> to vector<16xf32>
    %270 = vector.shape_cast %269 : vector<16xf32> to vector<16x1xf32>
    %cst_76 = arith.constant 3.200000e+01 : f32
    %271 = vector.broadcast %cst_76 : f32 to vector<16x1xf32>
    %272 = arith.divf %270, %271 : vector<16x1xf32>
    %273 = vector.broadcast %265 : vector<16x1xf32> to vector<16x32xf32>
    %274 = arith.subf %261, %273 : vector<16x32xf32>
    %cst_77 = arith.constant 9.99999974E-6 : f32
    %275 = vector.broadcast %cst_77 : f32 to vector<16x1xf32>
    %276 = arith.addf %272, %275 : vector<16x1xf32>
    %277 = math.rsqrt %276 : vector<16x1xf32>
    %278 = vector.broadcast %277 : vector<16x1xf32> to vector<16x32xf32>
    %279 = arith.mulf %274, %278 : vector<16x32xf32>
    %280 = vector.broadcast %157 : vector<1x32xf32> to vector<16x32xf32>
    %281 = arith.mulf %279, %280 : vector<16x32xf32>
    %282 = vector.broadcast %158 : vector<1x32xf32> to vector<16x32xf32>
    %283 = arith.addf %281, %282 : vector<16x32xf32>
    %c0_78 = arith.constant 0 : index
    %c0_79 = arith.constant 0 : index
    %284 = vector.load %arg3[%c0_78, %c0_79] : memref<40x32xf32, #tpu.memory_space<vmem>>, vector<40x32xf32>
    %285 = vector.extract_strided_slice %284 {offsets = [0, 0], sizes = [32, 32], strides = [1, 1]} : vector<40x32xf32> to vector<32x32xf32>
    %286 = vector.extract_strided_slice %284 {offsets = [32, 0], sizes = [1, 32], strides = [1, 1]} : vector<40x32xf32> to vector<1x32xf32>
    %287 = vector.extract_strided_slice %284 {offsets = [33, 0], sizes = [1, 32], strides = [1, 1]} : vector<40x32xf32> to vector<1x32xf32>
    %288 = vector.extract_strided_slice %284 {offsets = [34, 0], sizes = [1, 32], strides = [1, 1]} : vector<40x32xf32> to vector<1x32xf32>
    %289 = vector.shape_cast %283 : vector<16x32xf32> to vector<2x8x32xf32>
    %290 = vector.extract_strided_slice %289 {offsets = [0, 0, 0], sizes = [2, 1, 32], strides = [1, 1, 1]} : vector<2x8x32xf32> to vector<2x1x32xf32>
    %291 = vector.shape_cast %290 : vector<2x1x32xf32> to vector<2x32xf32>
    %cst_80 = arith.constant dense<0.000000e+00> : vector<2xf32>
    %292 = vector.multi_reduction <add>, %291, %cst_80 [1] : vector<2x32xf32> to vector<2xf32>
    %293 = vector.shape_cast %292 : vector<2xf32> to vector<2x1xf32>
    %cst_81 = arith.constant 3.200000e+01 : f32
    %294 = vector.broadcast %cst_81 : f32 to vector<2x1xf32>
    %295 = arith.divf %293, %294 : vector<2x1xf32>
    %296 = vector.broadcast %295 : vector<2x1xf32> to vector<2x32xf32>
    %297 = arith.subf %291, %296 : vector<2x32xf32>
    %298 = arith.mulf %297, %297 : vector<2x32xf32>
    %cst_82 = arith.constant dense<0.000000e+00> : vector<2xf32>
    %299 = vector.multi_reduction <add>, %298, %cst_82 [1] : vector<2x32xf32> to vector<2xf32>
    %300 = vector.shape_cast %299 : vector<2xf32> to vector<2x1xf32>
    %cst_83 = arith.constant 3.200000e+01 : f32
    %301 = vector.broadcast %cst_83 : f32 to vector<2x1xf32>
    %302 = arith.divf %300, %301 : vector<2x1xf32>
    %303 = vector.broadcast %295 : vector<2x1xf32> to vector<2x32xf32>
    %304 = arith.subf %291, %303 : vector<2x32xf32>
    %cst_84 = arith.constant 9.99999974E-6 : f32
    %305 = vector.broadcast %cst_84 : f32 to vector<2x1xf32>
    %306 = arith.addf %302, %305 : vector<2x1xf32>
    %307 = math.rsqrt %306 : vector<2x1xf32>
    %308 = vector.broadcast %307 : vector<2x1xf32> to vector<2x32xf32>
    %309 = arith.mulf %304, %308 : vector<2x32xf32>
    %310 = vector.broadcast %286 : vector<1x32xf32> to vector<2x32xf32>
    %311 = arith.mulf %309, %310 : vector<2x32xf32>
    %312 = vector.broadcast %287 : vector<1x32xf32> to vector<2x32xf32>
    %313 = arith.addf %311, %312 : vector<2x32xf32>
    %cst_85 = arith.constant dense<0.000000e+00> : vector<2x32xf32>
    %314 = tpu.matmul %313, %285, %cst_85 {dimension_numbers = #tpu.dot_dimension_numbers<[1], [0], [0], [1], [0, 0, 1, 1], [], []>} : vector<2x32xf32>, vector<32x32xf32>, vector<2x32xf32> -> vector<2x32xf32>
    %315 = vector.broadcast %288 : vector<1x32xf32> to vector<2x32xf32>
    %316 = arith.addf %314, %315 : vector<2x32xf32>
    %c0_86 = arith.constant 0 : index
    %c0_87 = arith.constant 0 : index
    %317 = vector.load %arg4[%c0_86, %c0_87] : memref<2x32xf32, #tpu.memory_space<vmem>>, vector<2x32xf32>
    tpu.vector_store %arg4[%c0_86, %c0_87], %316 {strides = array<i32>} : memref<2x32xf32, #tpu.memory_space<vmem>>, vector<2x32xf32>,
    return
  }
}

</mosaic_0001>

<llo_original>
// kernel: tpu_custom_call.1
$region0: #{tpu_custom_call.1}
  #allocation0 [shape = 'u32[]', space=smem, size = 0x4, offset = 0x4, fixed_abs, tag = 'smem constant byte address 0x4 - core index']
  #allocation1 [shape = 'u32[144,128]{1,0:T(1,128)}', space=vmem, size = 0x12000, scoped, tag = 'internal scratch']
  %s0 = inlined_call_operand.vmem [shape: f32[2,8,32], index: 0, kind: input, shape index: {}]
  %s1 = inlined_call_operand.hbm [shape: f32[2,40,136], index: 1, kind: input, shape index: {}]
  %s2 = inlined_call_operand.vmem [shape: f32[2,8,96], index: 2, kind: input, shape index: {}]
  %s3 = inlined_call_operand.vmem [shape: f32[40,32], index: 3, kind: input, shape index: {}]
  %s4 = inlined_call_operand.hbm [shape: f32[2,32], index: 4, kind: output, shape index: {}]
  %s5 = sld [smem:[#allocation0]]
  $region30: #{tpu_custom_call.1} parent=0
    _
  %s7 = ssub.s32 1, %s5
  %s8 = scalar_select 0, %s7, %s5
  $region1: #{tpu_custom_call.1} parent=0
    #allocation2 [shape = 'u8[81920]{0}', space=vmem, size = 0x14000, scoped, tag = 'input window, operand 1, single buffered']
    #allocation3 [shape = 's32[1]{0}', space=sflag, size = 0x4, scoped, tag = 'scoped memory for tpu_custom_call.1']
    #allocation4 [shape = 's32[1]{0}', space=sflag, size = 0x4, scoped, tag = 'scoped memory for tpu_custom_call.1']
    #allocation5 [shape = 'u8[1024]{0}', space=vmem, size = 0x400, scoped, tag = 'output window, operand 0, single buffered']
    %9 = vsyncpa [#allocation3], 0
    %10 = vsyncpa [#allocation4], 0
    // Predicated region
    $region2: #{tpu_custom_call.1} parent=1 // pred_check
      _
    $region3: #{tpu_custom_call.1} parent=1 // pred_check_branch
      %12 = sbr.rel (0) target = $region5
    $region4: #{tpu_custom_call.1} parent=1 // pred_region
      _
    $region5: #{tpu_custom_call.1} parent=1 // pred_fallthru
      _
    // Predicated region
    $region6: #{tpu_custom_call.1} parent=1 // pred_check
      _
    $region7: #{tpu_custom_call.1} parent=1 // pred_check_branch
      %14 = sbr.rel (0) target = $region9
    $region8: #{tpu_custom_call.1} parent=1 // pred_region
      %s16 = ssub.s32 2560, 2560
      %17 = vsyncadd [#allocation3], %s16
      %s18 = sshll.u32 [#allocation2], 4
      %s19 = int_to_ptr.vmem [resolvable:$true] %s18
      %24 = dma.hbm_to_vmem [thread:$0]  %s1, 2560, %s19, [#allocation3], 256, 256, 16
    $region9: #{tpu_custom_call.1} parent=1 // pred_fallthru
      _
    // Predicated region
    $region10: #{tpu_custom_call.1} parent=1 // pred_check
      _
    $region11: #{tpu_custom_call.1} parent=1 // pred_check_branch
      %26 = sbr.rel (0) target = $region13
    $region12: #{tpu_custom_call.1} parent=1 // pred_region
      _
    $region13: #{tpu_custom_call.1} parent=1 // pred_fallthru
      _
    // Predicated region
    $region14: #{tpu_custom_call.1} parent=1 // pred_check
      _
    $region15: #{tpu_custom_call.1} parent=1 // pred_check_branch
      %28 = sbr.rel (0) target = $region17
    $region16: #{tpu_custom_call.1} parent=1 // pred_region
      _
    $region17: #{tpu_custom_call.1} parent=1 // pred_fallthru
      _
    // Predicated region
    $region18: #{tpu_custom_call.1} parent=1 // pred_check
      _
    $region19: #{tpu_custom_call.1} parent=1 // pred_check_branch
      %30 = sbr.rel (0) target = $region21
    $region20: #{tpu_custom_call.1} parent=1 // pred_region
      %31 = dma.done [#allocation3], 2560
    $region21: #{tpu_custom_call.1} parent=1 // pred_fallthru
      _
    %v32 = vld [vmem:[%s0] sm:$0xff]
    %v33 = vld [vmem:[%s0 + $0x8] sm:$0xff]
    %v34 = vld [vmem:[#allocation2] sm:$0xff]
    %v35 = vld [vmem:[#allocation2 + $0x8] sm:$0xff]
    %v36 = vld [vmem:[#allocation2 + $0x10] sm:$0xff]
    %v37 = vld [vmem:[#allocation2 + $0x18] sm:$0xff]
    %v38 = vld [vmem:[#allocation2 + $0x20] sm:$0xff]
    %v39 = vld [vmem:[#allocation2 + $0x28] sm:$0xff]
    %v40 = vld [vmem:[#allocation2 + $0x30] sm:$0xff]
    %v41 = vld [vmem:[#allocation2 + $0x38] sm:$0xff]
    %v42 = vld [vmem:[#allocation2 + $0x40] sm:$0xff]
    %v43 = vld [vmem:[%s2] sm:$0xff]
    %v44 = vlaneseq
    %v45 = vshrl.u32 %v44, 7
    %v46 = vsub.s32 0, %v45
    %v47 = vrot.slane %v43, %v46
    %vm48 = vcmask 261120
    %v50 = vsel %vm48, %v32, 0
    %v53 = vsel %vm48, %v33, 0
    %55 = vmatprep.subr.mxu0 0.0
    %56 = vmatpush1.msra.mxu0 0.0
    %57 = vmatprep.subr.mxu0 0.0
    %58 = vmatpush1.msra.mxu0 0.0
    %59 = vmatprep.subr.mxu0 0.0
    %60 = vmatpush1.msra.mxu0 0.0
    %61 = vmatprep.subr.mxu0 0.0
    %62 = vmatpush1.msra.mxu0 0.0
    %63 = vmatprep.subr.mxu0 0.0
    %64 = vmatpush1.msra.mxu0 0.0
    %65 = vmatprep.subr.mxu0 0.0
    %66 = vmatpush1.msra.mxu0 0.0
    %67 = vmatprep.subr.mxu0 0.0
    %68 = vmatpush1.msra.mxu0 0.0
    %69 = vmatprep.subr.mxu0 0.0
    %70 = vmatpush1.msra.mxu0 0.0
    %71 = vmatprep.subr.mxu0 0.0
    %72 = vmatpush1.msra.mxu0 0.0
    %73 = vmatprep.subr.mxu0 0.0
    %74 = vmatpush1.msra.mxu0 0.0
    %75 = vmatprep.subr.mxu0 0.0
    %76 = vmatpush1.msra.mxu0 0.0
    %77 = vmatprep.subr.mxu0 0.0
    %78 = vmatpush1.msra.mxu0 0.0
    %79 = vmatprep.subr.mxu0 0.0
    %80 = vmatpush1.msra.mxu0 %v40
    %81 = vmatprep.subr.mxu0 0.0
    %82 = vmatpush1.msra.mxu0 %v38
    %83 = vmatprep.subr.mxu0 0.0
    %84 = vmatpush1.msra.mxu0 %v36
    %85 = vmatprep.subr.mxu0 0.0
    %86 = vmatpush1.msra.mxu0 %v34
    %87 = vmatprep.subr.mxu0 0.0
    %88 = vmatpush2.msra.mxu0 0.0
    %89 = vmatprep.subr.mxu0 0.0
    %90 = vmatpush2.msra.mxu0 0.0
    %91 = vmatprep.subr.mxu0 0.0
    %92 = vmatpush2.msra.mxu0 0.0
    %93 = vmatprep.subr.mxu0 0.0
    %94 = vmatpush2.msra.mxu0 0.0
    %95 = vmatprep.subr.mxu0 0.0
    %96 = vmatpush2.msra.mxu0 0.0
    %97 = vmatprep.subr.mxu0 0.0
    %98 = vmatpush2.msra.mxu0 0.0
    %99 = vmatprep.subr.mxu0 0.0
    %100 = vmatpush2.msra.mxu0 0.0
    %101 = vmatprep.subr.mxu0 0.0
    %102 = vmatpush2.msra.mxu0 0.0
    %103 = vmatprep.subr.mxu0 0.0
    %104 = vmatpush2.msra.mxu0 0.0
    %105 = vmatprep.subr.mxu0 0.0
    %106 = vmatpush2.msra.mxu0 0.0
    %107 = vmatprep.subr.mxu0 0.0
    %108 = vmatpush2.msra.mxu0 0.0
    %109 = vmatprep.subr.mxu0 0.0
    %110 = vmatpush2.msra.mxu0 0.0
    %111 = vmatprep.subr.mxu0 0.0
    %112 = vmatpush2.msra.mxu0 0.0
    %113 = vmatprep.subr.mxu0 0.0
    %114 = vmatpush2.msra.mxu0 0.0
    %115 = vmatprep.subr.mxu0 0.0
    %116 = vmatpush2.msra.mxu0 0.0
    %117 = vmatprep.subr.mxu0 0.0
    %118 = vmatpush2.msra.mxu0 0.0
    %119 = vmatprep.mubr.f32.mxu0 0.0
    %120 = vmatmul.mubr.f32.gmra.mxu0 %v50
    %v121 = vpop.f32.mrf.mxu0
    %v122 = vadd.f32 %v47, %v121
    %v123 = vpop.f32.mrf.mxu0
    %124 = vmatprep.mubr.f32.mxu0 0.0
    %125 = vmatmul.mubr.f32.gmra.mxu0 %v53
    %v126 = vpop.f32.mrf.mxu0
    %v127 = vadd.f32 %v47, %v126
    %v128 = vpop.f32.mrf.mxu0
    %129 = vdwg.mxu0
    %132 = vrot.lane.b32.xlu0 %v122, 120
    %v133 = vpop.permute.xlu0 %132
    %134 = vrot.lane.b32.xlu0 %v127, 120
    %v135 = vpop.permute.xlu0 %134
    %138 = vrot.lane.b32.xlu0 %v122, 112
    %v139 = vpop.permute.xlu0 %138
    %140 = vrot.lane.b32.xlu0 %v127, 112
    %v141 = vpop.permute.xlu0 %140
    %144 = vrot.lane.b32.xlu0 %v122, 104
    %v145 = vpop.permute.xlu0 %144
    %146 = vrot.lane.b32.xlu0 %v127, 104
    %v147 = vpop.permute.xlu0 %146
    %150 = vrot.lane.b32.xlu0 %v122, 96
    %v151 = vpop.permute.xlu0 %150
    %152 = vrot.lane.b32.xlu0 %v127, 96
    %v153 = vpop.permute.xlu0 %152
    %156 = vrot.lane.b32.xlu0 %v122, 88
    %v157 = vpop.permute.xlu0 %156
    %158 = vrot.lane.b32.xlu0 %v127, 88
    %v159 = vpop.permute.xlu0 %158
    %162 = vrot.lane.b32.xlu0 %v122, 80
    %v163 = vpop.permute.xlu0 %162
    %164 = vrot.lane.b32.xlu0 %v127, 80
    %v165 = vpop.permute.xlu0 %164
    %168 = vrot.lane.b32.xlu0 %v122, 72
    %v169 = vpop.permute.xlu0 %168
    %170 = vrot.lane.b32.xlu0 %v127, 72
    %v171 = vpop.permute.xlu0 %170
    %174 = vrot.lane.b32.xlu0 %v122, 64
    %v175 = vpop.permute.xlu0 %174
    %176 = vrot.lane.b32.xlu0 %v127, 64
    %v177 = vpop.permute.xlu0 %176
    %180 = vrot.lane.b32.xlu0 %v122, 56
    %v181 = vpop.permute.xlu0 %180
    %182 = vrot.lane.b32.xlu0 %v127, 56
    %v183 = vpop.permute.xlu0 %182
    %186 = vrot.lane.b32.xlu0 %v122, 48
    %v187 = vpop.permute.xlu0 %186
    %188 = vrot.lane.b32.xlu0 %v127, 48
    %v189 = vpop.permute.xlu0 %188
    %192 = vrot.lane.b32.xlu0 %v122, 40
    %v193 = vpop.permute.xlu0 %192
    %194 = vrot.lane.b32.xlu0 %v127, 40
    %v195 = vpop.permute.xlu0 %194
    %v198 = vcombine.low %v122, %v139
    %v199 = vcombine.high %v122, %v139
    %v201 = vunpack.c.l.s4 1983009808
    %v202 = vunpack.c.0.s8 %v201
    %v203 = vlaneseq
    %v204 = vshrl.u32 %v203, 7
    %v205 = vsub.s32 %v202, %v204
    %v206 = vrot.slane %v198, %v205
    %v208 = vunpack.c.l.s4 1983009808
    %v209 = vunpack.c.0.s8 %v208
    %v210 = vlaneseq
    %v211 = vshrl.u32 %v210, 7
    %v212 = vsub.s32 %v209, %v211
    %v213 = vrot.slane %v199, %v212
    %v214 = vcombine.low %v133, %v145
    %v215 = vcombine.high %v133, %v145
    %v217 = vunpack.c.l.s4 1983009808
    %v218 = vunpack.c.0.s8 %v217
    %v219 = vlaneseq
    %v220 = vshrl.u32 %v219, 7
    %v221 = vsub.s32 %v218, %v220
    %v222 = vrot.slane %v214, %v221
    %v224 = vunpack.c.l.s4 1983009808
    %v225 = vunpack.c.0.s8 %v224
    %v226 = vlaneseq
    %v227 = vshrl.u32 %v226, 7
    %v228 = vsub.s32 %v225, %v227
    %v229 = vrot.slane %v215, %v228
    %v230 = vcombine.low %v151, %v163
    %v231 = vcombine.high %v151, %v163
    %v233 = vunpack.c.l.s4 1983009808
    %v234 = vunpack.c.0.s8 %v233
    %v235 = vlaneseq
    %v236 = vshrl.u32 %v235, 7
    %v237 = vsub.s32 %v234, %v236
    %v238 = vrot.slane %v230, %v237
    %v240 = vunpack.c.l.s4 1983009808
    %v241 = vunpack.c.0.s8 %v240
    %v242 = vlaneseq
    %v243 = vshrl.u32 %v242, 7
    %v244 = vsub.s32 %v241, %v243
    %v245 = vrot.slane %v231, %v244
    %v246 = vcombine.low %v157, %v169
    %v247 = vcombine.high %v157, %v169
    %v249 = vunpack.c.l.s4 1983009808
    %v250 = vunpack.c.0.s8 %v249
    %v251 = vlaneseq
    %v252 = vshrl.u32 %v251, 7
    %v253 = vsub.s32 %v250, %v252
    %v254 = vrot.slane %v246, %v253
    %v256 = vunpack.c.l.s4 1983009808
    %v257 = vunpack.c.0.s8 %v256
    %v258 = vlaneseq
    %v259 = vshrl.u32 %v258, 7
    %v260 = vsub.s32 %v257, %v259
    %v261 = vrot.slane %v247, %v260
    %v262 = vcombine.low %v206, %v222
    %v263 = vcombine.high %v206, %v222
    %v265 = vunpack.c.l.s4 1934713408
    %v266 = vunpack.c.0.s8 %v265
    %v267 = vlaneseq
    %v268 = vshrl.u32 %v267, 7
    %v269 = vsub.s32 %v266, %v268
    %v270 = vrot.slane %v262, %v269
    %v272 = vunpack.c.l.s4 1934713408
    %v273 = vunpack.c.0.s8 %v272
    %v274 = vlaneseq
    %v275 = vshrl.u32 %v274, 7
    %v276 = vsub.s32 %v273, %v275
    %v277 = vrot.slane %v263, %v276
    %v278 = vcombine.low %v213, %v229
    %v279 = vcombine.high %v213, %v229
    %v281 = vunpack.c.l.s4 1934713408
    %v282 = vunpack.c.0.s8 %v281
    %v283 = vlaneseq
    %v284 = vshrl.u32 %v283, 7
    %v285 = vsub.s32 %v282, %v284
    %v286 = vrot.slane %v278, %v285
    %v288 = vunpack.c.l.s4 1934713408
    %v289 = vunpack.c.0.s8 %v288
    %v290 = vlaneseq
    %v291 = vshrl.u32 %v290, 7
    %v292 = vsub.s32 %v289, %v291
    %v293 = vrot.slane %v279, %v292
    %v294 = vcombine.low %v238, %v254
    %v295 = vcombine.high %v238, %v254
    %v297 = vunpack.c.l.s4 1934713408
    %v298 = vunpack.c.0.s8 %v297
    %v299 = vlaneseq
    %v300 = vshrl.u32 %v299, 7
    %v301 = vsub.s32 %v298, %v300
    %v302 = vrot.slane %v294, %v301
    %v304 = vunpack.c.l.s4 1934713408
    %v305 = vunpack.c.0.s8 %v304
    %v306 = vlaneseq
    %v307 = vshrl.u32 %v306, 7
    %v308 = vsub.s32 %v305, %v307
    %v309 = vrot.slane %v295, %v308
    %v310 = vcombine.low %v245, %v261
    %v311 = vcombine.high %v245, %v261
    %v313 = vunpack.c.l.s4 1934713408
    %v314 = vunpack.c.0.s8 %v313
    %v315 = vlaneseq
    %v316 = vshrl.u32 %v315, 7
    %v317 = vsub.s32 %v314, %v316
    %v318 = vrot.slane %v310, %v317
    %v320 = vunpack.c.l.s4 1934713408
    %v321 = vunpack.c.0.s8 %v320
    %v322 = vlaneseq
    %v323 = vshrl.u32 %v322, 7
    %v324 = vsub.s32 %v321, %v323
    %v325 = vrot.slane %v311, %v324
    %v326 = vcombine.low %v270, %v302
    %v327 = vcombine.high %v270, %v302
    %v328 = vcombine.low %v277, %v309
    %v329 = vcombine.high %v277, %v309
    %v330 = vcombine.low %v286, %v318
    %v331 = vcombine.high %v286, %v318
    %v332 = vcombine.low %v293, %v325
    %v333 = vcombine.high %v293, %v325
    %v334 = vcombine.low %v175, %v187
    %v335 = vcombine.high %v175, %v187
    %v337 = vunpack.c.l.s4 1983009808
    %v338 = vunpack.c.0.s8 %v337
    %v339 = vlaneseq
    %v340 = vshrl.u32 %v339, 7
    %v341 = vsub.s32 %v338, %v340
    %v342 = vrot.slane %v334, %v341
    %v344 = vunpack.c.l.s4 1983009808
    %v345 = vunpack.c.0.s8 %v344
    %v346 = vlaneseq
    %v347 = vshrl.u32 %v346, 7
    %v348 = vsub.s32 %v345, %v347
    %v349 = vrot.slane %v335, %v348
    %v350 = vcombine.low %v181, %v193
    %v351 = vcombine.high %v181, %v193
    %v353 = vunpack.c.l.s4 1983009808
    %v354 = vunpack.c.0.s8 %v353
    %v355 = vlaneseq
    %v356 = vshrl.u32 %v355, 7
    %v357 = vsub.s32 %v354, %v356
    %v358 = vrot.slane %v350, %v357
    %v360 = vunpack.c.l.s4 1983009808
    %v361 = vunpack.c.0.s8 %v360
    %v362 = vlaneseq
    %v363 = vshrl.u32 %v362, 7
    %v364 = vsub.s32 %v361, %v363
    %v365 = vrot.slane %v351, %v364
    %v366 = vcombine.low %v342, %v358
    %v367 = vcombine.high %v342, %v358
    %v369 = vunpack.c.l.s4 1934713408
    %v370 = vunpack.c.0.s8 %v369
    %v371 = vlaneseq
    %v372 = vshrl.u32 %v371, 7
    %v373 = vsub.s32 %v370, %v372
    %v374 = vrot.slane %v366, %v373
    %v376 = vunpack.c.l.s4 1934713408
    %v377 = vunpack.c.0.s8 %v376
    %v378 = vlaneseq
    %v379 = vshrl.u32 %v378, 7
    %v380 = vsub.s32 %v377, %v379
    %v381 = vrot.slane %v367, %v380
    %v382 = vcombine.low %v349, %v365
    %v383 = vcombine.high %v349, %v365
    %v385 = vunpack.c.l.s4 1934713408
    %v386 = vunpack.c.0.s8 %v385
    %v387 = vlaneseq
    %v388 = vshrl.u32 %v387, 7
    %v389 = vsub.s32 %v386, %v388
    %v390 = vrot.slane %v382, %v389
    %v392 = vunpack.c.l.s4 1934713408
    %v393 = vunpack.c.0.s8 %v392
    %v394 = vlaneseq
    %v395 = vshrl.u32 %v394, 7
    %v396 = vsub.s32 %v393, %v395
    %v397 = vrot.slane %v383, %v396
    %v398 = vcombine.high %v374, 0.0
    %v399 = vcombine.high %v381, 0.0
    %v400 = vcombine.high %v390, 0.0
    %v401 = vcombine.high %v397, 0.0
    %v402 = vcombine.low %v127, %v141
    %v403 = vcombine.high %v127, %v141
    %v405 = vunpack.c.l.s4 1983009808
    %v406 = vunpack.c.0.s8 %v405
    %v407 = vlaneseq
    %v408 = vshrl.u32 %v407, 7
    %v409 = vsub.s32 %v406, %v408
    %v410 = vrot.slane %v402, %v409
    %v412 = vunpack.c.l.s4 1983009808
    %v413 = vunpack.c.0.s8 %v412
    %v414 = vlaneseq
    %v415 = vshrl.u32 %v414, 7
    %v416 = vsub.s32 %v413, %v415
    %v417 = vrot.slane %v403, %v416
    %v418 = vcombine.low %v135, %v147
    %v419 = vcombine.high %v135, %v147
    %v421 = vunpack.c.l.s4 1983009808
    %v422 = vunpack.c.0.s8 %v421
    %v423 = vlaneseq
    %v424 = vshrl.u32 %v423, 7
    %v425 = vsub.s32 %v422, %v424
    %v426 = vrot.slane %v418, %v425
    %v428 = vunpack.c.l.s4 1983009808
    %v429 = vunpack.c.0.s8 %v428
    %v430 = vlaneseq
    %v431 = vshrl.u32 %v430, 7
    %v432 = vsub.s32 %v429, %v431
    %v433 = vrot.slane %v419, %v432
    %v434 = vcombine.low %v153, %v165
    %v435 = vcombine.high %v153, %v165
    %v437 = vunpack.c.l.s4 1983009808
    %v438 = vunpack.c.0.s8 %v437
    %v439 = vlaneseq
    %v440 = vshrl.u32 %v439, 7
    %v441 = vsub.s32 %v438, %v440
    %v442 = vrot.slane %v434, %v441
    %v444 = vunpack.c.l.s4 1983009808
    %v445 = vunpack.c.0.s8 %v444
    %v446 = vlaneseq
    %v447 = vshrl.u32 %v446, 7
    %v448 = vsub.s32 %v445, %v447
    %v449 = vrot.slane %v435, %v448
    %v450 = vcombine.low %v159, %v171
    %v451 = vcombine.high %v159, %v171
    %v453 = vunpack.c.l.s4 1983009808
    %v454 = vunpack.c.0.s8 %v453
    %v455 = vlaneseq
    %v456 = vshrl.u32 %v455, 7
    %v457 = vsub.s32 %v454, %v456
    %v458 = vrot.slane %v450, %v457
    %v460 = vunpack.c.l.s4 1983009808
    %v461 = vunpack.c.0.s8 %v460
    %v462 = vlaneseq
    %v463 = vshrl.u32 %v462, 7
    %v464 = vsub.s32 %v461, %v463
    %v465 = vrot.slane %v451, %v464
    %v466 = vcombine.low %v410, %v426
    %v467 = vcombine.high %v410, %v426
    %v469 = vunpack.c.l.s4 1934713408
    %v470 = vunpack.c.0.s8 %v469
    %v471 = vlaneseq
    %v472 = vshrl.u32 %v471, 7
    %v473 = vsub.s32 %v470, %v472
    %v474 = vrot.slane %v466, %v473
    %v476 = vunpack.c.l.s4 1934713408
    %v477 = vunpack.c.0.s8 %v476
    %v478 = vlaneseq
    %v479 = vshrl.u32 %v478, 7
    %v480 = vsub.s32 %v477, %v479
    %v481 = vrot.slane %v467, %v480
    %v482 = vcombine.low %v417, %v433
    %v483 = vcombine.high %v417, %v433
    %v485 = vunpack.c.l.s4 1934713408
    %v486 = vunpack.c.0.s8 %v485
    %v487 = vlaneseq
    %v488 = vshrl.u32 %v487, 7
    %v489 = vsub.s32 %v486, %v488
    %v490 = vrot.slane %v482, %v489
    %v492 = vunpack.c.l.s4 1934713408
    %v493 = vunpack.c.0.s8 %v492
    %v494 = vlaneseq
    %v495 = vshrl.u32 %v494, 7
    %v496 = vsub.s32 %v493, %v495
    %v497 = vrot.slane %v483, %v496
    %v498 = vcombine.low %v442, %v458
    %v499 = vcombine.high %v442, %v458
    %v501 = vunpack.c.l.s4 1934713408
    %v502 = vunpack.c.0.s8 %v501
    %v503 = vlaneseq
    %v504 = vshrl.u32 %v503, 7
    %v505 = vsub.s32 %v502, %v504
    %v506 = vrot.slane %v498, %v505
    %v508 = vunpack.c.l.s4 1934713408
    %v509 = vunpack.c.0.s8 %v508
    %v510 = vlaneseq
    %v511 = vshrl.u32 %v510, 7
    %v512 = vsub.s32 %v509, %v511
    %v513 = vrot.slane %v499, %v512
    %v514 = vcombine.low %v449, %v465
    %v515 = vcombine.high %v449, %v465
    %v517 = vunpack.c.l.s4 1934713408
    %v518 = vunpack.c.0.s8 %v517
    %v519 = vlaneseq
    %v520 = vshrl.u32 %v519, 7
    %v521 = vsub.s32 %v518, %v520
    %v522 = vrot.slane %v514, %v521
    %v524 = vunpack.c.l.s4 1934713408
    %v525 = vunpack.c.0.s8 %v524
    %v526 = vlaneseq
    %v527 = vshrl.u32 %v526, 7
    %v528 = vsub.s32 %v525, %v527
    %v529 = vrot.slane %v515, %v528
    %v530 = vcombine.low %v474, %v506
    %v531 = vcombine.high %v474, %v506
    %v532 = vcombine.low %v481, %v513
    %v533 = vcombine.high %v481, %v513
    %v534 = vcombine.low %v490, %v522
    %v535 = vcombine.high %v490, %v522
    %v536 = vcombine.low %v497, %v529
    %v537 = vcombine.high %v497, %v529
    %v538 = vcombine.low %v177, %v189
    %v539 = vcombine.high %v177, %v189
    %v541 = vunpack.c.l.s4 1983009808
    %v542 = vunpack.c.0.s8 %v541
    %v543 = vlaneseq
    %v544 = vshrl.u32 %v543, 7
    %v545 = vsub.s32 %v542, %v544
    %v546 = vrot.slane %v538, %v545
    %v548 = vunpack.c.l.s4 1983009808
    %v549 = vunpack.c.0.s8 %v548
    %v550 = vlaneseq
    %v551 = vshrl.u32 %v550, 7
    %v552 = vsub.s32 %v549, %v551
    %v553 = vrot.slane %v539, %v552
    %v554 = vcombine.low %v183, %v195
    %v555 = vcombine.high %v183, %v195
    %v557 = vunpack.c.l.s4 1983009808
    %v558 = vunpack.c.0.s8 %v557
    %v559 = vlaneseq
    %v560 = vshrl.u32 %v559, 7
    %v561 = vsub.s32 %v558, %v560
    %v562 = vrot.slane %v554, %v561
    %v564 = vunpack.c.l.s4 1983009808
    %v565 = vunpack.c.0.s8 %v564
    %v566 = vlaneseq
    %v567 = vshrl.u32 %v566, 7
    %v568 = vsub.s32 %v565, %v567
    %v569 = vrot.slane %v555, %v568
    %v570 = vcombine.low %v546, %v562
    %v571 = vcombine.high %v546, %v562
    %v573 = vunpack.c.l.s4 1934713408
    %v574 = vunpack.c.0.s8 %v573
    %v575 = vlaneseq
    %v576 = vshrl.u32 %v575, 7
    %v577 = vsub.s32 %v574, %v576
    %v578 = vrot.slane %v570, %v577
    %v580 = vunpack.c.l.s4 1934713408
    %v581 = vunpack.c.0.s8 %v580
    %v582 = vlaneseq
    %v583 = vshrl.u32 %v582, 7
    %v584 = vsub.s32 %v581, %v583
    %v585 = vrot.slane %v571, %v584
    %v586 = vcombine.low %v553, %v569
    %v587 = vcombine.high %v553, %v569
    %v589 = vunpack.c.l.s4 1934713408
    %v590 = vunpack.c.0.s8 %v589
    %v591 = vlaneseq
    %v592 = vshrl.u32 %v591, 7
    %v593 = vsub.s32 %v590, %v592
    %v594 = vrot.slane %v586, %v593
    %v596 = vunpack.c.l.s4 1934713408
    %v597 = vunpack.c.0.s8 %v596
    %v598 = vlaneseq
    %v599 = vshrl.u32 %v598, 7
    %v600 = vsub.s32 %v597, %v599
    %v601 = vrot.slane %v587, %v600
    %v602 = vcombine.high %v578, 0.0
    %v603 = vcombine.high %v585, 0.0
    %v604 = vcombine.high %v594, 0.0
    %v605 = vcombine.high %v601, 0.0
    %v606 = vcombine.low %v326, %v328
    %v607 = vcombine.high %v326, %v328
    %v609 = vunpack.c.l.s4 1983009808
    %v610 = vunpack.c.0.s8 %v609
    %v611 = vlaneseq
    %v612 = vshrl.u32 %v611, 7
    %v613 = vsub.s32 %v610, %v612
    %v614 = vrot.slane %v606, %v613
    %v616 = vunpack.c.l.s4 1983009808
    %v617 = vunpack.c.0.s8 %v616
    %v618 = vlaneseq
    %v619 = vshrl.u32 %v618, 7
    %v620 = vsub.s32 %v617, %v619
    %v621 = vrot.slane %v607, %v620
    %v622 = vcombine.low %v327, %v329
    %v623 = vcombine.high %v327, %v329
    %v625 = vunpack.c.l.s4 1983009808
    %v626 = vunpack.c.0.s8 %v625
    %v627 = vlaneseq
    %v628 = vshrl.u32 %v627, 7
    %v629 = vsub.s32 %v626, %v628
    %v630 = vrot.slane %v622, %v629
    %v632 = vunpack.c.l.s4 1983009808
    %v633 = vunpack.c.0.s8 %v632
    %v634 = vlaneseq
    %v635 = vshrl.u32 %v634, 7
    %v636 = vsub.s32 %v633, %v635
    %v637 = vrot.slane %v623, %v636
    %v638 = vcombine.low %v330, %v332
    %v639 = vcombine.high %v330, %v332
    %v641 = vunpack.c.l.s4 1983009808
    %v642 = vunpack.c.0.s8 %v641
    %v643 = vlaneseq
    %v644 = vshrl.u32 %v643, 7
    %v645 = vsub.s32 %v642, %v644
    %v646 = vrot.slane %v638, %v645
    %v648 = vunpack.c.l.s4 1983009808
    %v649 = vunpack.c.0.s8 %v648
    %v650 = vlaneseq
    %v651 = vshrl.u32 %v650, 7
    %v652 = vsub.s32 %v649, %v651
    %v653 = vrot.slane %v639, %v652
    %v654 = vcombine.low %v331, %v333
    %v655 = vcombine.high %v331, %v333
    %v657 = vunpack.c.l.s4 1983009808
    %v658 = vunpack.c.0.s8 %v657
    %v659 = vlaneseq
    %v660 = vshrl.u32 %v659, 7
    %v661 = vsub.s32 %v658, %v660
    %v662 = vrot.slane %v654, %v661
    %v664 = vunpack.c.l.s4 1983009808
    %v665 = vunpack.c.0.s8 %v664
    %v666 = vlaneseq
    %v667 = vshrl.u32 %v666, 7
    %v668 = vsub.s32 %v665, %v667
    %v669 = vrot.slane %v655, %v668
    %v670 = vcombine.low %v614, %v630
    %v671 = vcombine.high %v614, %v630
    %v673 = vunpack.c.l.s4 1934713408
    %v674 = vunpack.c.0.s8 %v673
    %v675 = vlaneseq
    %v676 = vshrl.u32 %v675, 7
    %v677 = vsub.s32 %v674, %v676
    %v678 = vrot.slane %v670, %v677
    %v680 = vunpack.c.l.s4 1934713408
    %v681 = vunpack.c.0.s8 %v680
    %v682 = vlaneseq
    %v683 = vshrl.u32 %v682, 7
    %v684 = vsub.s32 %v681, %v683
    %v685 = vrot.slane %v671, %v684
    %v686 = vcombine.low %v621, %v637
    %v687 = vcombine.high %v621, %v637
    %v689 = vunpack.c.l.s4 1934713408
    %v690 = vunpack.c.0.s8 %v689
    %v691 = vlaneseq
    %v692 = vshrl.u32 %v691, 7
    %v693 = vsub.s32 %v690, %v692
    %v694 = vrot.slane %v686, %v693
    %v696 = vunpack.c.l.s4 1934713408
    %v697 = vunpack.c.0.s8 %v696
    %v698 = vlaneseq
    %v699 = vshrl.u32 %v698, 7
    %v700 = vsub.s32 %v697, %v699
    %v701 = vrot.slane %v687, %v700
    %v702 = vcombine.low %v646, %v662
    %v703 = vcombine.high %v646, %v662
    %v705 = vunpack.c.l.s4 1934713408
    %v706 = vunpack.c.0.s8 %v705
    %v707 = vlaneseq
    %v708 = vshrl.u32 %v707, 7
    %v709 = vsub.s32 %v706, %v708
    %v710 = vrot.slane %v702, %v709
    %v712 = vunpack.c.l.s4 1934713408
    %v713 = vunpack.c.0.s8 %v712
    %v714 = vlaneseq
    %v715 = vshrl.u32 %v714, 7
    %v716 = vsub.s32 %v713, %v715
    %v717 = vrot.slane %v703, %v716
    %v718 = vcombine.low %v653, %v669
    %v719 = vcombine.high %v653, %v669
    %v721 = vunpack.c.l.s4 1934713408
    %v722 = vunpack.c.0.s8 %v721
    %v723 = vlaneseq
    %v724 = vshrl.u32 %v723, 7
    %v725 = vsub.s32 %v722, %v724
    %v726 = vrot.slane %v718, %v725
    %v728 = vunpack.c.l.s4 1934713408
    %v729 = vunpack.c.0.s8 %v728
    %v730 = vlaneseq
    %v731 = vshrl.u32 %v730, 7
    %v732 = vsub.s32 %v729, %v731
    %v733 = vrot.slane %v719, %v732
    %v734 = vcombine.low %v678, %v710
    %v735 = vcombine.high %v678, %v710
    %v736 = vcombine.low %v685, %v717
    %v737 = vcombine.high %v685, %v717
    %v738 = vcombine.low %v694, %v726
    %v739 = vcombine.high %v694, %v726
    %v740 = vcombine.low %v701, %v733
    %v741 = vcombine.high %v701, %v733
    %v742 = vcombine.low %v374, %v381
    %v744 = vunpack.c.l.s4 1983009808
    %v745 = vunpack.c.0.s8 %v744
    %v746 = vlaneseq
    %v747 = vshrl.u32 %v746, 7
    %v748 = vsub.s32 %v745, %v747
    %v749 = vrot.slane %v742, %v748
    %v750 = vcombine.low %v398, %v399
    %v752 = vunpack.c.l.s4 1983009808
    %v753 = vunpack.c.0.s8 %v752
    %v754 = vlaneseq
    %v755 = vshrl.u32 %v754, 7
    %v756 = vsub.s32 %v753, %v755
    %v757 = vrot.slane %v750, %v756
    %v758 = vcombine.low %v390, %v397
    %v760 = vunpack.c.l.s4 1983009808
    %v761 = vunpack.c.0.s8 %v760
    %v762 = vlaneseq
    %v763 = vshrl.u32 %v762, 7
    %v764 = vsub.s32 %v761, %v763
    %v765 = vrot.slane %v758, %v764
    %v766 = vcombine.low %v400, %v401
    %v768 = vunpack.c.l.s4 1983009808
    %v769 = vunpack.c.0.s8 %v768
    %v770 = vlaneseq
    %v771 = vshrl.u32 %v770, 7
    %v772 = vsub.s32 %v769, %v771
    %v773 = vrot.slane %v766, %v772
    %v774 = vcombine.low %v749, %v757
    %v775 = vcombine.high %v749, %v757
    %v777 = vunpack.c.l.s4 1934713408
    %v778 = vunpack.c.0.s8 %v777
    %v779 = vlaneseq
    %v780 = vshrl.u32 %v779, 7
    %v781 = vsub.s32 %v778, %v780
    %v782 = vrot.slane %v774, %v781
    %v784 = vunpack.c.l.s4 1934713408
    %v785 = vunpack.c.0.s8 %v784
    %v786 = vlaneseq
    %v787 = vshrl.u32 %v786, 7
    %v788 = vsub.s32 %v785, %v787
    %v789 = vrot.slane %v775, %v788
    %v790 = vcombine.low %v765, %v773
    %v791 = vcombine.high %v765, %v773
    %v793 = vunpack.c.l.s4 1934713408
    %v794 = vunpack.c.0.s8 %v793
    %v795 = vlaneseq
    %v796 = vshrl.u32 %v795, 7
    %v797 = vsub.s32 %v794, %v796
    %v798 = vrot.slane %v790, %v797
    %v800 = vunpack.c.l.s4 1934713408
    %v801 = vunpack.c.0.s8 %v800
    %v802 = vlaneseq
    %v803 = vshrl.u32 %v802, 7
    %v804 = vsub.s32 %v801, %v803
    %v805 = vrot.slane %v791, %v804
    %v806 = vcombine.low %v782, %v798
    %v807 = vcombine.high %v782, %v798
    %v808 = vcombine.low %v789, %v805
    %v809 = vcombine.high %v789, %v805
    %v810 = vcombine.low %v530, %v532
    %v811 = vcombine.high %v530, %v532
    %v813 = vunpack.c.l.s4 1983009808
    %v814 = vunpack.c.0.s8 %v813
    %v815 = vlaneseq
    %v816 = vshrl.u32 %v815, 7
    %v817 = vsub.s32 %v814, %v816
    %v818 = vrot.slane %v810, %v817
    %v820 = vunpack.c.l.s4 1983009808
    %v821 = vunpack.c.0.s8 %v820
    %v822 = vlaneseq
    %v823 = vshrl.u32 %v822, 7
    %v824 = vsub.s32 %v821, %v823
    %v825 = vrot.slane %v811, %v824
    %v826 = vcombine.low %v531, %v533
    %v827 = vcombine.high %v531, %v533
    %v829 = vunpack.c.l.s4 1983009808
    %v830 = vunpack.c.0.s8 %v829
    %v831 = vlaneseq
    %v832 = vshrl.u32 %v831, 7
    %v833 = vsub.s32 %v830, %v832
    %v834 = vrot.slane %v826, %v833
    %v836 = vunpack.c.l.s4 1983009808
    %v837 = vunpack.c.0.s8 %v836
    %v838 = vlaneseq
    %v839 = vshrl.u32 %v838, 7
    %v840 = vsub.s32 %v837, %v839
    %v841 = vrot.slane %v827, %v840
    %v842 = vcombine.low %v534, %v536
    %v843 = vcombine.high %v534, %v536
    %v845 = vunpack.c.l.s4 1983009808
    %v846 = vunpack.c.0.s8 %v845
    %v847 = vlaneseq
    %v848 = vshrl.u32 %v847, 7
    %v849 = vsub.s32 %v846, %v848
    %v850 = vrot.slane %v842, %v849
    %v852 = vunpack.c.l.s4 1983009808
    %v853 = vunpack.c.0.s8 %v852
    %v854 = vlaneseq
    %v855 = vshrl.u32 %v854, 7
    %v856 = vsub.s32 %v853, %v855
    %v857 = vrot.slane %v843, %v856
    %v858 = vcombine.low %v535, %v537
    %v859 = vcombine.high %v535, %v537
    %v861 = vunpack.c.l.s4 1983009808
    %v862 = vunpack.c.0.s8 %v861
    %v863 = vlaneseq
    %v864 = vshrl.u32 %v863, 7
    %v865 = vsub.s32 %v862, %v864
    %v866 = vrot.slane %v858, %v865
    %v868 = vunpack.c.l.s4 1983009808
    %v869 = vunpack.c.0.s8 %v868
    %v870 = vlaneseq
    %v871 = vshrl.u32 %v870, 7
    %v872 = vsub.s32 %v869, %v871
    %v873 = vrot.slane %v859, %v872
    %v874 = vcombine.low %v818, %v834
    %v875 = vcombine.high %v818, %v834
    %v877 = vunpack.c.l.s4 1934713408
    %v878 = vunpack.c.0.s8 %v877
    %v879 = vlaneseq
    %v880 = vshrl.u32 %v879, 7
    %v881 = vsub.s32 %v878, %v880
    %v882 = vrot.slane %v874, %v881
    %v884 = vunpack.c.l.s4 1934713408
    %v885 = vunpack.c.0.s8 %v884
    %v886 = vlaneseq
    %v887 = vshrl.u32 %v886, 7
    %v888 = vsub.s32 %v885, %v887
    %v889 = vrot.slane %v875, %v888
    %v890 = vcombine.low %v825, %v841
    %v891 = vcombine.high %v825, %v841
    %v893 = vunpack.c.l.s4 1934713408
    %v894 = vunpack.c.0.s8 %v893
    %v895 = vlaneseq
    %v896 = vshrl.u32 %v895, 7
    %v897 = vsub.s32 %v894, %v896
    %v898 = vrot.slane %v890, %v897
    %v900 = vunpack.c.l.s4 1934713408
    %v901 = vunpack.c.0.s8 %v900
    %v902 = vlaneseq
    %v903 = vshrl.u32 %v902, 7
    %v904 = vsub.s32 %v901, %v903
    %v905 = vrot.slane %v891, %v904
    %v906 = vcombine.low %v850, %v866
    %v907 = vcombine.high %v850, %v866
    %v909 = vunpack.c.l.s4 1934713408
    %v910 = vunpack.c.0.s8 %v909
    %v911 = vlaneseq
    %v912 = vshrl.u32 %v911, 7
    %v913 = vsub.s32 %v910, %v912
    %v914 = vrot.slane %v906, %v913
    %v916 = vunpack.c.l.s4 1934713408
    %v917 = vunpack.c.0.s8 %v916
    %v918 = vlaneseq
    %v919 = vshrl.u32 %v918, 7
    %v920 = vsub.s32 %v917, %v919
    %v921 = vrot.slane %v907, %v920
    %v922 = vcombine.low %v857, %v873
    %v923 = vcombine.high %v857, %v873
    %v925 = vunpack.c.l.s4 1934713408
    %v926 = vunpack.c.0.s8 %v925
    %v927 = vlaneseq
    %v928 = vshrl.u32 %v927, 7
    %v929 = vsub.s32 %v926, %v928
    %v930 = vrot.slane %v922, %v929
    %v932 = vunpack.c.l.s4 1934713408
    %v933 = vunpack.c.0.s8 %v932
    %v934 = vlaneseq
    %v935 = vshrl.u32 %v934, 7
    %v936 = vsub.s32 %v933, %v935
    %v937 = vrot.slane %v923, %v936
    %v938 = vcombine.low %v882, %v914
    %v939 = vcombine.high %v882, %v914
    %v940 = vcombine.low %v889, %v921
    %v941 = vcombine.high %v889, %v921
    %v942 = vcombine.low %v898, %v930
    %v943 = vcombine.high %v898, %v930
    %v944 = vcombine.low %v905, %v937
    %v945 = vcombine.high %v905, %v937
    %v946 = vcombine.low %v578, %v585
    %v948 = vunpack.c.l.s4 1983009808
    %v949 = vunpack.c.0.s8 %v948
    %v950 = vlaneseq
    %v951 = vshrl.u32 %v950, 7
    %v952 = vsub.s32 %v949, %v951
    %v953 = vrot.slane %v946, %v952
    %v954 = vcombine.low %v602, %v603
    %v956 = vunpack.c.l.s4 1983009808
    %v957 = vunpack.c.0.s8 %v956
    %v958 = vlaneseq
    %v959 = vshrl.u32 %v958, 7
    %v960 = vsub.s32 %v957, %v959
    %v961 = vrot.slane %v954, %v960
    %v962 = vcombine.low %v594, %v601
    %v964 = vunpack.c.l.s4 1983009808
    %v965 = vunpack.c.0.s8 %v964
    %v966 = vlaneseq
    %v967 = vshrl.u32 %v966, 7
    %v968 = vsub.s32 %v965, %v967
    %v969 = vrot.slane %v962, %v968
    %v970 = vcombine.low %v604, %v605
    %v972 = vunpack.c.l.s4 1983009808
    %v973 = vunpack.c.0.s8 %v972
    %v974 = vlaneseq
    %v975 = vshrl.u32 %v974, 7
    %v976 = vsub.s32 %v973, %v975
    %v977 = vrot.slane %v970, %v976
    %v978 = vcombine.low %v953, %v961
    %v979 = vcombine.high %v953, %v961
    %v981 = vunpack.c.l.s4 1934713408
    %v982 = vunpack.c.0.s8 %v981
    %v983 = vlaneseq
    %v984 = vshrl.u32 %v983, 7
    %v985 = vsub.s32 %v982, %v984
    %v986 = vrot.slane %v978, %v985
    %v988 = vunpack.c.l.s4 1934713408
    %v989 = vunpack.c.0.s8 %v988
    %v990 = vlaneseq
    %v991 = vshrl.u32 %v990, 7
    %v992 = vsub.s32 %v989, %v991
    %v993 = vrot.slane %v979, %v992
    %v994 = vcombine.low %v969, %v977
    %v995 = vcombine.high %v969, %v977
    %v997 = vunpack.c.l.s4 1934713408
    %v998 = vunpack.c.0.s8 %v997
    %v999 = vlaneseq
    %v1000 = vshrl.u32 %v999, 7
    %v1001 = vsub.s32 %v998, %v1000
    %v1002 = vrot.slane %v994, %v1001
    %v1004 = vunpack.c.l.s4 1934713408
    %v1005 = vunpack.c.0.s8 %v1004
    %v1006 = vlaneseq
    %v1007 = vshrl.u32 %v1006, 7
    %v1008 = vsub.s32 %v1005, %v1007
    %v1009 = vrot.slane %v995, %v1008
    %v1010 = vcombine.low %v986, %v1002
    %v1011 = vcombine.high %v986, %v1002
    %v1012 = vcombine.low %v993, %v1009
    %v1013 = vcombine.high %v993, %v1009
    %vm1014 = vcmask 64512
    %v1016 = vsel %vm1014, %v734, 0
    %v1019 = vsel %vm1014, %v738, 0
    %1021 = vmatprep.subr.mxu0 0.0
    %1022 = vmatpush1.xpose.msra.mxu0 0.0
    %1023 = vmatprep.subr.mxu0 0.0
    %1024 = vmatpush1.xpose.msra.mxu0 0.0
    %1025 = vmatprep.subr.mxu0 0.0
    %1026 = vmatpush1.xpose.msra.mxu0 0.0
    %1027 = vmatprep.subr.mxu0 0.0
    %1028 = vmatpush1.xpose.msra.mxu0 0.0
    %1029 = vmatprep.subr.mxu0 0.0
    %1030 = vmatpush1.xpose.msra.mxu0 0.0
    %1031 = vmatprep.subr.mxu0 0.0
    %1032 = vmatpush1.xpose.msra.mxu0 0.0
    %1033 = vmatprep.subr.mxu0 0.0
    %1034 = vmatpush1.xpose.msra.mxu0 0.0
    %1035 = vmatprep.subr.mxu0 0.0
    %1036 = vmatpush1.xpose.msra.mxu0 0.0
    %1037 = vmatprep.subr.mxu0 0.0
    %1038 = vmatpush1.xpose.msra.mxu0 0.0
    %1039 = vmatprep.subr.mxu0 0.0
    %1040 = vmatpush1.xpose.msra.mxu0 0.0
    %1041 = vmatprep.subr.mxu0 0.0
    %1042 = vmatpush1.xpose.msra.mxu0 0.0
    %1043 = vmatprep.subr.mxu0 0.0
    %1044 = vmatpush1.xpose.msra.mxu0 0.0
    %1045 = vmatprep.subr.mxu0 0.0
    %1046 = vmatpush1.xpose.msra.mxu0 0.0
    %1047 = vmatprep.subr.mxu0 0.0
    %1048 = vmatpush1.xpose.msra.mxu0 0.0
    %1049 = vmatprep.subr.mxu0 0.0
    %1050 = vmatpush1.xpose.msra.mxu0 0.0
    %1051 = vmatprep.subr.mxu0 0.0
    %1052 = vmatpush1.xpose.msra.mxu0 %v1019
    %1053 = vmatprep.subr.mxu0 0.0
    %1054 = vmatpush2.xpose.msra.mxu0 0.0
    %1055 = vmatprep.subr.mxu0 0.0
    %1056 = vmatpush2.xpose.msra.mxu0 0.0
    %1057 = vmatprep.subr.mxu0 0.0
    %1058 = vmatpush2.xpose.msra.mxu0 0.0
    %1059 = vmatprep.subr.mxu0 0.0
    %1060 = vmatpush2.xpose.msra.mxu0 0.0
    %1061 = vmatprep.subr.mxu0 0.0
    %1062 = vmatpush2.xpose.msra.mxu0 0.0
    %1063 = vmatprep.subr.mxu0 0.0
    %1064 = vmatpush2.xpose.msra.mxu0 0.0
    %1065 = vmatprep.subr.mxu0 0.0
    %1066 = vmatpush2.xpose.msra.mxu0 0.0
    %1067 = vmatprep.subr.mxu0 0.0
    %1068 = vmatpush2.xpose.msra.mxu0 0.0
    %1069 = vmatprep.subr.mxu0 0.0
    %1070 = vmatpush2.xpose.msra.mxu0 0.0
    %1071 = vmatprep.subr.mxu0 0.0
    %1072 = vmatpush2.xpose.msra.mxu0 0.0
    %1073 = vmatprep.subr.mxu0 0.0
    %1074 = vmatpush2.xpose.msra.mxu0 0.0
    %1075 = vmatprep.subr.mxu0 0.0
    %1076 = vmatpush2.xpose.msra.mxu0 0.0
    %1077 = vmatprep.subr.mxu0 0.0
    %1078 = vmatpush2.xpose.msra.mxu0 0.0
    %1079 = vmatprep.subr.mxu0 0.0
    %1080 = vmatpush2.xpose.msra.mxu0 0.0
    %1081 = vmatprep.subr.mxu0 0.0
    %1082 = vmatpush2.xpose.msra.mxu0 0.0
    %1083 = vmatprep.subr.mxu0 0.0
    %1084 = vmatpush2.xpose.msra.mxu0 0.0
    %1085 = vmatprep.mubr.f32.mxu0 0.0
    %1086 = vmatmul.mubr.f32.gmra.mxu0 %v1016
    %v1087 = vpop.f32.mrf.mxu0
    %v1088 = vadd.f32 0.0, %v1087
    %v1089 = vpop.f32.mrf.mxu0
    %1090 = vdwg.mxu0
    %v1092 = vsel %vm1014, %v735, 0
    %v1095 = vsel %vm1014, %v739, 0
    %1097 = vmatprep.subr.mxu0 0.0
    %1098 = vmatpush1.xpose.msra.mxu0 0.0
    %1099 = vmatprep.subr.mxu0 0.0
    %1100 = vmatpush1.xpose.msra.mxu0 0.0
    %1101 = vmatprep.subr.mxu0 0.0
    %1102 = vmatpush1.xpose.msra.mxu0 0.0
    %1103 = vmatprep.subr.mxu0 0.0
    %1104 = vmatpush1.xpose.msra.mxu0 0.0
    %1105 = vmatprep.subr.mxu0 0.0
    %1106 = vmatpush1.xpose.msra.mxu0 0.0
    %1107 = vmatprep.subr.mxu0 0.0
    %1108 = vmatpush1.xpose.msra.mxu0 0.0
    %1109 = vmatprep.subr.mxu0 0.0
    %1110 = vmatpush1.xpose.msra.mxu0 0.0
    %1111 = vmatprep.subr.mxu0 0.0
    %1112 = vmatpush1.xpose.msra.mxu0 0.0
    %1113 = vmatprep.subr.mxu0 0.0
    %1114 = vmatpush1.xpose.msra.mxu0 0.0
    %1115 = vmatprep.subr.mxu0 0.0
    %1116 = vmatpush1.xpose.msra.mxu0 0.0
    %1117 = vmatprep.subr.mxu0 0.0
    %1118 = vmatpush1.xpose.msra.mxu0 0.0
    %1119 = vmatprep.subr.mxu0 0.0
    %1120 = vmatpush1.xpose.msra.mxu0 0.0
    %1121 = vmatprep.subr.mxu0 0.0
    %1122 = vmatpush1.xpose.msra.mxu0 0.0
    %1123 = vmatprep.subr.mxu0 0.0
    %1124 = vmatpush1.xpose.msra.mxu0 0.0
    %1125 = vmatprep.subr.mxu0 0.0
    %1126 = vmatpush1.xpose.msra.mxu0 0.0
    %1127 = vmatprep.subr.mxu0 0.0
    %1128 = vmatpush1.xpose.msra.mxu0 %v1095
    %1129 = vmatprep.subr.mxu0 0.0
    %1130 = vmatpush2.xpose.msra.mxu0 0.0
    %1131 = vmatprep.subr.mxu0 0.0
    %1132 = vmatpush2.xpose.msra.mxu0 0.0
    %1133 = vmatprep.subr.mxu0 0.0
    %1134 = vmatpush2.xpose.msra.mxu0 0.0
    %1135 = vmatprep.subr.mxu0 0.0
    %1136 = vmatpush2.xpose.msra.mxu0 0.0
    %1137 = vmatprep.subr.mxu0 0.0
    %1138 = vmatpush2.xpose.msra.mxu0 0.0
    %1139 = vmatprep.subr.mxu0 0.0
    %1140 = vmatpush2.xpose.msra.mxu0 0.0
    %1141 = vmatprep.subr.mxu0 0.0
    %1142 = vmatpush2.xpose.msra.mxu0 0.0
    %1143 = vmatprep.subr.mxu0 0.0
    %1144 = vmatpush2.xpose.msra.mxu0 0.0
    %1145 = vmatprep.subr.mxu0 0.0
    %1146 = vmatpush2.xpose.msra.mxu0 0.0
    %1147 = vmatprep.subr.mxu0 0.0
    %1148 = vmatpush2.xpose.msra.mxu0 0.0
    %1149 = vmatprep.subr.mxu0 0.0
    %1150 = vmatpush2.xpose.msra.mxu0 0.0
    %1151 = vmatprep.subr.mxu0 0.0
    %1152 = vmatpush2.xpose.msra.mxu0 0.0
    %1153 = vmatprep.subr.mxu0 0.0
    %1154 = vmatpush2.xpose.msra.mxu0 0.0
    %1155 = vmatprep.subr.mxu0 0.0
    %1156 = vmatpush2.xpose.msra.mxu0 0.0
    %1157 = vmatprep.subr.mxu0 0.0
    %1158 = vmatpush2.xpose.msra.mxu0 0.0
    %1159 = vmatprep.subr.mxu0 0.0
    %1160 = vmatpush2.xpose.msra.mxu0 0.0
    %1161 = vmatprep.mubr.f32.mxu0 0.0
    %1162 = vmatmul.mubr.f32.gmra.mxu0 %v1092
    %v1163 = vpop.f32.mrf.mxu0
    %v1164 = vadd.f32 0.0, %v1163
    %v1165 = vpop.f32.mrf.mxu0
    %1166 = vdwg.mxu0
    %v1168 = vsel %vm1014, %v736, 0
    %v1171 = vsel %vm1014, %v740, 0
    %1173 = vmatprep.subr.mxu0 0.0
    %1174 = vmatpush1.xpose.msra.mxu0 0.0
    %1175 = vmatprep.subr.mxu0 0.0
    %1176 = vmatpush1.xpose.msra.mxu0 0.0
    %1177 = vmatprep.subr.mxu0 0.0
    %1178 = vmatpush1.xpose.msra.mxu0 0.0
    %1179 = vmatprep.subr.mxu0 0.0
    %1180 = vmatpush1.xpose.msra.mxu0 0.0
    %1181 = vmatprep.subr.mxu0 0.0
    %1182 = vmatpush1.xpose.msra.mxu0 0.0
    %1183 = vmatprep.subr.mxu0 0.0
    %1184 = vmatpush1.xpose.msra.mxu0 0.0
    %1185 = vmatprep.subr.mxu0 0.0
    %1186 = vmatpush1.xpose.msra.mxu0 0.0
    %1187 = vmatprep.subr.mxu0 0.0
    %1188 = vmatpush1.xpose.msra.mxu0 0.0
    %1189 = vmatprep.subr.mxu0 0.0
    %1190 = vmatpush1.xpose.msra.mxu0 0.0
    %1191 = vmatprep.subr.mxu0 0.0
    %1192 = vmatpush1.xpose.msra.mxu0 0.0
    %1193 = vmatprep.subr.mxu0 0.0
    %1194 = vmatpush1.xpose.msra.mxu0 0.0
    %1195 = vmatprep.subr.mxu0 0.0
    %1196 = vmatpush1.xpose.msra.mxu0 0.0
    %1197 = vmatprep.subr.mxu0 0.0
    %1198 = vmatpush1.xpose.msra.mxu0 0.0
    %1199 = vmatprep.subr.mxu0 0.0
    %1200 = vmatpush1.xpose.msra.mxu0 0.0
    %1201 = vmatprep.subr.mxu0 0.0
    %1202 = vmatpush1.xpose.msra.mxu0 0.0
    %1203 = vmatprep.subr.mxu0 0.0
    %1204 = vmatpush1.xpose.msra.mxu0 %v1171
    %1205 = vmatprep.subr.mxu0 0.0
    %1206 = vmatpush2.xpose.msra.mxu0 0.0
    %1207 = vmatprep.subr.mxu0 0.0
    %1208 = vmatpush2.xpose.msra.mxu0 0.0
    %1209 = vmatprep.subr.mxu0 0.0
    %1210 = vmatpush2.xpose.msra.mxu0 0.0
    %1211 = vmatprep.subr.mxu0 0.0
    %1212 = vmatpush2.xpose.msra.mxu0 0.0
    %1213 = vmatprep.subr.mxu0 0.0
    %1214 = vmatpush2.xpose.msra.mxu0 0.0
    %1215 = vmatprep.subr.mxu0 0.0
    %1216 = vmatpush2.xpose.msra.mxu0 0.0
    %1217 = vmatprep.subr.mxu0 0.0
    %1218 = vmatpush2.xpose.msra.mxu0 0.0
    %1219 = vmatprep.subr.mxu0 0.0
    %1220 = vmatpush2.xpose.msra.mxu0 0.0
    %1221 = vmatprep.subr.mxu0 0.0
    %1222 = vmatpush2.xpose.msra.mxu0 0.0
    %1223 = vmatprep.subr.mxu0 0.0
    %1224 = vmatpush2.xpose.msra.mxu0 0.0
    %1225 = vmatprep.subr.mxu0 0.0
    %1226 = vmatpush2.xpose.msra.mxu0 0.0
    %1227 = vmatprep.subr.mxu0 0.0
    %1228 = vmatpush2.xpose.msra.mxu0 0.0
    %1229 = vmatprep.subr.mxu0 0.0
    %1230 = vmatpush2.xpose.msra.mxu0 0.0
    %1231 = vmatprep.subr.mxu0 0.0
    %1232 = vmatpush2.xpose.msra.mxu0 0.0
    %1233 = vmatprep.subr.mxu0 0.0
    %1234 = vmatpush2.xpose.msra.mxu0 0.0
    %1235 = vmatprep.subr.mxu0 0.0
    %1236 = vmatpush2.xpose.msra.mxu0 0.0
    %1237 = vmatprep.mubr.f32.mxu0 0.0
    %1238 = vmatmul.mubr.f32.gmra.mxu0 %v1168
    %v1239 = vpop.f32.mrf.mxu0
    %v1240 = vadd.f32 0.0, %v1239
    %v1241 = vpop.f32.mrf.mxu0
    %1242 = vdwg.mxu0
    %v1244 = vsel %vm1014, %v737, 0
    %v1247 = vsel %vm1014, %v741, 0
    %1249 = vmatprep.subr.mxu0 0.0
    %1250 = vmatpush1.xpose.msra.mxu0 0.0
    %1251 = vmatprep.subr.mxu0 0.0
    %1252 = vmatpush1.xpose.msra.mxu0 0.0
    %1253 = vmatprep.subr.mxu0 0.0
    %1254 = vmatpush1.xpose.msra.mxu0 0.0
    %1255 = vmatprep.subr.mxu0 0.0
    %1256 = vmatpush1.xpose.msra.mxu0 0.0
    %1257 = vmatprep.subr.mxu0 0.0
    %1258 = vmatpush1.xpose.msra.mxu0 0.0
    %1259 = vmatprep.subr.mxu0 0.0
    %1260 = vmatpush1.xpose.msra.mxu0 0.0
    %1261 = vmatprep.subr.mxu0 0.0
    %1262 = vmatpush1.xpose.msra.mxu0 0.0
    %1263 = vmatprep.subr.mxu0 0.0
    %1264 = vmatpush1.xpose.msra.mxu0 0.0
    %1265 = vmatprep.subr.mxu0 0.0
    %1266 = vmatpush1.xpose.msra.mxu0 0.0
    %1267 = vmatprep.subr.mxu0 0.0
    %1268 = vmatpush1.xpose.msra.mxu0 0.0
    %1269 = vmatprep.subr.mxu0 0.0
    %1270 = vmatpush1.xpose.msra.mxu0 0.0
    %1271 = vmatprep.subr.mxu0 0.0
    %1272 = vmatpush1.xpose.msra.mxu0 0.0
    %1273 = vmatprep.subr.mxu0 0.0
    %1274 = vmatpush1.xpose.msra.mxu0 0.0
    %1275 = vmatprep.subr.mxu0 0.0
    %1276 = vmatpush1.xpose.msra.mxu0 0.0
    %1277 = vmatprep.subr.mxu0 0.0
    %1278 = vmatpush1.xpose.msra.mxu0 0.0
    %1279 = vmatprep.subr.mxu0 0.0
    %1280 = vmatpush1.xpose.msra.mxu0 %v1247
    %1281 = vmatprep.subr.mxu0 0.0
    %1282 = vmatpush2.xpose.msra.mxu0 0.0
    %1283 = vmatprep.subr.mxu0 0.0
    %1284 = vmatpush2.xpose.msra.mxu0 0.0
    %1285 = vmatprep.subr.mxu0 0.0
    %1286 = vmatpush2.xpose.msra.mxu0 0.0
    %1287 = vmatprep.subr.mxu0 0.0
    %1288 = vmatpush2.xpose.msra.mxu0 0.0
    %1289 = vmatprep.subr.mxu0 0.0
    %1290 = vmatpush2.xpose.msra.mxu0 0.0
    %1291 = vmatprep.subr.mxu0 0.0
    %1292 = vmatpush2.xpose.msra.mxu0 0.0
    %1293 = vmatprep.subr.mxu0 0.0
    %1294 = vmatpush2.xpose.msra.mxu0 0.0
    %1295 = vmatprep.subr.mxu0 0.0
    %1296 = vmatpush2.xpose.msra.mxu0 0.0
    %1297 = vmatprep.subr.mxu0 0.0
    %1298 = vmatpush2.xpose.msra.mxu0 0.0
    %1299 = vmatprep.subr.mxu0 0.0
    %1300 = vmatpush2.xpose.msra.mxu0 0.0
    %1301 = vmatprep.subr.mxu0 0.0
    %1302 = vmatpush2.xpose.msra.mxu0 0.0
    %1303 = vmatprep.subr.mxu0 0.0
    %1304 = vmatpush2.xpose.msra.mxu0 0.0
    %1305 = vmatprep.subr.mxu0 0.0
    %1306 = vmatpush2.xpose.msra.mxu0 0.0
    %1307 = vmatprep.subr.mxu0 0.0
    %1308 = vmatpush2.xpose.msra.mxu0 0.0
    %1309 = vmatprep.subr.mxu0 0.0
    %1310 = vmatpush2.xpose.msra.mxu0 0.0
    %1311 = vmatprep.subr.mxu0 0.0
    %1312 = vmatpush2.xpose.msra.mxu0 0.0
    %1313 = vmatprep.mubr.f32.mxu0 0.0
    %1314 = vmatmul.mubr.f32.gmra.mxu0 %v1244
    %v1315 = vpop.f32.mrf.mxu0
    %v1316 = vadd.f32 0.0, %v1315
    %v1317 = vpop.f32.mrf.mxu0
    %1318 = vdwg.mxu0
    %v1320 = vsel %vm1014, %v938, 0
    %v1323 = vsel %vm1014, %v942, 0
    %1325 = vmatprep.subr.mxu0 0.0
    %1326 = vmatpush1.xpose.msra.mxu0 0.0
    %1327 = vmatprep.subr.mxu0 0.0
    %1328 = vmatpush1.xpose.msra.mxu0 0.0
    %1329 = vmatprep.subr.mxu0 0.0
    %1330 = vmatpush1.xpose.msra.mxu0 0.0
    %1331 = vmatprep.subr.mxu0 0.0
    %1332 = vmatpush1.xpose.msra.mxu0 0.0
    %1333 = vmatprep.subr.mxu0 0.0
    %1334 = vmatpush1.xpose.msra.mxu0 0.0
    %1335 = vmatprep.subr.mxu0 0.0
    %1336 = vmatpush1.xpose.msra.mxu0 0.0
    %1337 = vmatprep.subr.mxu0 0.0
    %1338 = vmatpush1.xpose.msra.mxu0 0.0
    %1339 = vmatprep.subr.mxu0 0.0
    %1340 = vmatpush1.xpose.msra.mxu0 0.0
    %1341 = vmatprep.subr.mxu0 0.0
    %1342 = vmatpush1.xpose.msra.mxu0 0.0
    %1343 = vmatprep.subr.mxu0 0.0
    %1344 = vmatpush1.xpose.msra.mxu0 0.0
    %1345 = vmatprep.subr.mxu0 0.0
    %1346 = vmatpush1.xpose.msra.mxu0 0.0
    %1347 = vmatprep.subr.mxu0 0.0
    %1348 = vmatpush1.xpose.msra.mxu0 0.0
    %1349 = vmatprep.subr.mxu0 0.0
    %1350 = vmatpush1.xpose.msra.mxu0 0.0
    %1351 = vmatprep.subr.mxu0 0.0
    %1352 = vmatpush1.xpose.msra.mxu0 0.0
    %1353 = vmatprep.subr.mxu0 0.0
    %1354 = vmatpush1.xpose.msra.mxu0 0.0
    %1355 = vmatprep.subr.mxu0 0.0
    %1356 = vmatpush1.xpose.msra.mxu0 %v1323
    %1357 = vmatprep.subr.mxu0 0.0
    %1358 = vmatpush2.xpose.msra.mxu0 0.0
    %1359 = vmatprep.subr.mxu0 0.0
    %1360 = vmatpush2.xpose.msra.mxu0 0.0
    %1361 = vmatprep.subr.mxu0 0.0
    %1362 = vmatpush2.xpose.msra.mxu0 0.0
    %1363 = vmatprep.subr.mxu0 0.0
    %1364 = vmatpush2.xpose.msra.mxu0 0.0
    %1365 = vmatprep.subr.mxu0 0.0
    %1366 = vmatpush2.xpose.msra.mxu0 0.0
    %1367 = vmatprep.subr.mxu0 0.0
    %1368 = vmatpush2.xpose.msra.mxu0 0.0
    %1369 = vmatprep.subr.mxu0 0.0
    %1370 = vmatpush2.xpose.msra.mxu0 0.0
    %1371 = vmatprep.subr.mxu0 0.0
    %1372 = vmatpush2.xpose.msra.mxu0 0.0
    %1373 = vmatprep.subr.mxu0 0.0
    %1374 = vmatpush2.xpose.msra.mxu0 0.0
    %1375 = vmatprep.subr.mxu0 0.0
    %1376 = vmatpush2.xpose.msra.mxu0 0.0
    %1377 = vmatprep.subr.mxu0 0.0
    %1378 = vmatpush2.xpose.msra.mxu0 0.0
    %1379 = vmatprep.subr.mxu0 0.0
    %1380 = vmatpush2.xpose.msra.mxu0 0.0
    %1381 = vmatprep.subr.mxu0 0.0
    %1382 = vmatpush2.xpose.msra.mxu0 0.0
    %1383 = vmatprep.subr.mxu0 0.0
    %1384 = vmatpush2.xpose.msra.mxu0 0.0
    %1385 = vmatprep.subr.mxu0 0.0
    %1386 = vmatpush2.xpose.msra.mxu0 0.0
    %1387 = vmatprep.subr.mxu0 0.0
    %1388 = vmatpush2.xpose.msra.mxu0 0.0
    %1389 = vmatprep.mubr.f32.mxu0 0.0
    %1390 = vmatmul.mubr.f32.gmra.mxu0 %v1320
    %v1391 = vpop.f32.mrf.mxu0
    %v1392 = vadd.f32 0.0, %v1391
    %v1393 = vpop.f32.mrf.mxu0
    %1394 = vdwg.mxu0
    %v1396 = vsel %vm1014, %v939, 0
    %v1399 = vsel %vm1014, %v943, 0
    %1401 = vmatprep.subr.mxu0 0.0
    %1402 = vmatpush1.xpose.msra.mxu0 0.0
    %1403 = vmatprep.subr.mxu0 0.0
    %1404 = vmatpush1.xpose.msra.mxu0 0.0
    %1405 = vmatprep.subr.mxu0 0.0
    %1406 = vmatpush1.xpose.msra.mxu0 0.0
    %1407 = vmatprep.subr.mxu0 0.0
    %1408 = vmatpush1.xpose.msra.mxu0 0.0
    %1409 = vmatprep.subr.mxu0 0.0
    %1410 = vmatpush1.xpose.msra.mxu0 0.0
    %1411 = vmatprep.subr.mxu0 0.0
    %1412 = vmatpush1.xpose.msra.mxu0 0.0
    %1413 = vmatprep.subr.mxu0 0.0
    %1414 = vmatpush1.xpose.msra.mxu0 0.0
    %1415 = vmatprep.subr.mxu0 0.0
    %1416 = vmatpush1.xpose.msra.mxu0 0.0
    %1417 = vmatprep.subr.mxu0 0.0
    %1418 = vmatpush1.xpose.msra.mxu0 0.0
    %1419 = vmatprep.subr.mxu0 0.0
    %1420 = vmatpush1.xpose.msra.mxu0 0.0
    %1421 = vmatprep.subr.mxu0 0.0
    %1422 = vmatpush1.xpose.msra.mxu0 0.0
    %1423 = vmatprep.subr.mxu0 0.0
    %1424 = vmatpush1.xpose.msra.mxu0 0.0
    %1425 = vmatprep.subr.mxu0 0.0
    %1426 = vmatpush1.xpose.msra.mxu0 0.0
    %1427 = vmatprep.subr.mxu0 0.0
    %1428 = vmatpush1.xpose.msra.mxu0 0.0
    %1429 = vmatprep.subr.mxu0 0.0
    %1430 = vmatpush1.xpose.msra.mxu0 0.0
    %1431 = vmatprep.subr.mxu0 0.0
    %1432 = vmatpush1.xpose.msra.mxu0 %v1399
    %1433 = vmatprep.subr.mxu0 0.0
    %1434 = vmatpush2.xpose.msra.mxu0 0.0
    %1435 = vmatprep.subr.mxu0 0.0
    %1436 = vmatpush2.xpose.msra.mxu0 0.0
    %1437 = vmatprep.subr.mxu0 0.0
    %1438 = vmatpush2.xpose.msra.mxu0 0.0
    %1439 = vmatprep.subr.mxu0 0.0
    %1440 = vmatpush2.xpose.msra.mxu0 0.0
    %1441 = vmatprep.subr.mxu0 0.0
    %1442 = vmatpush2.xpose.msra.mxu0 0.0
    %1443 = vmatprep.subr.mxu0 0.0
    %1444 = vmatpush2.xpose.msra.mxu0 0.0
    %1445 = vmatprep.subr.mxu0 0.0
    %1446 = vmatpush2.xpose.msra.mxu0 0.0
    %1447 = vmatprep.subr.mxu0 0.0
    %1448 = vmatpush2.xpose.msra.mxu0 0.0
    %1449 = vmatprep.subr.mxu0 0.0
    %1450 = vmatpush2.xpose.msra.mxu0 0.0
    %1451 = vmatprep.subr.mxu0 0.0
    %1452 = vmatpush2.xpose.msra.mxu0 0.0
    %1453 = vmatprep.subr.mxu0 0.0
    %1454 = vmatpush2.xpose.msra.mxu0 0.0
    %1455 = vmatprep.subr.mxu0 0.0
    %1456 = vmatpush2.xpose.msra.mxu0 0.0
    %1457 = vmatprep.subr.mxu0 0.0
    %1458 = vmatpush2.xpose.msra.mxu0 0.0
    %1459 = vmatprep.subr.mxu0 0.0
    %1460 = vmatpush2.xpose.msra.mxu0 0.0
    %1461 = vmatprep.subr.mxu0 0.0
    %1462 = vmatpush2.xpose.msra.mxu0 0.0
    %1463 = vmatprep.subr.mxu0 0.0
    %1464 = vmatpush2.xpose.msra.mxu0 0.0
    %1465 = vmatprep.mubr.f32.mxu0 0.0
    %1466 = vmatmul.mubr.f32.gmra.mxu0 %v1396
    %v1467 = vpop.f32.mrf.mxu0
    %v1468 = vadd.f32 0.0, %v1467
    %v1469 = vpop.f32.mrf.mxu0
    %1470 = vdwg.mxu0
    %v1472 = vsel %vm1014, %v940, 0
    %v1475 = vsel %vm1014, %v944, 0
    %1477 = vmatprep.subr.mxu0 0.0
    %1478 = vmatpush1.xpose.msra.mxu0 0.0
    %1479 = vmatprep.subr.mxu0 0.0
    %1480 = vmatpush1.xpose.msra.mxu0 0.0
    %1481 = vmatprep.subr.mxu0 0.0
    %1482 = vmatpush1.xpose.msra.mxu0 0.0
    %1483 = vmatprep.subr.mxu0 0.0
    %1484 = vmatpush1.xpose.msra.mxu0 0.0
    %1485 = vmatprep.subr.mxu0 0.0
    %1486 = vmatpush1.xpose.msra.mxu0 0.0
    %1487 = vmatprep.subr.mxu0 0.0
    %1488 = vmatpush1.xpose.msra.mxu0 0.0
    %1489 = vmatprep.subr.mxu0 0.0
    %1490 = vmatpush1.xpose.msra.mxu0 0.0
    %1491 = vmatprep.subr.mxu0 0.0
    %1492 = vmatpush1.xpose.msra.mxu0 0.0
    %1493 = vmatprep.subr.mxu0 0.0
    %1494 = vmatpush1.xpose.msra.mxu0 0.0
    %1495 = vmatprep.subr.mxu0 0.0
    %1496 = vmatpush1.xpose.msra.mxu0 0.0
    %1497 = vmatprep.subr.mxu0 0.0
    %1498 = vmatpush1.xpose.msra.mxu0 0.0
    %1499 = vmatprep.subr.mxu0 0.0
    %1500 = vmatpush1.xpose.msra.mxu0 0.0
    %1501 = vmatprep.subr.mxu0 0.0
    %1502 = vmatpush1.xpose.msra.mxu0 0.0
    %1503 = vmatprep.subr.mxu0 0.0
    %1504 = vmatpush1.xpose.msra.mxu0 0.0
    %1505 = vmatprep.subr.mxu0 0.0
    %1506 = vmatpush1.xpose.msra.mxu0 0.0
    %1507 = vmatprep.subr.mxu0 0.0
    %1508 = vmatpush1.xpose.msra.mxu0 %v1475
    %1509 = vmatprep.subr.mxu0 0.0
    %1510 = vmatpush2.xpose.msra.mxu0 0.0
    %1511 = vmatprep.subr.mxu0 0.0
    %1512 = vmatpush2.xpose.msra.mxu0 0.0
    %1513 = vmatprep.subr.mxu0 0.0
    %1514 = vmatpush2.xpose.msra.mxu0 0.0
    %1515 = vmatprep.subr.mxu0 0.0
    %1516 = vmatpush2.xpose.msra.mxu0 0.0
    %1517 = vmatprep.subr.mxu0 0.0
    %1518 = vmatpush2.xpose.msra.mxu0 0.0
    %1519 = vmatprep.subr.mxu0 0.0
    %1520 = vmatpush2.xpose.msra.mxu0 0.0
    %1521 = vmatprep.subr.mxu0 0.0
    %1522 = vmatpush2.xpose.msra.mxu0 0.0
    %1523 = vmatprep.subr.mxu0 0.0
    %1524 = vmatpush2.xpose.msra.mxu0 0.0
    %1525 = vmatprep.subr.mxu0 0.0
    %1526 = vmatpush2.xpose.msra.mxu0 0.0
    %1527 = vmatprep.subr.mxu0 0.0
    %1528 = vmatpush2.xpose.msra.mxu0 0.0
    %1529 = vmatprep.subr.mxu0 0.0
    %1530 = vmatpush2.xpose.msra.mxu0 0.0
    %1531 = vmatprep.subr.mxu0 0.0
    %1532 = vmatpush2.xpose.msra.mxu0 0.0
    %1533 = vmatprep.subr.mxu0 0.0
    %1534 = vmatpush2.xpose.msra.mxu0 0.0
    %1535 = vmatprep.subr.mxu0 0.0
    %1536 = vmatpush2.xpose.msra.mxu0 0.0
    %1537 = vmatprep.subr.mxu0 0.0
    %1538 = vmatpush2.xpose.msra.mxu0 0.0
    %1539 = vmatprep.subr.mxu0 0.0
    %1540 = vmatpush2.xpose.msra.mxu0 0.0
    %1541 = vmatprep.mubr.f32.mxu0 0.0
    %1542 = vmatmul.mubr.f32.gmra.mxu0 %v1472
    %v1543 = vpop.f32.mrf.mxu0
    %v1544 = vadd.f32 0.0, %v1543
    %v1545 = vpop.f32.mrf.mxu0
    %1546 = vdwg.mxu0
    %v1548 = vsel %vm1014, %v941, 0
    %v1551 = vsel %vm1014, %v945, 0
    %1553 = vmatprep.subr.mxu0 0.0
    %1554 = vmatpush1.xpose.msra.mxu0 0.0
    %1555 = vmatprep.subr.mxu0 0.0
    %1556 = vmatpush1.xpose.msra.mxu0 0.0
    %1557 = vmatprep.subr.mxu0 0.0
    %1558 = vmatpush1.xpose.msra.mxu0 0.0
    %1559 = vmatprep.subr.mxu0 0.0
    %1560 = vmatpush1.xpose.msra.mxu0 0.0
    %1561 = vmatprep.subr.mxu0 0.0
    %1562 = vmatpush1.xpose.msra.mxu0 0.0
    %1563 = vmatprep.subr.mxu0 0.0
    %1564 = vmatpush1.xpose.msra.mxu0 0.0
    %1565 = vmatprep.subr.mxu0 0.0
    %1566 = vmatpush1.xpose.msra.mxu0 0.0
    %1567 = vmatprep.subr.mxu0 0.0
    %1568 = vmatpush1.xpose.msra.mxu0 0.0
    %1569 = vmatprep.subr.mxu0 0.0
    %1570 = vmatpush1.xpose.msra.mxu0 0.0
    %1571 = vmatprep.subr.mxu0 0.0
    %1572 = vmatpush1.xpose.msra.mxu0 0.0
    %1573 = vmatprep.subr.mxu0 0.0
    %1574 = vmatpush1.xpose.msra.mxu0 0.0
    %1575 = vmatprep.subr.mxu0 0.0
    %1576 = vmatpush1.xpose.msra.mxu0 0.0
    %1577 = vmatprep.subr.mxu0 0.0
    %1578 = vmatpush1.xpose.msra.mxu0 0.0
    %1579 = vmatprep.subr.mxu0 0.0
    %1580 = vmatpush1.xpose.msra.mxu0 0.0
    %1581 = vmatprep.subr.mxu0 0.0
    %1582 = vmatpush1.xpose.msra.mxu0 0.0
    %1583 = vmatprep.subr.mxu0 0.0
    %1584 = vmatpush1.xpose.msra.mxu0 %v1551
    %1585 = vmatprep.subr.mxu0 0.0
    %1586 = vmatpush2.xpose.msra.mxu0 0.0
    %1587 = vmatprep.subr.mxu0 0.0
    %1588 = vmatpush2.xpose.msra.mxu0 0.0
    %1589 = vmatprep.subr.mxu0 0.0
    %1590 = vmatpush2.xpose.msra.mxu0 0.0
    %1591 = vmatprep.subr.mxu0 0.0
    %1592 = vmatpush2.xpose.msra.mxu0 0.0
    %1593 = vmatprep.subr.mxu0 0.0
    %1594 = vmatpush2.xpose.msra.mxu0 0.0
    %1595 = vmatprep.subr.mxu0 0.0
    %1596 = vmatpush2.xpose.msra.mxu0 0.0
    %1597 = vmatprep.subr.mxu0 0.0
    %1598 = vmatpush2.xpose.msra.mxu0 0.0
    %1599 = vmatprep.subr.mxu0 0.0
    %1600 = vmatpush2.xpose.msra.mxu0 0.0
    %1601 = vmatprep.subr.mxu0 0.0
    %1602 = vmatpush2.xpose.msra.mxu0 0.0
    %1603 = vmatprep.subr.mxu0 0.0
    %1604 = vmatpush2.xpose.msra.mxu0 0.0
    %1605 = vmatprep.subr.mxu0 0.0
    %1606 = vmatpush2.xpose.msra.mxu0 0.0
    %1607 = vmatprep.subr.mxu0 0.0
    %1608 = vmatpush2.xpose.msra.mxu0 0.0
    %1609 = vmatprep.subr.mxu0 0.0
    %1610 = vmatpush2.xpose.msra.mxu0 0.0
    %1611 = vmatprep.subr.mxu0 0.0
    %1612 = vmatpush2.xpose.msra.mxu0 0.0
    %1613 = vmatprep.subr.mxu0 0.0
    %1614 = vmatpush2.xpose.msra.mxu0 0.0
    %1615 = vmatprep.subr.mxu0 0.0
    %1616 = vmatpush2.xpose.msra.mxu0 0.0
    %1617 = vmatprep.mubr.f32.mxu0 0.0
    %1618 = vmatmul.mubr.f32.gmra.mxu0 %v1548
    %v1619 = vpop.f32.mrf.mxu0
    %v1620 = vadd.f32 0.0, %v1619
    %v1621 = vpop.f32.mrf.mxu0
    %1622 = vdwg.mxu0
    %v1623 = vsel %vm1014, %v1088, -inf
    %1624 = vmax.xlane.f32.xlu0 %v1623
    %v1625 = vpop.xlane.xlu0 %1624
    %v1626 = vsel %vm1014, %v1164, -inf
    %1627 = vmax.xlane.f32.xlu0 %v1626
    %v1628 = vpop.xlane.xlu0 %1627
    %v1629 = vsel %vm1014, %v1240, -inf
    %1630 = vmax.xlane.f32.xlu0 %v1629
    %v1631 = vpop.xlane.xlu0 %1630
    %v1632 = vsel %vm1014, %v1316, -inf
    %1633 = vmax.xlane.f32.xlu0 %v1632
    %v1634 = vpop.xlane.xlu0 %1633
    %v1635 = vsel %vm1014, %v1392, -inf
    %1636 = vmax.xlane.f32.xlu0 %v1635
    %v1637 = vpop.xlane.xlu0 %1636
    %v1638 = vsel %vm1014, %v1468, -inf
    %1639 = vmax.xlane.f32.xlu0 %v1638
    %v1640 = vpop.xlane.xlu0 %1639
    %v1641 = vsel %vm1014, %v1544, -inf
    %1642 = vmax.xlane.f32.xlu0 %v1641
    %v1643 = vpop.xlane.xlu0 %1642
    %v1644 = vsel %vm1014, %v1620, -inf
    %1645 = vmax.xlane.f32.xlu0 %v1644
    %v1646 = vpop.xlane.xlu0 %1645
    %v1647 = vsub.f32 %v1088, %v1625
    %v1648 = vsub.f32 %v1164, %v1628
    %v1649 = vsub.f32 %v1240, %v1631
    %v1650 = vsub.f32 %v1316, %v1634
    %v1651 = vsub.f32 %v1392, %v1637
    %v1652 = vsub.f32 %v1468, %v1640
    %v1653 = vsub.f32 %v1544, %v1643
    %v1654 = vsub.f32 %v1620, %v1646
    %v1655 = vmul.f32 %v1647, 1.442695
    %v1656 = vpow.pop %v1655
    %v1657 = vmul.f32 %v1648, 1.442695
    %v1658 = vpow.pop %v1657
    %v1659 = vmul.f32 %v1649, 1.442695
    %v1660 = vpow.pop %v1659
    %v1661 = vmul.f32 %v1650, 1.442695
    %v1662 = vpow.pop %v1661
    %v1663 = vmul.f32 %v1651, 1.442695
    %v1664 = vpow.pop %v1663
    %v1665 = vmul.f32 %v1652, 1.442695
    %v1666 = vpow.pop %v1665
    %v1667 = vmul.f32 %v1653, 1.442695
    %v1668 = vpow.pop %v1667
    %v1669 = vmul.f32 %v1654, 1.442695
    %v1670 = vpow.pop %v1669
    %v1671 = vsel %vm1014, %v1656, 0.0
    %1672 = vadd.xlane.f32.xlu0 %v1671
    %v1673 = vpop.xlane.xlu0 %1672
    %v1674 = vsel %vm1014, %v1658, 0.0
    %1675 = vadd.xlane.f32.xlu0 %v1674
    %v1676 = vpop.xlane.xlu0 %1675
    %v1677 = vsel %vm1014, %v1660, 0.0
    %1678 = vadd.xlane.f32.xlu0 %v1677
    %v1679 = vpop.xlane.xlu0 %1678
    %v1680 = vsel %vm1014, %v1662, 0.0
    %1681 = vadd.xlane.f32.xlu0 %v1680
    %v1682 = vpop.xlane.xlu0 %1681
    %v1683 = vsel %vm1014, %v1664, 0.0
    %1684 = vadd.xlane.f32.xlu0 %v1683
    %v1685 = vpop.xlane.xlu0 %1684
    %v1686 = vsel %vm1014, %v1666, 0.0
    %1687 = vadd.xlane.f32.xlu0 %v1686
    %v1688 = vpop.xlane.xlu0 %1687
    %v1689 = vsel %vm1014, %v1668, 0.0
    %1690 = vadd.xlane.f32.xlu0 %v1689
    %v1691 = vpop.xlane.xlu0 %1690
    %v1692 = vsel %vm1014, %v1670, 0.0
    %1693 = vadd.xlane.f32.xlu0 %v1692
    %v1694 = vpop.xlane.xlu0 %1693
    %v1695 = vrcp.pop %v1673
    %v1696 = vrcp.pop %v1676
    %v1697 = vrcp.pop %v1679
    %v1698 = vrcp.pop %v1682
    %v1699 = vrcp.pop %v1685
    %v1700 = vrcp.pop %v1688
    %v1701 = vrcp.pop %v1691
    %v1702 = vrcp.pop %v1694
    %v1703 = vmul.f32 %v1656, %v1695
    %v1704 = vmul.f32 %v1658, %v1696
    %v1705 = vmul.f32 %v1660, %v1697
    %v1706 = vmul.f32 %v1662, %v1698
    %v1707 = vmul.f32 %v1664, %v1699
    %v1708 = vmul.f32 %v1666, %v1700
    %v1709 = vmul.f32 %v1668, %v1701
    %v1710 = vmul.f32 %v1670, %v1702
    %v1712 = vsel %vm1014, %v1703, 0
    %1714 = vmatprep.subr.mxu0 0.0
    %1715 = vmatpush1.msra.mxu0 0.0
    %1716 = vmatprep.subr.mxu0 0.0
    %1717 = vmatpush1.msra.mxu0 0.0
    %1718 = vmatprep.subr.mxu0 0.0
    %1719 = vmatpush1.msra.mxu0 0.0
    %1720 = vmatprep.subr.mxu0 0.0
    %1721 = vmatpush1.msra.mxu0 0.0
    %1722 = vmatprep.subr.mxu0 0.0
    %1723 = vmatpush1.msra.mxu0 0.0
    %1724 = vmatprep.subr.mxu0 0.0
    %1725 = vmatpush1.msra.mxu0 0.0
    %1726 = vmatprep.subr.mxu0 0.0
    %1727 = vmatpush1.msra.mxu0 0.0
    %1728 = vmatprep.subr.mxu0 0.0
    %1729 = vmatpush1.msra.mxu0 0.0
    %1730 = vmatprep.subr.mxu0 0.0
    %1731 = vmatpush1.msra.mxu0 0.0
    %1732 = vmatprep.subr.mxu0 0.0
    %1733 = vmatpush1.msra.mxu0 0.0
    %1734 = vmatprep.subr.mxu0 0.0
    %1735 = vmatpush1.msra.mxu0 0.0
    %1736 = vmatprep.subr.mxu0 0.0
    %1737 = vmatpush1.msra.mxu0 0.0
    %1738 = vmatprep.subr.mxu0 0.0
    %1739 = vmatpush1.msra.mxu0 0.0
    %1740 = vmatprep.subr.mxu0 0.0
    %1741 = vmatpush1.msra.mxu0 0.0
    %1742 = vmatprep.subr.mxu0 0.0
    %1743 = vmatpush1.msra.mxu0 0.0
    %1744 = vmatprep.subr.mxu0 0.0
    %1745 = vmatpush1.msra.mxu0 %v806
    %1746 = vmatprep.subr.mxu0 0.0
    %1747 = vmatpush2.msra.mxu0 0.0
    %1748 = vmatprep.subr.mxu0 0.0
    %1749 = vmatpush2.msra.mxu0 0.0
    %1750 = vmatprep.subr.mxu0 0.0
    %1751 = vmatpush2.msra.mxu0 0.0
    %1752 = vmatprep.subr.mxu0 0.0
    %1753 = vmatpush2.msra.mxu0 0.0
    %1754 = vmatprep.subr.mxu0 0.0
    %1755 = vmatpush2.msra.mxu0 0.0
    %1756 = vmatprep.subr.mxu0 0.0
    %1757 = vmatpush2.msra.mxu0 0.0
    %1758 = vmatprep.subr.mxu0 0.0
    %1759 = vmatpush2.msra.mxu0 0.0
    %1760 = vmatprep.subr.mxu0 0.0
    %1761 = vmatpush2.msra.mxu0 0.0
    %1762 = vmatprep.subr.mxu0 0.0
    %1763 = vmatpush2.msra.mxu0 0.0
    %1764 = vmatprep.subr.mxu0 0.0
    %1765 = vmatpush2.msra.mxu0 0.0
    %1766 = vmatprep.subr.mxu0 0.0
    %1767 = vmatpush2.msra.mxu0 0.0
    %1768 = vmatprep.subr.mxu0 0.0
    %1769 = vmatpush2.msra.mxu0 0.0
    %1770 = vmatprep.subr.mxu0 0.0
    %1771 = vmatpush2.msra.mxu0 0.0
    %1772 = vmatprep.subr.mxu0 0.0
    %1773 = vmatpush2.msra.mxu0 0.0
    %1774 = vmatprep.subr.mxu0 0.0
    %1775 = vmatpush2.msra.mxu0 0.0
    %1776 = vmatprep.subr.mxu0 0.0
    %1777 = vmatpush2.msra.mxu0 0.0
    %1778 = vmatprep.mubr.f32.mxu0 0.0
    %1779 = vmatmul.mubr.f32.gmra.mxu0 %v1712
    %v1780 = vpop.f32.mrf.mxu0
    %v1781 = vadd.f32 0.0, %v1780
    %v1782 = vpop.f32.mrf.mxu0
    %1783 = vdwg.mxu0
    %v1785 = vsel %vm1014, %v1704, 0
    %1787 = vmatprep.subr.mxu0 0.0
    %1788 = vmatpush1.msra.mxu0 0.0
    %1789 = vmatprep.subr.mxu0 0.0
    %1790 = vmatpush1.msra.mxu0 0.0
    %1791 = vmatprep.subr.mxu0 0.0
    %1792 = vmatpush1.msra.mxu0 0.0
    %1793 = vmatprep.subr.mxu0 0.0
    %1794 = vmatpush1.msra.mxu0 0.0
    %1795 = vmatprep.subr.mxu0 0.0
    %1796 = vmatpush1.msra.mxu0 0.0
    %1797 = vmatprep.subr.mxu0 0.0
    %1798 = vmatpush1.msra.mxu0 0.0
    %1799 = vmatprep.subr.mxu0 0.0
    %1800 = vmatpush1.msra.mxu0 0.0
    %1801 = vmatprep.subr.mxu0 0.0
    %1802 = vmatpush1.msra.mxu0 0.0
    %1803 = vmatprep.subr.mxu0 0.0
    %1804 = vmatpush1.msra.mxu0 0.0
    %1805 = vmatprep.subr.mxu0 0.0
    %1806 = vmatpush1.msra.mxu0 0.0
    %1807 = vmatprep.subr.mxu0 0.0
    %1808 = vmatpush1.msra.mxu0 0.0
    %1809 = vmatprep.subr.mxu0 0.0
    %1810 = vmatpush1.msra.mxu0 0.0
    %1811 = vmatprep.subr.mxu0 0.0
    %1812 = vmatpush1.msra.mxu0 0.0
    %1813 = vmatprep.subr.mxu0 0.0
    %1814 = vmatpush1.msra.mxu0 0.0
    %1815 = vmatprep.subr.mxu0 0.0
    %1816 = vmatpush1.msra.mxu0 0.0
    %1817 = vmatprep.subr.mxu0 0.0
    %1818 = vmatpush1.msra.mxu0 %v807
    %1819 = vmatprep.subr.mxu0 0.0
    %1820 = vmatpush2.msra.mxu0 0.0
    %1821 = vmatprep.subr.mxu0 0.0
    %1822 = vmatpush2.msra.mxu0 0.0
    %1823 = vmatprep.subr.mxu0 0.0
    %1824 = vmatpush2.msra.mxu0 0.0
    %1825 = vmatprep.subr.mxu0 0.0
    %1826 = vmatpush2.msra.mxu0 0.0
    %1827 = vmatprep.subr.mxu0 0.0
    %1828 = vmatpush2.msra.mxu0 0.0
    %1829 = vmatprep.subr.mxu0 0.0
    %1830 = vmatpush2.msra.mxu0 0.0
    %1831 = vmatprep.subr.mxu0 0.0
    %1832 = vmatpush2.msra.mxu0 0.0
    %1833 = vmatprep.subr.mxu0 0.0
    %1834 = vmatpush2.msra.mxu0 0.0
    %1835 = vmatprep.subr.mxu0 0.0
    %1836 = vmatpush2.msra.mxu0 0.0
    %1837 = vmatprep.subr.mxu0 0.0
    %1838 = vmatpush2.msra.mxu0 0.0
    %1839 = vmatprep.subr.mxu0 0.0
    %1840 = vmatpush2.msra.mxu0 0.0
    %1841 = vmatprep.subr.mxu0 0.0
    %1842 = vmatpush2.msra.mxu0 0.0
    %1843 = vmatprep.subr.mxu0 0.0
    %1844 = vmatpush2.msra.mxu0 0.0
    %1845 = vmatprep.subr.mxu0 0.0
    %1846 = vmatpush2.msra.mxu0 0.0
    %1847 = vmatprep.subr.mxu0 0.0
    %1848 = vmatpush2.msra.mxu0 0.0
    %1849 = vmatprep.subr.mxu0 0.0
    %1850 = vmatpush2.msra.mxu0 0.0
    %1851 = vmatprep.mubr.f32.mxu0 0.0
    %1852 = vmatmul.mubr.f32.gmra.mxu0 %v1785
    %v1853 = vpop.f32.mrf.mxu0
    %v1854 = vadd.f32 0.0, %v1853
    %v1855 = vpop.f32.mrf.mxu0
    %1856 = vdwg.mxu0
    %v1858 = vsel %vm1014, %v1705, 0
    %1860 = vmatprep.subr.mxu0 0.0
    %1861 = vmatpush1.msra.mxu0 0.0
    %1862 = vmatprep.subr.mxu0 0.0
    %1863 = vmatpush1.msra.mxu0 0.0
    %1864 = vmatprep.subr.mxu0 0.0
    %1865 = vmatpush1.msra.mxu0 0.0
    %1866 = vmatprep.subr.mxu0 0.0
    %1867 = vmatpush1.msra.mxu0 0.0
    %1868 = vmatprep.subr.mxu0 0.0
    %1869 = vmatpush1.msra.mxu0 0.0
    %1870 = vmatprep.subr.mxu0 0.0
    %1871 = vmatpush1.msra.mxu0 0.0
    %1872 = vmatprep.subr.mxu0 0.0
    %1873 = vmatpush1.msra.mxu0 0.0
    %1874 = vmatprep.subr.mxu0 0.0
    %1875 = vmatpush1.msra.mxu0 0.0
    %1876 = vmatprep.subr.mxu0 0.0
    %1877 = vmatpush1.msra.mxu0 0.0
    %1878 = vmatprep.subr.mxu0 0.0
    %1879 = vmatpush1.msra.mxu0 0.0
    %1880 = vmatprep.subr.mxu0 0.0
    %1881 = vmatpush1.msra.mxu0 0.0
    %1882 = vmatprep.subr.mxu0 0.0
    %1883 = vmatpush1.msra.mxu0 0.0
    %1884 = vmatprep.subr.mxu0 0.0
    %1885 = vmatpush1.msra.mxu0 0.0
    %1886 = vmatprep.subr.mxu0 0.0
    %1887 = vmatpush1.msra.mxu0 0.0
    %1888 = vmatprep.subr.mxu0 0.0
    %1889 = vmatpush1.msra.mxu0 0.0
    %1890 = vmatprep.subr.mxu0 0.0
    %1891 = vmatpush1.msra.mxu0 %v808
    %1892 = vmatprep.subr.mxu0 0.0
    %1893 = vmatpush2.msra.mxu0 0.0
    %1894 = vmatprep.subr.mxu0 0.0
    %1895 = vmatpush2.msra.mxu0 0.0
    %1896 = vmatprep.subr.mxu0 0.0
    %1897 = vmatpush2.msra.mxu0 0.0
    %1898 = vmatprep.subr.mxu0 0.0
    %1899 = vmatpush2.msra.mxu0 0.0
    %1900 = vmatprep.subr.mxu0 0.0
    %1901 = vmatpush2.msra.mxu0 0.0
    %1902 = vmatprep.subr.mxu0 0.0
    %1903 = vmatpush2.msra.mxu0 0.0
    %1904 = vmatprep.subr.mxu0 0.0
    %1905 = vmatpush2.msra.mxu0 0.0
    %1906 = vmatprep.subr.mxu0 0.0
    %1907 = vmatpush2.msra.mxu0 0.0
    %1908 = vmatprep.subr.mxu0 0.0
    %1909 = vmatpush2.msra.mxu0 0.0
    %1910 = vmatprep.subr.mxu0 0.0
    %1911 = vmatpush2.msra.mxu0 0.0
    %1912 = vmatprep.subr.mxu0 0.0
    %1913 = vmatpush2.msra.mxu0 0.0
    %1914 = vmatprep.subr.mxu0 0.0
    %1915 = vmatpush2.msra.mxu0 0.0
    %1916 = vmatprep.subr.mxu0 0.0
    %1917 = vmatpush2.msra.mxu0 0.0
    %1918 = vmatprep.subr.mxu0 0.0
    %1919 = vmatpush2.msra.mxu0 0.0
    %1920 = vmatprep.subr.mxu0 0.0
    %1921 = vmatpush2.msra.mxu0 0.0
    %1922 = vmatprep.subr.mxu0 0.0
    %1923 = vmatpush2.msra.mxu0 0.0
    %1924 = vmatprep.mubr.f32.mxu0 0.0
    %1925 = vmatmul.mubr.f32.gmra.mxu0 %v1858
    %v1926 = vpop.f32.mrf.mxu0
    %v1927 = vadd.f32 0.0, %v1926
    %v1928 = vpop.f32.mrf.mxu0
    %1929 = vdwg.mxu0
    %v1931 = vsel %vm1014, %v1706, 0
    %1933 = vmatprep.subr.mxu0 0.0
    %1934 = vmatpush1.msra.mxu0 0.0
    %1935 = vmatprep.subr.mxu0 0.0
    %1936 = vmatpush1.msra.mxu0 0.0
    %1937 = vmatprep.subr.mxu0 0.0
    %1938 = vmatpush1.msra.mxu0 0.0
    %1939 = vmatprep.subr.mxu0 0.0
    %1940 = vmatpush1.msra.mxu0 0.0
    %1941 = vmatprep.subr.mxu0 0.0
    %1942 = vmatpush1.msra.mxu0 0.0
    %1943 = vmatprep.subr.mxu0 0.0
    %1944 = vmatpush1.msra.mxu0 0.0
    %1945 = vmatprep.subr.mxu0 0.0
    %1946 = vmatpush1.msra.mxu0 0.0
    %1947 = vmatprep.subr.mxu0 0.0
    %1948 = vmatpush1.msra.mxu0 0.0
    %1949 = vmatprep.subr.mxu0 0.0
    %1950 = vmatpush1.msra.mxu0 0.0
    %1951 = vmatprep.subr.mxu0 0.0
    %1952 = vmatpush1.msra.mxu0 0.0
    %1953 = vmatprep.subr.mxu0 0.0
    %1954 = vmatpush1.msra.mxu0 0.0
    %1955 = vmatprep.subr.mxu0 0.0
    %1956 = vmatpush1.msra.mxu0 0.0
    %1957 = vmatprep.subr.mxu0 0.0
    %1958 = vmatpush1.msra.mxu0 0.0
    %1959 = vmatprep.subr.mxu0 0.0
    %1960 = vmatpush1.msra.mxu0 0.0
    %1961 = vmatprep.subr.mxu0 0.0
    %1962 = vmatpush1.msra.mxu0 0.0
    %1963 = vmatprep.subr.mxu0 0.0
    %1964 = vmatpush1.msra.mxu0 %v809
    %1965 = vmatprep.subr.mxu0 0.0
    %1966 = vmatpush2.msra.mxu0 0.0
    %1967 = vmatprep.subr.mxu0 0.0
    %1968 = vmatpush2.msra.mxu0 0.0
    %1969 = vmatprep.subr.mxu0 0.0
    %1970 = vmatpush2.msra.mxu0 0.0
    %1971 = vmatprep.subr.mxu0 0.0
    %1972 = vmatpush2.msra.mxu0 0.0
    %1973 = vmatprep.subr.mxu0 0.0
    %1974 = vmatpush2.msra.mxu0 0.0
    %1975 = vmatprep.subr.mxu0 0.0
    %1976 = vmatpush2.msra.mxu0 0.0
    %1977 = vmatprep.subr.mxu0 0.0
    %1978 = vmatpush2.msra.mxu0 0.0
    %1979 = vmatprep.subr.mxu0 0.0
    %1980 = vmatpush2.msra.mxu0 0.0
    %1981 = vmatprep.subr.mxu0 0.0
    %1982 = vmatpush2.msra.mxu0 0.0
    %1983 = vmatprep.subr.mxu0 0.0
    %1984 = vmatpush2.msra.mxu0 0.0
    %1985 = vmatprep.subr.mxu0 0.0
    %1986 = vmatpush2.msra.mxu0 0.0
    %1987 = vmatprep.subr.mxu0 0.0
    %1988 = vmatpush2.msra.mxu0 0.0
    %1989 = vmatprep.subr.mxu0 0.0
    %1990 = vmatpush2.msra.mxu0 0.0
    %1991 = vmatprep.subr.mxu0 0.0
    %1992 = vmatpush2.msra.mxu0 0.0
    %1993 = vmatprep.subr.mxu0 0.0
    %1994 = vmatpush2.msra.mxu0 0.0
    %1995 = vmatprep.subr.mxu0 0.0
    %1996 = vmatpush2.msra.mxu0 0.0
    %1997 = vmatprep.mubr.f32.mxu0 0.0
    %1998 = vmatmul.mubr.f32.gmra.mxu0 %v1931
    %v1999 = vpop.f32.mrf.mxu0
    %v2000 = vadd.f32 0.0, %v1999
    %v2001 = vpop.f32.mrf.mxu0
    %2002 = vdwg.mxu0
    %v2004 = vsel %vm1014, %v1707, 0
    %2006 = vmatprep.subr.mxu0 0.0
    %2007 = vmatpush1.msra.mxu0 0.0
    %2008 = vmatprep.subr.mxu0 0.0
    %2009 = vmatpush1.msra.mxu0 0.0
    %2010 = vmatprep.subr.mxu0 0.0
    %2011 = vmatpush1.msra.mxu0 0.0
    %2012 = vmatprep.subr.mxu0 0.0
    %2013 = vmatpush1.msra.mxu0 0.0
    %2014 = vmatprep.subr.mxu0 0.0
    %2015 = vmatpush1.msra.mxu0 0.0
    %2016 = vmatprep.subr.mxu0 0.0
    %2017 = vmatpush1.msra.mxu0 0.0
    %2018 = vmatprep.subr.mxu0 0.0
    %2019 = vmatpush1.msra.mxu0 0.0
    %2020 = vmatprep.subr.mxu0 0.0
    %2021 = vmatpush1.msra.mxu0 0.0
    %2022 = vmatprep.subr.mxu0 0.0
    %2023 = vmatpush1.msra.mxu0 0.0
    %2024 = vmatprep.subr.mxu0 0.0
    %2025 = vmatpush1.msra.mxu0 0.0
    %2026 = vmatprep.subr.mxu0 0.0
    %2027 = vmatpush1.msra.mxu0 0.0
    %2028 = vmatprep.subr.mxu0 0.0
    %2029 = vmatpush1.msra.mxu0 0.0
    %2030 = vmatprep.subr.mxu0 0.0
    %2031 = vmatpush1.msra.mxu0 0.0
    %2032 = vmatprep.subr.mxu0 0.0
    %2033 = vmatpush1.msra.mxu0 0.0
    %2034 = vmatprep.subr.mxu0 0.0
    %2035 = vmatpush1.msra.mxu0 0.0
    %2036 = vmatprep.subr.mxu0 0.0
    %2037 = vmatpush1.msra.mxu0 %v1010
    %2038 = vmatprep.subr.mxu0 0.0
    %2039 = vmatpush2.msra.mxu0 0.0
    %2040 = vmatprep.subr.mxu0 0.0
    %2041 = vmatpush2.msra.mxu0 0.0
    %2042 = vmatprep.subr.mxu0 0.0
    %2043 = vmatpush2.msra.mxu0 0.0
    %2044 = vmatprep.subr.mxu0 0.0
    %2045 = vmatpush2.msra.mxu0 0.0
    %2046 = vmatprep.subr.mxu0 0.0
    %2047 = vmatpush2.msra.mxu0 0.0
    %2048 = vmatprep.subr.mxu0 0.0
    %2049 = vmatpush2.msra.mxu0 0.0
    %2050 = vmatprep.subr.mxu0 0.0
    %2051 = vmatpush2.msra.mxu0 0.0
    %2052 = vmatprep.subr.mxu0 0.0
    %2053 = vmatpush2.msra.mxu0 0.0
    %2054 = vmatprep.subr.mxu0 0.0
    %2055 = vmatpush2.msra.mxu0 0.0
    %2056 = vmatprep.subr.mxu0 0.0
    %2057 = vmatpush2.msra.mxu0 0.0
    %2058 = vmatprep.subr.mxu0 0.0
    %2059 = vmatpush2.msra.mxu0 0.0
    %2060 = vmatprep.subr.mxu0 0.0
    %2061 = vmatpush2.msra.mxu0 0.0
    %2062 = vmatprep.subr.mxu0 0.0
    %2063 = vmatpush2.msra.mxu0 0.0
    %2064 = vmatprep.subr.mxu0 0.0
    %2065 = vmatpush2.msra.mxu0 0.0
    %2066 = vmatprep.subr.mxu0 0.0
    %2067 = vmatpush2.msra.mxu0 0.0
    %2068 = vmatprep.subr.mxu0 0.0
    %2069 = vmatpush2.msra.mxu0 0.0
    %2070 = vmatprep.mubr.f32.mxu0 0.0
    %2071 = vmatmul.mubr.f32.gmra.mxu0 %v2004
    %v2072 = vpop.f32.mrf.mxu0
    %v2073 = vadd.f32 0.0, %v2072
    %v2074 = vpop.f32.mrf.mxu0
    %2075 = vdwg.mxu0
    %v2077 = vsel %vm1014, %v1708, 0
    %2079 = vmatprep.subr.mxu0 0.0
    %2080 = vmatpush1.msra.mxu0 0.0
    %2081 = vmatprep.subr.mxu0 0.0
    %2082 = vmatpush1.msra.mxu0 0.0
    %2083 = vmatprep.subr.mxu0 0.0
    %2084 = vmatpush1.msra.mxu0 0.0
    %2085 = vmatprep.subr.mxu0 0.0
    %2086 = vmatpush1.msra.mxu0 0.0
    %2087 = vmatprep.subr.mxu0 0.0
    %2088 = vmatpush1.msra.mxu0 0.0
    %2089 = vmatprep.subr.mxu0 0.0
    %2090 = vmatpush1.msra.mxu0 0.0
    %2091 = vmatprep.subr.mxu0 0.0
    %2092 = vmatpush1.msra.mxu0 0.0
    %2093 = vmatprep.subr.mxu0 0.0
    %2094 = vmatpush1.msra.mxu0 0.0
    %2095 = vmatprep.subr.mxu0 0.0
    %2096 = vmatpush1.msra.mxu0 0.0
    %2097 = vmatprep.subr.mxu0 0.0
    %2098 = vmatpush1.msra.mxu0 0.0
    %2099 = vmatprep.subr.mxu0 0.0
    %2100 = vmatpush1.msra.mxu0 0.0
    %2101 = vmatprep.subr.mxu0 0.0
    %2102 = vmatpush1.msra.mxu0 0.0
    %2103 = vmatprep.subr.mxu0 0.0
    %2104 = vmatpush1.msra.mxu0 0.0
    %2105 = vmatprep.subr.mxu0 0.0
    %2106 = vmatpush1.msra.mxu0 0.0
    %2107 = vmatprep.subr.mxu0 0.0
    %2108 = vmatpush1.msra.mxu0 0.0
    %2109 = vmatprep.subr.mxu0 0.0
    %2110 = vmatpush1.msra.mxu0 %v1011
    %2111 = vmatprep.subr.mxu0 0.0
    %2112 = vmatpush2.msra.mxu0 0.0
    %2113 = vmatprep.subr.mxu0 0.0
    %2114 = vmatpush2.msra.mxu0 0.0
    %2115 = vmatprep.subr.mxu0 0.0
    %2116 = vmatpush2.msra.mxu0 0.0
    %2117 = vmatprep.subr.mxu0 0.0
    %2118 = vmatpush2.msra.mxu0 0.0
    %2119 = vmatprep.subr.mxu0 0.0
    %2120 = vmatpush2.msra.mxu0 0.0
    %2121 = vmatprep.subr.mxu0 0.0
    %2122 = vmatpush2.msra.mxu0 0.0
    %2123 = vmatprep.subr.mxu0 0.0
    %2124 = vmatpush2.msra.mxu0 0.0
    %2125 = vmatprep.subr.mxu0 0.0
    %2126 = vmatpush2.msra.mxu0 0.0
    %2127 = vmatprep.subr.mxu0 0.0
    %2128 = vmatpush2.msra.mxu0 0.0
    %2129 = vmatprep.subr.mxu0 0.0
    %2130 = vmatpush2.msra.mxu0 0.0
    %2131 = vmatprep.subr.mxu0 0.0
    %2132 = vmatpush2.msra.mxu0 0.0
    %2133 = vmatprep.subr.mxu0 0.0
    %2134 = vmatpush2.msra.mxu0 0.0
    %2135 = vmatprep.subr.mxu0 0.0
    %2136 = vmatpush2.msra.mxu0 0.0
    %2137 = vmatprep.subr.mxu0 0.0
    %2138 = vmatpush2.msra.mxu0 0.0
    %2139 = vmatprep.subr.mxu0 0.0
    %2140 = vmatpush2.msra.mxu0 0.0
    %2141 = vmatprep.subr.mxu0 0.0
    %2142 = vmatpush2.msra.mxu0 0.0
    %2143 = vmatprep.mubr.f32.mxu0 0.0
    %2144 = vmatmul.mubr.f32.gmra.mxu0 %v2077
    %v2145 = vpop.f32.mrf.mxu0
    %v2146 = vadd.f32 0.0, %v2145
    %v2147 = vpop.f32.mrf.mxu0
    %2148 = vdwg.mxu0
    %v2150 = vsel %vm1014, %v1709, 0
    %2152 = vmatprep.subr.mxu0 0.0
    %2153 = vmatpush1.msra.mxu0 0.0
    %2154 = vmatprep.subr.mxu0 0.0
    %2155 = vmatpush1.msra.mxu0 0.0
    %2156 = vmatprep.subr.mxu0 0.0
    %2157 = vmatpush1.msra.mxu0 0.0
    %2158 = vmatprep.subr.mxu0 0.0
    %2159 = vmatpush1.msra.mxu0 0.0
    %2160 = vmatprep.subr.mxu0 0.0
    %2161 = vmatpush1.msra.mxu0 0.0
    %2162 = vmatprep.subr.mxu0 0.0
    %2163 = vmatpush1.msra.mxu0 0.0
    %2164 = vmatprep.subr.mxu0 0.0
    %2165 = vmatpush1.msra.mxu0 0.0
    %2166 = vmatprep.subr.mxu0 0.0
    %2167 = vmatpush1.msra.mxu0 0.0
    %2168 = vmatprep.subr.mxu0 0.0
    %2169 = vmatpush1.msra.mxu0 0.0
    %2170 = vmatprep.subr.mxu0 0.0
    %2171 = vmatpush1.msra.mxu0 0.0
    %2172 = vmatprep.subr.mxu0 0.0
    %2173 = vmatpush1.msra.mxu0 0.0
    %2174 = vmatprep.subr.mxu0 0.0
    %2175 = vmatpush1.msra.mxu0 0.0
    %2176 = vmatprep.subr.mxu0 0.0
    %2177 = vmatpush1.msra.mxu0 0.0
    %2178 = vmatprep.subr.mxu0 0.0
    %2179 = vmatpush1.msra.mxu0 0.0
    %2180 = vmatprep.subr.mxu0 0.0
    %2181 = vmatpush1.msra.mxu0 0.0
    %2182 = vmatprep.subr.mxu0 0.0
    %2183 = vmatpush1.msra.mxu0 %v1012
    %2184 = vmatprep.subr.mxu0 0.0
    %2185 = vmatpush2.msra.mxu0 0.0
    %2186 = vmatprep.subr.mxu0 0.0
    %2187 = vmatpush2.msra.mxu0 0.0
    %2188 = vmatprep.subr.mxu0 0.0
    %2189 = vmatpush2.msra.mxu0 0.0
    %2190 = vmatprep.subr.mxu0 0.0
    %2191 = vmatpush2.msra.mxu0 0.0
    %2192 = vmatprep.subr.mxu0 0.0
    %2193 = vmatpush2.msra.mxu0 0.0
    %2194 = vmatprep.subr.mxu0 0.0
    %2195 = vmatpush2.msra.mxu0 0.0
    %2196 = vmatprep.subr.mxu0 0.0
    %2197 = vmatpush2.msra.mxu0 0.0
    %2198 = vmatprep.subr.mxu0 0.0
    %2199 = vmatpush2.msra.mxu0 0.0
    %2200 = vmatprep.subr.mxu0 0.0
    %2201 = vmatpush2.msra.mxu0 0.0
    %2202 = vmatprep.subr.mxu0 0.0
    %2203 = vmatpush2.msra.mxu0 0.0
    %2204 = vmatprep.subr.mxu0 0.0
    %2205 = vmatpush2.msra.mxu0 0.0
    %2206 = vmatprep.subr.mxu0 0.0
    %2207 = vmatpush2.msra.mxu0 0.0
    %2208 = vmatprep.subr.mxu0 0.0
    %2209 = vmatpush2.msra.mxu0 0.0
    %2210 = vmatprep.subr.mxu0 0.0
    %2211 = vmatpush2.msra.mxu0 0.0
    %2212 = vmatprep.subr.mxu0 0.0
    %2213 = vmatpush2.msra.mxu0 0.0
    %2214 = vmatprep.subr.mxu0 0.0
    %2215 = vmatpush2.msra.mxu0 0.0
    %2216 = vmatprep.mubr.f32.mxu0 0.0
    %2217 = vmatmul.mubr.f32.gmra.mxu0 %v2150
    %v2218 = vpop.f32.mrf.mxu0
    %v2219 = vadd.f32 0.0, %v2218
    %v2220 = vpop.f32.mrf.mxu0
    %2221 = vdwg.mxu0
    %v2223 = vsel %vm1014, %v1710, 0
    %2225 = vmatprep.subr.mxu0 0.0
    %2226 = vmatpush1.msra.mxu0 0.0
    %2227 = vmatprep.subr.mxu0 0.0
    %2228 = vmatpush1.msra.mxu0 0.0
    %2229 = vmatprep.subr.mxu0 0.0
    %2230 = vmatpush1.msra.mxu0 0.0
    %2231 = vmatprep.subr.mxu0 0.0
    %2232 = vmatpush1.msra.mxu0 0.0
    %2233 = vmatprep.subr.mxu0 0.0
    %2234 = vmatpush1.msra.mxu0 0.0
    %2235 = vmatprep.subr.mxu0 0.0
    %2236 = vmatpush1.msra.mxu0 0.0
    %2237 = vmatprep.subr.mxu0 0.0
    %2238 = vmatpush1.msra.mxu0 0.0
    %2239 = vmatprep.subr.mxu0 0.0
    %2240 = vmatpush1.msra.mxu0 0.0
    %2241 = vmatprep.subr.mxu0 0.0
    %2242 = vmatpush1.msra.mxu0 0.0
    %2243 = vmatprep.subr.mxu0 0.0
    %2244 = vmatpush1.msra.mxu0 0.0
    %2245 = vmatprep.subr.mxu0 0.0
    %2246 = vmatpush1.msra.mxu0 0.0
    %2247 = vmatprep.subr.mxu0 0.0
    %2248 = vmatpush1.msra.mxu0 0.0
    %2249 = vmatprep.subr.mxu0 0.0
    %2250 = vmatpush1.msra.mxu0 0.0
    %2251 = vmatprep.subr.mxu0 0.0
    %2252 = vmatpush1.msra.mxu0 0.0
    %2253 = vmatprep.subr.mxu0 0.0
    %2254 = vmatpush1.msra.mxu0 0.0
    %2255 = vmatprep.subr.mxu0 0.0
    %2256 = vmatpush1.msra.mxu0 %v1013
    %2257 = vmatprep.subr.mxu0 0.0
    %2258 = vmatpush2.msra.mxu0 0.0
    %2259 = vmatprep.subr.mxu0 0.0
    %2260 = vmatpush2.msra.mxu0 0.0
    %2261 = vmatprep.subr.mxu0 0.0
    %2262 = vmatpush2.msra.mxu0 0.0
    %2263 = vmatprep.subr.mxu0 0.0
    %2264 = vmatpush2.msra.mxu0 0.0
    %2265 = vmatprep.subr.mxu0 0.0
    %2266 = vmatpush2.msra.mxu0 0.0
    %2267 = vmatprep.subr.mxu0 0.0
    %2268 = vmatpush2.msra.mxu0 0.0
    %2269 = vmatprep.subr.mxu0 0.0
    %2270 = vmatpush2.msra.mxu0 0.0
    %2271 = vmatprep.subr.mxu0 0.0
    %2272 = vmatpush2.msra.mxu0 0.0
    %2273 = vmatprep.subr.mxu0 0.0
    %2274 = vmatpush2.msra.mxu0 0.0
    %2275 = vmatprep.subr.mxu0 0.0
    %2276 = vmatpush2.msra.mxu0 0.0
    %2277 = vmatprep.subr.mxu0 0.0
    %2278 = vmatpush2.msra.mxu0 0.0
    %2279 = vmatprep.subr.mxu0 0.0
    %2280 = vmatpush2.msra.mxu0 0.0
    %2281 = vmatprep.subr.mxu0 0.0
    %2282 = vmatpush2.msra.mxu0 0.0
    %2283 = vmatprep.subr.mxu0 0.0
    %2284 = vmatpush2.msra.mxu0 0.0
    %2285 = vmatprep.subr.mxu0 0.0
    %2286 = vmatpush2.msra.mxu0 0.0
    %2287 = vmatprep.subr.mxu0 0.0
    %2288 = vmatpush2.msra.mxu0 0.0
    %2289 = vmatprep.mubr.f32.mxu0 0.0
    %2290 = vmatmul.mubr.f32.gmra.mxu0 %v2223
    %v2291 = vpop.f32.mrf.mxu0
    %v2292 = vadd.f32 0.0, %v2291
    %v2293 = vpop.f32.mrf.mxu0
    %2294 = vdwg.mxu0
    %v2295 = vcombine.low %v1781, %v1927
    %v2296 = vcombine.high %v1781, %v1927
    %v2298 = vunpack.c.l.s4 1983009808
    %v2299 = vunpack.c.0.s8 %v2298
    %v2300 = vlaneseq
    %v2301 = vshrl.u32 %v2300, 7
    %v2302 = vsub.s32 %v2299, %v2301
    %v2303 = vrot.slane %v2295, %v2302
    %v2305 = vunpack.c.l.s4 1983009808
    %v2306 = vunpack.c.0.s8 %v2305
    %v2307 = vlaneseq
    %v2308 = vshrl.u32 %v2307, 7
    %v2309 = vsub.s32 %v2306, %v2308
    %v2310 = vrot.slane %v2296, %v2309
    %v2311 = vcombine.low %v1854, %v2000
    %v2312 = vcombine.high %v1854, %v2000
    %v2314 = vunpack.c.l.s4 1983009808
    %v2315 = vunpack.c.0.s8 %v2314
    %v2316 = vlaneseq
    %v2317 = vshrl.u32 %v2316, 7
    %v2318 = vsub.s32 %v2315, %v2317
    %v2319 = vrot.slane %v2311, %v2318
    %v2321 = vunpack.c.l.s4 1983009808
    %v2322 = vunpack.c.0.s8 %v2321
    %v2323 = vlaneseq
    %v2324 = vshrl.u32 %v2323, 7
    %v2325 = vsub.s32 %v2322, %v2324
    %v2326 = vrot.slane %v2312, %v2325
    %v2327 = vcombine.low %v2303, %v2319
    %v2328 = vcombine.high %v2303, %v2319
    %v2330 = vunpack.c.l.s4 1934713408
    %v2331 = vunpack.c.0.s8 %v2330
    %v2332 = vlaneseq
    %v2333 = vshrl.u32 %v2332, 7
    %v2334 = vsub.s32 %v2331, %v2333
    %v2335 = vrot.slane %v2327, %v2334
    %v2337 = vunpack.c.l.s4 1934713408
    %v2338 = vunpack.c.0.s8 %v2337
    %v2339 = vlaneseq
    %v2340 = vshrl.u32 %v2339, 7
    %v2341 = vsub.s32 %v2338, %v2340
    %v2342 = vrot.slane %v2328, %v2341
    %v2343 = vcombine.low %v2310, %v2326
    %v2344 = vcombine.high %v2310, %v2326
    %v2346 = vunpack.c.l.s4 1934713408
    %v2347 = vunpack.c.0.s8 %v2346
    %v2348 = vlaneseq
    %v2349 = vshrl.u32 %v2348, 7
    %v2350 = vsub.s32 %v2347, %v2349
    %v2351 = vrot.slane %v2343, %v2350
    %v2353 = vunpack.c.l.s4 1934713408
    %v2354 = vunpack.c.0.s8 %v2353
    %v2355 = vlaneseq
    %v2356 = vshrl.u32 %v2355, 7
    %v2357 = vsub.s32 %v2354, %v2356
    %v2358 = vrot.slane %v2344, %v2357
    %v2359 = vcombine.high %v2335, 0.0
    %v2360 = vcombine.high %v2342, 0.0
    %v2361 = vcombine.high %v2351, 0.0
    %v2362 = vcombine.high %v2358, 0.0
    %v2363 = vcombine.low %v2073, %v2219
    %v2364 = vcombine.high %v2073, %v2219
    %v2366 = vunpack.c.l.s4 1983009808
    %v2367 = vunpack.c.0.s8 %v2366
    %v2368 = vlaneseq
    %v2369 = vshrl.u32 %v2368, 7
    %v2370 = vsub.s32 %v2367, %v2369
    %v2371 = vrot.slane %v2363, %v2370
    %v2373 = vunpack.c.l.s4 1983009808
    %v2374 = vunpack.c.0.s8 %v2373
    %v2375 = vlaneseq
    %v2376 = vshrl.u32 %v2375, 7
    %v2377 = vsub.s32 %v2374, %v2376
    %v2378 = vrot.slane %v2364, %v2377
    %v2379 = vcombine.low %v2146, %v2292
    %v2380 = vcombine.high %v2146, %v2292
    %v2382 = vunpack.c.l.s4 1983009808
    %v2383 = vunpack.c.0.s8 %v2382
    %v2384 = vlaneseq
    %v2385 = vshrl.u32 %v2384, 7
    %v2386 = vsub.s32 %v2383, %v2385
    %v2387 = vrot.slane %v2379, %v2386
    %v2389 = vunpack.c.l.s4 1983009808
    %v2390 = vunpack.c.0.s8 %v2389
    %v2391 = vlaneseq
    %v2392 = vshrl.u32 %v2391, 7
    %v2393 = vsub.s32 %v2390, %v2392
    %v2394 = vrot.slane %v2380, %v2393
    %v2395 = vcombine.low %v2371, %v2387
    %v2396 = vcombine.high %v2371, %v2387
    %v2398 = vunpack.c.l.s4 1934713408
    %v2399 = vunpack.c.0.s8 %v2398
    %v2400 = vlaneseq
    %v2401 = vshrl.u32 %v2400, 7
    %v2402 = vsub.s32 %v2399, %v2401
    %v2403 = vrot.slane %v2395, %v2402
    %v2405 = vunpack.c.l.s4 1934713408
    %v2406 = vunpack.c.0.s8 %v2405
    %v2407 = vlaneseq
    %v2408 = vshrl.u32 %v2407, 7
    %v2409 = vsub.s32 %v2406, %v2408
    %v2410 = vrot.slane %v2396, %v2409
    %v2411 = vcombine.low %v2378, %v2394
    %v2412 = vcombine.high %v2378, %v2394
    %v2414 = vunpack.c.l.s4 1934713408
    %v2415 = vunpack.c.0.s8 %v2414
    %v2416 = vlaneseq
    %v2417 = vshrl.u32 %v2416, 7
    %v2418 = vsub.s32 %v2415, %v2417
    %v2419 = vrot.slane %v2411, %v2418
    %v2421 = vunpack.c.l.s4 1934713408
    %v2422 = vunpack.c.0.s8 %v2421
    %v2423 = vlaneseq
    %v2424 = vshrl.u32 %v2423, 7
    %v2425 = vsub.s32 %v2422, %v2424
    %v2426 = vrot.slane %v2412, %v2425
    %v2427 = vcombine.high %v2403, 0.0
    %v2428 = vcombine.high %v2410, 0.0
    %v2429 = vcombine.high %v2419, 0.0
    %v2430 = vcombine.high %v2426, 0.0
    %v2431 = vcombine.low %v2335, %v2342
    %v2433 = vunpack.c.l.s4 1983009808
    %v2434 = vunpack.c.0.s8 %v2433
    %v2435 = vlaneseq
    %v2436 = vshrl.u32 %v2435, 7
    %v2437 = vsub.s32 %v2434, %v2436
    %v2438 = vrot.slane %v2431, %v2437
    %v2439 = vcombine.low %v2359, %v2360
    %v2441 = vunpack.c.l.s4 1983009808
    %v2442 = vunpack.c.0.s8 %v2441
    %v2443 = vlaneseq
    %v2444 = vshrl.u32 %v2443, 7
    %v2445 = vsub.s32 %v2442, %v2444
    %v2446 = vrot.slane %v2439, %v2445
    %v2447 = vcombine.low %v2351, %v2358
    %v2449 = vunpack.c.l.s4 1983009808
    %v2450 = vunpack.c.0.s8 %v2449
    %v2451 = vlaneseq
    %v2452 = vshrl.u32 %v2451, 7
    %v2453 = vsub.s32 %v2450, %v2452
    %v2454 = vrot.slane %v2447, %v2453
    %v2455 = vcombine.low %v2361, %v2362
    %v2457 = vunpack.c.l.s4 1983009808
    %v2458 = vunpack.c.0.s8 %v2457
    %v2459 = vlaneseq
    %v2460 = vshrl.u32 %v2459, 7
    %v2461 = vsub.s32 %v2458, %v2460
    %v2462 = vrot.slane %v2455, %v2461
    %v2463 = vcombine.low %v2438, %v2446
    %v2464 = vcombine.high %v2438, %v2446
    %v2466 = vunpack.c.l.s4 1934713408
    %v2467 = vunpack.c.0.s8 %v2466
    %v2468 = vlaneseq
    %v2469 = vshrl.u32 %v2468, 7
    %v2470 = vsub.s32 %v2467, %v2469
    %v2471 = vrot.slane %v2463, %v2470
    %v2473 = vunpack.c.l.s4 1934713408
    %v2474 = vunpack.c.0.s8 %v2473
    %v2475 = vlaneseq
    %v2476 = vshrl.u32 %v2475, 7
    %v2477 = vsub.s32 %v2474, %v2476
    %v2478 = vrot.slane %v2464, %v2477
    %v2479 = vcombine.low %v2454, %v2462
    %v2480 = vcombine.high %v2454, %v2462
    %v2482 = vunpack.c.l.s4 1934713408
    %v2483 = vunpack.c.0.s8 %v2482
    %v2484 = vlaneseq
    %v2485 = vshrl.u32 %v2484, 7
    %v2486 = vsub.s32 %v2483, %v2485
    %v2487 = vrot.slane %v2479, %v2486
    %v2489 = vunpack.c.l.s4 1934713408
    %v2490 = vunpack.c.0.s8 %v2489
    %v2491 = vlaneseq
    %v2492 = vshrl.u32 %v2491, 7
    %v2493 = vsub.s32 %v2490, %v2492
    %v2494 = vrot.slane %v2480, %v2493
    %v2495 = vcombine.low %v2471, %v2487
    %v2496 = vcombine.high %v2471, %v2487
    %v2497 = vcombine.low %v2478, %v2494
    %v2498 = vcombine.high %v2478, %v2494
    %v2499 = vcombine.low %v2403, %v2410
    %v2501 = vunpack.c.l.s4 1983009808
    %v2502 = vunpack.c.0.s8 %v2501
    %v2503 = vlaneseq
    %v2504 = vshrl.u32 %v2503, 7
    %v2505 = vsub.s32 %v2502, %v2504
    %v2506 = vrot.slane %v2499, %v2505
    %v2507 = vcombine.low %v2427, %v2428
    %v2509 = vunpack.c.l.s4 1983009808
    %v2510 = vunpack.c.0.s8 %v2509
    %v2511 = vlaneseq
    %v2512 = vshrl.u32 %v2511, 7
    %v2513 = vsub.s32 %v2510, %v2512
    %v2514 = vrot.slane %v2507, %v2513
    %v2515 = vcombine.low %v2419, %v2426
    %v2517 = vunpack.c.l.s4 1983009808
    %v2518 = vunpack.c.0.s8 %v2517
    %v2519 = vlaneseq
    %v2520 = vshrl.u32 %v2519, 7
    %v2521 = vsub.s32 %v2518, %v2520
    %v2522 = vrot.slane %v2515, %v2521
    %v2523 = vcombine.low %v2429, %v2430
    %v2525 = vunpack.c.l.s4 1983009808
    %v2526 = vunpack.c.0.s8 %v2525
    %v2527 = vlaneseq
    %v2528 = vshrl.u32 %v2527, 7
    %v2529 = vsub.s32 %v2526, %v2528
    %v2530 = vrot.slane %v2523, %v2529
    %v2531 = vcombine.low %v2506, %v2514
    %v2532 = vcombine.high %v2506, %v2514
    %v2534 = vunpack.c.l.s4 1934713408
    %v2535 = vunpack.c.0.s8 %v2534
    %v2536 = vlaneseq
    %v2537 = vshrl.u32 %v2536, 7
    %v2538 = vsub.s32 %v2535, %v2537
    %v2539 = vrot.slane %v2531, %v2538
    %v2541 = vunpack.c.l.s4 1934713408
    %v2542 = vunpack.c.0.s8 %v2541
    %v2543 = vlaneseq
    %v2544 = vshrl.u32 %v2543, 7
    %v2545 = vsub.s32 %v2542, %v2544
    %v2546 = vrot.slane %v2532, %v2545
    %v2547 = vcombine.low %v2522, %v2530
    %v2548 = vcombine.high %v2522, %v2530
    %v2550 = vunpack.c.l.s4 1934713408
    %v2551 = vunpack.c.0.s8 %v2550
    %v2552 = vlaneseq
    %v2553 = vshrl.u32 %v2552, 7
    %v2554 = vsub.s32 %v2551, %v2553
    %v2555 = vrot.slane %v2547, %v2554
    %v2557 = vunpack.c.l.s4 1934713408
    %v2558 = vunpack.c.0.s8 %v2557
    %v2559 = vlaneseq
    %v2560 = vshrl.u32 %v2559, 7
    %v2561 = vsub.s32 %v2558, %v2560
    %v2562 = vrot.slane %v2548, %v2561
    %v2563 = vcombine.low %v2539, %v2555
    %v2564 = vcombine.high %v2539, %v2555
    %v2565 = vcombine.low %v2546, %v2562
    %v2566 = vcombine.high %v2546, %v2562
    %2569 = vrot.lane.b32.xlu0 %v2496, 8
    %v2570 = vpop.permute.xlu0 %2569
    %2571 = vrot.lane.b32.xlu0 %v2564, 8
    %v2572 = vpop.permute.xlu0 %2571
    %2577 = vrot.lane.b32.xlu0 %v2497, 16
    %v2578 = vpop.permute.xlu0 %2577
    %2579 = vrot.lane.b32.xlu0 %v2565, 16
    %v2580 = vpop.permute.xlu0 %2579
    %2585 = vrot.lane.b32.xlu0 %v2498, 24
    %v2586 = vpop.permute.xlu0 %2585
    %2587 = vrot.lane.b32.xlu0 %v2566, 24
    %v2588 = vpop.permute.xlu0 %2587
    %v2591 = vsel %vm1014, %v2495, %v2570
    %v2592 = vsel %vm1014, %v2563, %v2572
    %vm2593 = vcmask 130048
    %v2594 = vsel %vm2593, %v2591, %v2578
    %v2595 = vsel %vm2593, %v2592, %v2580
    %vm2596 = vcmask 195584
    %v2597 = vsel %vm2596, %v2594, %v2586
    %v2598 = vsel %vm2596, %v2595, %v2588
    %v2599 = vlaneseq
    %v2600 = vshrl.u32 %v2599, 7
    %v2601 = vsub.s32 1, %v2600
    %v2602 = vrot.slane %v43, %v2601
    %2607 = vrot.lane.b32.xlu0 %v34, 32
    %v2608 = vpop.permute.xlu0 %2607
    %2609 = vrot.lane.b32.xlu0 %v36, 32
    %v2610 = vpop.permute.xlu0 %2609
    %2611 = vrot.lane.b32.xlu0 %v38, 32
    %v2612 = vpop.permute.xlu0 %2611
    %2613 = vrot.lane.b32.xlu0 %v40, 32
    %v2614 = vpop.permute.xlu0 %2613
    %v2620 = vsel %vm48, %v2597, 0
    %v2623 = vsel %vm48, %v2598, 0
    %2625 = vmatprep.subr.mxu0 0.0
    %2626 = vmatpush1.msra.mxu0 0.0
    %2627 = vmatprep.subr.mxu0 0.0
    %2628 = vmatpush1.msra.mxu0 0.0
    %2629 = vmatprep.subr.mxu0 0.0
    %2630 = vmatpush1.msra.mxu0 0.0
    %2631 = vmatprep.subr.mxu0 0.0
    %2632 = vmatpush1.msra.mxu0 0.0
    %2633 = vmatprep.subr.mxu0 0.0
    %2634 = vmatpush1.msra.mxu0 0.0
    %2635 = vmatprep.subr.mxu0 0.0
    %2636 = vmatpush1.msra.mxu0 0.0
    %2637 = vmatprep.subr.mxu0 0.0
    %2638 = vmatpush1.msra.mxu0 0.0
    %2639 = vmatprep.subr.mxu0 0.0
    %2640 = vmatpush1.msra.mxu0 0.0
    %2641 = vmatprep.subr.mxu0 0.0
    %2642 = vmatpush1.msra.mxu0 0.0
    %2643 = vmatprep.subr.mxu0 0.0
    %2644 = vmatpush1.msra.mxu0 0.0
    %2645 = vmatprep.subr.mxu0 0.0
    %2646 = vmatpush1.msra.mxu0 0.0
    %2647 = vmatprep.subr.mxu0 0.0
    %2648 = vmatpush1.msra.mxu0 0.0
    %2649 = vmatprep.subr.mxu0 0.0
    %2650 = vmatpush1.msra.mxu0 %v2614
    %2651 = vmatprep.subr.mxu0 0.0
    %2652 = vmatpush1.msra.mxu0 %v2612
    %2653 = vmatprep.subr.mxu0 0.0
    %2654 = vmatpush1.msra.mxu0 %v2610
    %2655 = vmatprep.subr.mxu0 0.0
    %2656 = vmatpush1.msra.mxu0 %v2608
    %2657 = vmatprep.subr.mxu0 0.0
    %2658 = vmatpush2.msra.mxu0 0.0
    %2659 = vmatprep.subr.mxu0 0.0
    %2660 = vmatpush2.msra.mxu0 0.0
    %2661 = vmatprep.subr.mxu0 0.0
    %2662 = vmatpush2.msra.mxu0 0.0
    %2663 = vmatprep.subr.mxu0 0.0
    %2664 = vmatpush2.msra.mxu0 0.0
    %2665 = vmatprep.subr.mxu0 0.0
    %2666 = vmatpush2.msra.mxu0 0.0
    %2667 = vmatprep.subr.mxu0 0.0
    %2668 = vmatpush2.msra.mxu0 0.0
    %2669 = vmatprep.subr.mxu0 0.0
    %2670 = vmatpush2.msra.mxu0 0.0
    %2671 = vmatprep.subr.mxu0 0.0
    %2672 = vmatpush2.msra.mxu0 0.0
    %2673 = vmatprep.subr.mxu0 0.0
    %2674 = vmatpush2.msra.mxu0 0.0
    %2675 = vmatprep.subr.mxu0 0.0
    %2676 = vmatpush2.msra.mxu0 0.0
    %2677 = vmatprep.subr.mxu0 0.0
    %2678 = vmatpush2.msra.mxu0 0.0
    %2679 = vmatprep.subr.mxu0 0.0
    %2680 = vmatpush2.msra.mxu0 0.0
    %2681 = vmatprep.subr.mxu0 0.0
    %2682 = vmatpush2.msra.mxu0 0.0
    %2683 = vmatprep.subr.mxu0 0.0
    %2684 = vmatpush2.msra.mxu0 0.0
    %2685 = vmatprep.subr.mxu0 0.0
    %2686 = vmatpush2.msra.mxu0 0.0
    %2687 = vmatprep.subr.mxu0 0.0
    %2688 = vmatpush2.msra.mxu0 0.0
    %2689 = vmatprep.mubr.f32.mxu0 0.0
    %2690 = vmatmul.mubr.f32.gmra.mxu0 %v2620
    %v2691 = vpop.f32.mrf.mxu0
    %v2692 = vadd.f32 %v2602, %v2691
    %v2693 = vpop.f32.mrf.mxu0
    %2694 = vmatprep.mubr.f32.mxu0 0.0
    %2695 = vmatmul.mubr.f32.gmra.mxu0 %v2623
    %v2696 = vpop.f32.mrf.mxu0
    %v2697 = vadd.f32 %v2602, %v2696
    %v2698 = vpop.f32.mrf.mxu0
    %2699 = vdwg.mxu0
    %v2700 = vadd.f32 %v32, %v2692
    %v2701 = vadd.f32 %v33, %v2697
    %v2702 = vsel %vm48, %v2700, 0.0
    %2703 = vadd.xlane.f32.xlu0 %v2702
    %v2704 = vpop.xlane.xlu0 %2703
    %v2705 = vsel %vm48, %v2701, 0.0
    %2706 = vadd.xlane.f32.xlu0 %v2705
    %v2707 = vpop.xlane.xlu0 %2706
    %v2708 = vrcp.pop 32.0
    %v2709 = vmul.f32 %v2704, %v2708
    %v2710 = vmul.f32 %v2707, %v2708
    %v2711 = vsub.f32 %v2700, %v2709
    %v2712 = vsub.f32 %v2701, %v2710
    %v2713 = vmul.f32 %v2711, %v2711
    %v2714 = vmul.f32 %v2712, %v2712
    %v2715 = vsel %vm48, %v2713, 0.0
    %2716 = vadd.xlane.f32.xlu0 %v2715
    %v2717 = vpop.xlane.xlu0 %2716
    %v2718 = vsel %vm48, %v2714, 0.0
    %2719 = vadd.xlane.f32.xlu0 %v2718
    %v2720 = vpop.xlane.xlu0 %2719
    %v2721 = vmul.f32 %v2717, %v2708
    %v2722 = vmul.f32 %v2720, %v2708
    %v2723 = vadd.f32 %v2721, 1e-05
    %v2724 = vadd.f32 %v2722, 1e-05
    %v2725 = vrsqrt.pop %v2723
    %v2726 = vrsqrt.pop %v2724
    %v2727 = vmul.f32 %v2711, %v2725
    %v2728 = vmul.f32 %v2712, %v2726
    %v2729 = vlaneseq
    %v2730 = vshrl.u32 %v2729, 7
    %v2731 = vsub.s32 2, %v2730
    %v2732 = vrot.slane %v43, %v2731
    %v2733 = vmul.f32 %v2727, %v2732
    %v2734 = vmul.f32 %v2728, %v2732
    %v2735 = vlaneseq
    %v2736 = vshrl.u32 %v2735, 7
    %v2737 = vsub.s32 3, %v2736
    %v2738 = vrot.slane %v43, %v2737
    %v2739 = vadd.f32 %v2733, %v2738
    %v2740 = vadd.f32 %v2734, %v2738
    %v2741 = vlaneseq
    %v2742 = vshrl.u32 %v2741, 7
    %v2743 = vsub.s32 4, %v2742
    %v2744 = vrot.slane %v43, %v2743
    %v2746 = vsel %vm48, %v2739, 0
    %v2749 = vsel %vm48, %v2740, 0
    %2751 = vmatprep.subr.mxu0 0.0
    %2752 = vmatpush1.msra.mxu0 0.0
    %2753 = vmatprep.subr.mxu0 0.0
    %2754 = vmatpush1.msra.mxu0 0.0
    %2755 = vmatprep.subr.mxu0 0.0
    %2756 = vmatpush1.msra.mxu0 0.0
    %2757 = vmatprep.subr.mxu0 0.0
    %2758 = vmatpush1.msra.mxu0 0.0
    %2759 = vmatprep.subr.mxu0 0.0
    %2760 = vmatpush1.msra.mxu0 0.0
    %2761 = vmatprep.subr.mxu0 0.0
    %2762 = vmatpush1.msra.mxu0 0.0
    %2763 = vmatprep.subr.mxu0 0.0
    %2764 = vmatpush1.msra.mxu0 0.0
    %2765 = vmatprep.subr.mxu0 0.0
    %2766 = vmatpush1.msra.mxu0 0.0
    %2767 = vmatprep.subr.mxu0 0.0
    %2768 = vmatpush1.msra.mxu0 0.0
    %2769 = vmatprep.subr.mxu0 0.0
    %2770 = vmatpush1.msra.mxu0 0.0
    %2771 = vmatprep.subr.mxu0 0.0
    %2772 = vmatpush1.msra.mxu0 0.0
    %2773 = vmatprep.subr.mxu0 0.0
    %2774 = vmatpush1.msra.mxu0 0.0
    %2775 = vmatprep.subr.mxu0 0.0
    %2776 = vmatpush1.msra.mxu0 %v41
    %2777 = vmatprep.subr.mxu0 0.0
    %2778 = vmatpush1.msra.mxu0 %v39
    %2779 = vmatprep.subr.mxu0 0.0
    %2780 = vmatpush1.msra.mxu0 %v37
    %2781 = vmatprep.subr.mxu0 0.0
    %2782 = vmatpush1.msra.mxu0 %v35
    %2783 = vmatprep.subr.mxu0 0.0
    %2784 = vmatpush2.msra.mxu0 0.0
    %2785 = vmatprep.subr.mxu0 0.0
    %2786 = vmatpush2.msra.mxu0 0.0
    %2787 = vmatprep.subr.mxu0 0.0
    %2788 = vmatpush2.msra.mxu0 0.0
    %2789 = vmatprep.subr.mxu0 0.0
    %2790 = vmatpush2.msra.mxu0 0.0
    %2791 = vmatprep.subr.mxu0 0.0
    %2792 = vmatpush2.msra.mxu0 0.0
    %2793 = vmatprep.subr.mxu0 0.0
    %2794 = vmatpush2.msra.mxu0 0.0
    %2795 = vmatprep.subr.mxu0 0.0
    %2796 = vmatpush2.msra.mxu0 0.0
    %2797 = vmatprep.subr.mxu0 0.0
    %2798 = vmatpush2.msra.mxu0 0.0
    %2799 = vmatprep.subr.mxu0 0.0
    %2800 = vmatpush2.msra.mxu0 0.0
    %2801 = vmatprep.subr.mxu0 0.0
    %2802 = vmatpush2.msra.mxu0 0.0
    %2803 = vmatprep.subr.mxu0 0.0
    %2804 = vmatpush2.msra.mxu0 0.0
    %2805 = vmatprep.subr.mxu0 0.0
    %2806 = vmatpush2.msra.mxu0 0.0
    %2807 = vmatprep.subr.mxu0 0.0
    %2808 = vmatpush2.msra.mxu0 0.0
    %2809 = vmatprep.subr.mxu0 0.0
    %2810 = vmatpush2.msra.mxu0 0.0
    %2811 = vmatprep.subr.mxu0 0.0
    %2812 = vmatpush2.msra.mxu0 0.0
    %2813 = vmatprep.subr.mxu0 0.0
    %2814 = vmatpush2.msra.mxu0 0.0
    %2815 = vmatprep.mubr.f32.mxu0 0.0
    %2816 = vmatmul.mubr.f32.gmra.mxu0 %v2746
    %v2817 = vpop.f32.mrf.mxu0
    %v2818 = vadd.f32 %v2744, %v2817
    %v2819 = vpop.f32.mrf.mxu0
    %2820 = vmatprep.mubr.f32.mxu0 0.0
    %2821 = vmatmul.mubr.f32.gmra.mxu0 %v2749
    %v2822 = vpop.f32.mrf.mxu0
    %v2823 = vadd.f32 %v2744, %v2822
    %v2824 = vpop.f32.mrf.mxu0
    %2825 = vdwg.mxu0
    %v2826 = vmul.f32 %v2818, 0.5
    %v2827 = vmul.f32 %v2823, 0.5
    %v2828 = vmul.f32 %v2818, 0.70710677
    %v2829 = vmul.f32 %v2823, 0.70710677
    %vm2830 = vcmp.ge.f32.partialorder %v2828, 0.0
    %vm2831 = vcmp.ge.f32.partialorder %v2829, 0.0
    %v2832 = vsel %vm2830, 1.0, -1.0
    %v2833 = vsel %vm2831, 1.0, -1.0
    %v2834 = vand.u32 2147483647, %v2828
    %v2835 = vand.u32 2147483647, %v2829
    %v2836 = vmul.f32 %v2834, 0.3275911
    %v2837 = vmul.f32 %v2835, 0.3275911
    %v2838 = vadd.f32 %v2836, 1.0
    %v2839 = vadd.f32 %v2837, 1.0
    %v2840 = vrcp.pop %v2838
    %v2841 = vrcp.pop %v2839
    %v2842 = vmul.f32 %v2840, 1.0614054
    %v2843 = vmul.f32 %v2841, 1.0614054
    %v2844 = vadd.f32 %v2842, -1.4531521
    %v2845 = vadd.f32 %v2843, -1.4531521
    %v2846 = vmul.f32 %v2844, %v2840
    %v2847 = vmul.f32 %v2845, %v2841
    %v2848 = vadd.f32 %v2846, 1.4214138
    %v2849 = vadd.f32 %v2847, 1.4214138
    %v2850 = vmul.f32 %v2848, %v2840
    %v2851 = vmul.f32 %v2849, %v2841
    %v2852 = vadd.f32 %v2850, -0.28449672
    %v2853 = vadd.f32 %v2851, -0.28449672
    %v2854 = vmul.f32 %v2852, %v2840
    %v2855 = vmul.f32 %v2853, %v2841
    %v2856 = vadd.f32 %v2854, 0.2548296
    %v2857 = vadd.f32 %v2855, 0.2548296
    %v2858 = vmul.f32 %v2856, %v2840
    %v2859 = vmul.f32 %v2857, %v2841
    %v2860 = vsub.f32 0.0, %v2834
    %v2861 = vsub.f32 0.0, %v2835
    %v2862 = vmul.f32 %v2860, %v2834
    %v2863 = vmul.f32 %v2861, %v2835
    %v2864 = vmul.f32 %v2862, 1.442695
    %v2865 = vpow.pop %v2864
    %v2866 = vmul.f32 %v2863, 1.442695
    %v2867 = vpow.pop %v2866
    %v2868 = vmul.f32 %v2858, %v2865
    %v2869 = vmul.f32 %v2859, %v2867
    %v2870 = vsub.f32 1.0, %v2868
    %v2871 = vsub.f32 1.0, %v2869
    %v2872 = vmul.f32 %v2832, %v2870
    %v2873 = vmul.f32 %v2833, %v2871
    %v2874 = vadd.f32 %v2872, 1.0
    %v2875 = vadd.f32 %v2873, 1.0
    %v2876 = vmul.f32 %v2826, %v2874
    %v2877 = vmul.f32 %v2827, %v2875
    %v2878 = vlaneseq
    %v2879 = vshrl.u32 %v2878, 7
    %v2880 = vsub.s32 5, %v2879
    %v2881 = vrot.slane %v43, %v2880
    %v2883 = vsel %vm1014, %v2876, 0
    %v2886 = vsel %vm1014, %v2877, 0
    %2888 = vmatprep.subr.mxu0 0.0
    %2889 = vmatpush1.msra.mxu0 0.0
    %2890 = vmatprep.subr.mxu0 0.0
    %2891 = vmatpush1.msra.mxu0 0.0
    %2892 = vmatprep.subr.mxu0 0.0
    %2893 = vmatpush1.msra.mxu0 0.0
    %2894 = vmatprep.subr.mxu0 0.0
    %2895 = vmatpush1.msra.mxu0 0.0
    %2896 = vmatprep.subr.mxu0 0.0
    %2897 = vmatpush1.msra.mxu0 0.0
    %2898 = vmatprep.subr.mxu0 0.0
    %2899 = vmatpush1.msra.mxu0 0.0
    %2900 = vmatprep.subr.mxu0 0.0
    %2901 = vmatpush1.msra.mxu0 0.0
    %2902 = vmatprep.subr.mxu0 0.0
    %2903 = vmatpush1.msra.mxu0 0.0
    %2904 = vmatprep.subr.mxu0 0.0
    %2905 = vmatpush1.msra.mxu0 0.0
    %2906 = vmatprep.subr.mxu0 0.0
    %2907 = vmatpush1.msra.mxu0 0.0
    %2908 = vmatprep.subr.mxu0 0.0
    %2909 = vmatpush1.msra.mxu0 0.0
    %2910 = vmatprep.subr.mxu0 0.0
    %2911 = vmatpush1.msra.mxu0 0.0
    %2912 = vmatprep.subr.mxu0 0.0
    %2913 = vmatpush1.msra.mxu0 0.0
    %2914 = vmatprep.subr.mxu0 0.0
    %2915 = vmatpush1.msra.mxu0 0.0
    %2916 = vmatprep.subr.mxu0 0.0
    %2917 = vmatpush1.msra.mxu0 0.0
    %2918 = vmatprep.subr.mxu0 0.0
    %2919 = vmatpush1.msra.mxu0 %v42
    %2920 = vmatprep.subr.mxu0 0.0
    %2921 = vmatpush2.msra.mxu0 0.0
    %2922 = vmatprep.subr.mxu0 0.0
    %2923 = vmatpush2.msra.mxu0 0.0
    %2924 = vmatprep.subr.mxu0 0.0
    %2925 = vmatpush2.msra.mxu0 0.0
    %2926 = vmatprep.subr.mxu0 0.0
    %2927 = vmatpush2.msra.mxu0 0.0
    %2928 = vmatprep.subr.mxu0 0.0
    %2929 = vmatpush2.msra.mxu0 0.0
    %2930 = vmatprep.subr.mxu0 0.0
    %2931 = vmatpush2.msra.mxu0 0.0
    %2932 = vmatprep.subr.mxu0 0.0
    %2933 = vmatpush2.msra.mxu0 0.0
    %2934 = vmatprep.subr.mxu0 0.0
    %2935 = vmatpush2.msra.mxu0 0.0
    %2936 = vmatprep.subr.mxu0 0.0
    %2937 = vmatpush2.msra.mxu0 0.0
    %2938 = vmatprep.subr.mxu0 0.0
    %2939 = vmatpush2.msra.mxu0 0.0
    %2940 = vmatprep.subr.mxu0 0.0
    %2941 = vmatpush2.msra.mxu0 0.0
    %2942 = vmatprep.subr.mxu0 0.0
    %2943 = vmatpush2.msra.mxu0 0.0
    %2944 = vmatprep.subr.mxu0 0.0
    %2945 = vmatpush2.msra.mxu0 0.0
    %2946 = vmatprep.subr.mxu0 0.0
    %2947 = vmatpush2.msra.mxu0 0.0
    %2948 = vmatprep.subr.mxu0 0.0
    %2949 = vmatpush2.msra.mxu0 0.0
    %2950 = vmatprep.subr.mxu0 0.0
    %2951 = vmatpush2.msra.mxu0 0.0
    %2952 = vmatprep.mubr.f32.mxu0 0.0
    %2953 = vmatmul.mubr.f32.gmra.mxu0 %v2883
    %v2954 = vpop.f32.mrf.mxu0
    %v2955 = vadd.f32 %v2881, %v2954
    %v2956 = vpop.f32.mrf.mxu0
    %2957 = vmatprep.mubr.f32.mxu0 0.0
    %2958 = vmatmul.mubr.f32.gmra.mxu0 %v2886
    %v2959 = vpop.f32.mrf.mxu0
    %v2960 = vadd.f32 %v2881, %v2959
    %v2961 = vpop.f32.mrf.mxu0
    %2962 = vdwg.mxu0
    %v2963 = vadd.f32 %v2739, %v2955
    %v2964 = vadd.f32 %v2740, %v2960
    %v2965 = vsel %vm48, %v2963, 0.0
    %2966 = vadd.xlane.f32.xlu0 %v2965
    %v2967 = vpop.xlane.xlu0 %2966
    %v2968 = vsel %vm48, %v2964, 0.0
    %2969 = vadd.xlane.f32.xlu0 %v2968
    %v2970 = vpop.xlane.xlu0 %2969
    %v2971 = vmul.f32 %v2967, %v2708
    %v2972 = vmul.f32 %v2970, %v2708
    %v2973 = vsub.f32 %v2963, %v2971
    %v2974 = vsub.f32 %v2964, %v2972
    %v2975 = vmul.f32 %v2973, %v2973
    %v2976 = vmul.f32 %v2974, %v2974
    %v2977 = vsel %vm48, %v2975, 0.0
    %2978 = vadd.xlane.f32.xlu0 %v2977
    %v2979 = vpop.xlane.xlu0 %2978
    %v2980 = vsel %vm48, %v2976, 0.0
    %2981 = vadd.xlane.f32.xlu0 %v2980
    %v2982 = vpop.xlane.xlu0 %2981
    %v2983 = vmul.f32 %v2979, %v2708
    %v2984 = vmul.f32 %v2982, %v2708
    %v2985 = vadd.f32 %v2983, 1e-05
    %v2986 = vadd.f32 %v2984, 1e-05
    %v2987 = vrsqrt.pop %v2985
    %v2988 = vrsqrt.pop %v2986
    %v2989 = vmul.f32 %v2973, %v2987
    %v2990 = vmul.f32 %v2974, %v2988
    %v2991 = vlaneseq
    %v2992 = vshrl.u32 %v2991, 7
    %v2993 = vsub.s32 6, %v2992
    %v2994 = vrot.slane %v43, %v2993
    %v2995 = vmul.f32 %v2989, %v2994
    %v2996 = vmul.f32 %v2990, %v2994
    %v2997 = vlaneseq
    %v2998 = vshrl.u32 %v2997, 7
    %v2999 = vsub.s32 7, %v2998
    %v3000 = vrot.slane %v43, %v2999
    %v3001 = vadd.f32 %v2995, %v3000
    %v3002 = vadd.f32 %v2996, %v3000
    %s3003 = scalar_lea.vmem [#allocation2], 80
    %v3004 = vld [vmem:[%s3003] sm:$0xff]
    %v3005 = vld [vmem:[%s3003 + $0x8] sm:$0xff]
    %v3006 = vld [vmem:[%s3003 + $0x10] sm:$0xff]
    %v3007 = vld [vmem:[%s3003 + $0x18] sm:$0xff]
    %v3008 = vld [vmem:[%s3003 + $0x20] sm:$0xff]
    %v3009 = vld [vmem:[%s3003 + $0x28] sm:$0xff]
    %v3010 = vld [vmem:[%s3003 + $0x30] sm:$0xff]
    %v3011 = vld [vmem:[%s3003 + $0x38] sm:$0xff]
    %v3012 = vld [vmem:[%s3003 + $0x40] sm:$0xff]
    %s3013 = scalar_lea.vmem %s2, 8
    %v3014 = vld [vmem:[%s3013] sm:$0xff]
    %v3015 = vlaneseq
    %v3016 = vshrl.u32 %v3015, 7
    %v3017 = vsub.s32 0, %v3016
    %v3018 = vrot.slane %v3014, %v3017
    %v3020 = vsel %vm48, %v3001, 0
    %v3023 = vsel %vm48, %v3002, 0
    %3025 = vmatprep.subr.mxu0 0.0
    %3026 = vmatpush1.msra.mxu0 0.0
    %3027 = vmatprep.subr.mxu0 0.0
    %3028 = vmatpush1.msra.mxu0 0.0
    %3029 = vmatprep.subr.mxu0 0.0
    %3030 = vmatpush1.msra.mxu0 0.0
    %3031 = vmatprep.subr.mxu0 0.0
    %3032 = vmatpush1.msra.mxu0 0.0
    %3033 = vmatprep.subr.mxu0 0.0
    %3034 = vmatpush1.msra.mxu0 0.0
    %3035 = vmatprep.subr.mxu0 0.0
    %3036 = vmatpush1.msra.mxu0 0.0
    %3037 = vmatprep.subr.mxu0 0.0
    %3038 = vmatpush1.msra.mxu0 0.0
    %3039 = vmatprep.subr.mxu0 0.0
    %3040 = vmatpush1.msra.mxu0 0.0
    %3041 = vmatprep.subr.mxu0 0.0
    %3042 = vmatpush1.msra.mxu0 0.0
    %3043 = vmatprep.subr.mxu0 0.0
    %3044 = vmatpush1.msra.mxu0 0.0
    %3045 = vmatprep.subr.mxu0 0.0
    %3046 = vmatpush1.msra.mxu0 0.0
    %3047 = vmatprep.subr.mxu0 0.0
    %3048 = vmatpush1.msra.mxu0 0.0
    %3049 = vmatprep.subr.mxu0 0.0
    %3050 = vmatpush1.msra.mxu0 %v3010
    %3051 = vmatprep.subr.mxu0 0.0
    %3052 = vmatpush1.msra.mxu0 %v3008
    %3053 = vmatprep.subr.mxu0 0.0
    %3054 = vmatpush1.msra.mxu0 %v3006
    %3055 = vmatprep.subr.mxu0 0.0
    %3056 = vmatpush1.msra.mxu0 %v3004
    %3057 = vmatprep.subr.mxu0 0.0
    %3058 = vmatpush2.msra.mxu0 0.0
    %3059 = vmatprep.subr.mxu0 0.0
    %3060 = vmatpush2.msra.mxu0 0.0
    %3061 = vmatprep.subr.mxu0 0.0
    %3062 = vmatpush2.msra.mxu0 0.0
    %3063 = vmatprep.subr.mxu0 0.0
    %3064 = vmatpush2.msra.mxu0 0.0
    %3065 = vmatprep.subr.mxu0 0.0
    %3066 = vmatpush2.msra.mxu0 0.0
    %3067 = vmatprep.subr.mxu0 0.0
    %3068 = vmatpush2.msra.mxu0 0.0
    %3069 = vmatprep.subr.mxu0 0.0
    %3070 = vmatpush2.msra.mxu0 0.0
    %3071 = vmatprep.subr.mxu0 0.0
    %3072 = vmatpush2.msra.mxu0 0.0
    %3073 = vmatprep.subr.mxu0 0.0
    %3074 = vmatpush2.msra.mxu0 0.0
    %3075 = vmatprep.subr.mxu0 0.0
    %3076 = vmatpush2.msra.mxu0 0.0
    %3077 = vmatprep.subr.mxu0 0.0
    %3078 = vmatpush2.msra.mxu0 0.0
    %3079 = vmatprep.subr.mxu0 0.0
    %3080 = vmatpush2.msra.mxu0 0.0
    %3081 = vmatprep.subr.mxu0 0.0
    %3082 = vmatpush2.msra.mxu0 0.0
    %3083 = vmatprep.subr.mxu0 0.0
    %3084 = vmatpush2.msra.mxu0 0.0
    %3085 = vmatprep.subr.mxu0 0.0
    %3086 = vmatpush2.msra.mxu0 0.0
    %3087 = vmatprep.subr.mxu0 0.0
    %3088 = vmatpush2.msra.mxu0 0.0
    %3089 = vmatprep.mubr.f32.mxu0 0.0
    %3090 = vmatmul.mubr.f32.gmra.mxu0 %v3020
    %v3091 = vpop.f32.mrf.mxu0
    %v3092 = vadd.f32 %v3018, %v3091
    %v3093 = vpop.f32.mrf.mxu0
    %3094 = vmatprep.mubr.f32.mxu0 0.0
    %3095 = vmatmul.mubr.f32.gmra.mxu0 %v3023
    %v3096 = vpop.f32.mrf.mxu0
    %v3097 = vadd.f32 %v3018, %v3096
    %v3098 = vpop.f32.mrf.mxu0
    %3099 = vdwg.mxu0
    %3102 = vrot.lane.b32.xlu0 %v3092, 120
    %v3103 = vpop.permute.xlu0 %3102
    %3104 = vrot.lane.b32.xlu0 %v3097, 120
    %v3105 = vpop.permute.xlu0 %3104
    %3108 = vrot.lane.b32.xlu0 %v3092, 112
    %v3109 = vpop.permute.xlu0 %3108
    %3110 = vrot.lane.b32.xlu0 %v3097, 112
    %v3111 = vpop.permute.xlu0 %3110
    %3114 = vrot.lane.b32.xlu0 %v3092, 104
    %v3115 = vpop.permute.xlu0 %3114
    %3116 = vrot.lane.b32.xlu0 %v3097, 104
    %v3117 = vpop.permute.xlu0 %3116
    %3120 = vrot.lane.b32.xlu0 %v3092, 96
    %v3121 = vpop.permute.xlu0 %3120
    %3122 = vrot.lane.b32.xlu0 %v3097, 96
    %v3123 = vpop.permute.xlu0 %3122
    %3126 = vrot.lane.b32.xlu0 %v3092, 88
    %v3127 = vpop.permute.xlu0 %3126
    %3128 = vrot.lane.b32.xlu0 %v3097, 88
    %v3129 = vpop.permute.xlu0 %3128
    %3132 = vrot.lane.b32.xlu0 %v3092, 80
    %v3133 = vpop.permute.xlu0 %3132
    %3134 = vrot.lane.b32.xlu0 %v3097, 80
    %v3135 = vpop.permute.xlu0 %3134
    %3138 = vrot.lane.b32.xlu0 %v3092, 72
    %v3139 = vpop.permute.xlu0 %3138
    %3140 = vrot.lane.b32.xlu0 %v3097, 72
    %v3141 = vpop.permute.xlu0 %3140
    %3144 = vrot.lane.b32.xlu0 %v3092, 64
    %v3145 = vpop.permute.xlu0 %3144
    %3146 = vrot.lane.b32.xlu0 %v3097, 64
    %v3147 = vpop.permute.xlu0 %3146
    %3150 = vrot.lane.b32.xlu0 %v3092, 56
    %v3151 = vpop.permute.xlu0 %3150
    %3152 = vrot.lane.b32.xlu0 %v3097, 56
    %v3153 = vpop.permute.xlu0 %3152
    %3156 = vrot.lane.b32.xlu0 %v3092, 48
    %v3157 = vpop.permute.xlu0 %3156
    %3158 = vrot.lane.b32.xlu0 %v3097, 48
    %v3159 = vpop.permute.xlu0 %3158
    %3162 = vrot.lane.b32.xlu0 %v3092, 40
    %v3163 = vpop.permute.xlu0 %3162
    %3164 = vrot.lane.b32.xlu0 %v3097, 40
    %v3165 = vpop.permute.xlu0 %3164
    %v3168 = vcombine.low %v3092, %v3109
    %v3169 = vcombine.high %v3092, %v3109
    %v3171 = vunpack.c.l.s4 1983009808
    %v3172 = vunpack.c.0.s8 %v3171
    %v3173 = vlaneseq
    %v3174 = vshrl.u32 %v3173, 7
    %v3175 = vsub.s32 %v3172, %v3174
    %v3176 = vrot.slane %v3168, %v3175
    %v3178 = vunpack.c.l.s4 1983009808
    %v3179 = vunpack.c.0.s8 %v3178
    %v3180 = vlaneseq
    %v3181 = vshrl.u32 %v3180, 7
    %v3182 = vsub.s32 %v3179, %v3181
    %v3183 = vrot.slane %v3169, %v3182
    %v3184 = vcombine.low %v3103, %v3115
    %v3185 = vcombine.high %v3103, %v3115
    %v3187 = vunpack.c.l.s4 1983009808
    %v3188 = vunpack.c.0.s8 %v3187
    %v3189 = vlaneseq
    %v3190 = vshrl.u32 %v3189, 7
    %v3191 = vsub.s32 %v3188, %v3190
    %v3192 = vrot.slane %v3184, %v3191
    %v3194 = vunpack.c.l.s4 1983009808
    %v3195 = vunpack.c.0.s8 %v3194
    %v3196 = vlaneseq
    %v3197 = vshrl.u32 %v3196, 7
    %v3198 = vsub.s32 %v3195, %v3197
    %v3199 = vrot.slane %v3185, %v3198
    %v3200 = vcombine.low %v3121, %v3133
    %v3201 = vcombine.high %v3121, %v3133
    %v3203 = vunpack.c.l.s4 1983009808
    %v3204 = vunpack.c.0.s8 %v3203
    %v3205 = vlaneseq
    %v3206 = vshrl.u32 %v3205, 7
    %v3207 = vsub.s32 %v3204, %v3206
    %v3208 = vrot.slane %v3200, %v3207
    %v3210 = vunpack.c.l.s4 1983009808
    %v3211 = vunpack.c.0.s8 %v3210
    %v3212 = vlaneseq
    %v3213 = vshrl.u32 %v3212, 7
    %v3214 = vsub.s32 %v3211, %v3213
    %v3215 = vrot.slane %v3201, %v3214
    %v3216 = vcombine.low %v3127, %v3139
    %v3217 = vcombine.high %v3127, %v3139
    %v3219 = vunpack.c.l.s4 1983009808
    %v3220 = vunpack.c.0.s8 %v3219
    %v3221 = vlaneseq
    %v3222 = vshrl.u32 %v3221, 7
    %v3223 = vsub.s32 %v3220, %v3222
    %v3224 = vrot.slane %v3216, %v3223
    %v3226 = vunpack.c.l.s4 1983009808
    %v3227 = vunpack.c.0.s8 %v3226
    %v3228 = vlaneseq
    %v3229 = vshrl.u32 %v3228, 7
    %v3230 = vsub.s32 %v3227, %v3229
    %v3231 = vrot.slane %v3217, %v3230
    %v3232 = vcombine.low %v3176, %v3192
    %v3233 = vcombine.high %v3176, %v3192
    %v3235 = vunpack.c.l.s4 1934713408
    %v3236 = vunpack.c.0.s8 %v3235
    %v3237 = vlaneseq
    %v3238 = vshrl.u32 %v3237, 7
    %v3239 = vsub.s32 %v3236, %v3238
    %v3240 = vrot.slane %v3232, %v3239
    %v3242 = vunpack.c.l.s4 1934713408
    %v3243 = vunpack.c.0.s8 %v3242
    %v3244 = vlaneseq
    %v3245 = vshrl.u32 %v3244, 7
    %v3246 = vsub.s32 %v3243, %v3245
    %v3247 = vrot.slane %v3233, %v3246
    %v3248 = vcombine.low %v3183, %v3199
    %v3249 = vcombine.high %v3183, %v3199
    %v3251 = vunpack.c.l.s4 1934713408
    %v3252 = vunpack.c.0.s8 %v3251
    %v3253 = vlaneseq
    %v3254 = vshrl.u32 %v3253, 7
    %v3255 = vsub.s32 %v3252, %v3254
    %v3256 = vrot.slane %v3248, %v3255
    %v3258 = vunpack.c.l.s4 1934713408
    %v3259 = vunpack.c.0.s8 %v3258
    %v3260 = vlaneseq
    %v3261 = vshrl.u32 %v3260, 7
    %v3262 = vsub.s32 %v3259, %v3261
    %v3263 = vrot.slane %v3249, %v3262
    %v3264 = vcombine.low %v3208, %v3224
    %v3265 = vcombine.high %v3208, %v3224
    %v3267 = vunpack.c.l.s4 1934713408
    %v3268 = vunpack.c.0.s8 %v3267
    %v3269 = vlaneseq
    %v3270 = vshrl.u32 %v3269, 7
    %v3271 = vsub.s32 %v3268, %v3270
    %v3272 = vrot.slane %v3264, %v3271
    %v3274 = vunpack.c.l.s4 1934713408
    %v3275 = vunpack.c.0.s8 %v3274
    %v3276 = vlaneseq
    %v3277 = vshrl.u32 %v3276, 7
    %v3278 = vsub.s32 %v3275, %v3277
    %v3279 = vrot.slane %v3265, %v3278
    %v3280 = vcombine.low %v3215, %v3231
    %v3281 = vcombine.high %v3215, %v3231
    %v3283 = vunpack.c.l.s4 1934713408
    %v3284 = vunpack.c.0.s8 %v3283
    %v3285 = vlaneseq
    %v3286 = vshrl.u32 %v3285, 7
    %v3287 = vsub.s32 %v3284, %v3286
    %v3288 = vrot.slane %v3280, %v3287
    %v3290 = vunpack.c.l.s4 1934713408
    %v3291 = vunpack.c.0.s8 %v3290
    %v3292 = vlaneseq
    %v3293 = vshrl.u32 %v3292, 7
    %v3294 = vsub.s32 %v3291, %v3293
    %v3295 = vrot.slane %v3281, %v3294
    %v3296 = vcombine.low %v3240, %v3272
    %v3297 = vcombine.high %v3240, %v3272
    %v3298 = vcombine.low %v3247, %v3279
    %v3299 = vcombine.high %v3247, %v3279
    %v3300 = vcombine.low %v3256, %v3288
    %v3301 = vcombine.high %v3256, %v3288
    %v3302 = vcombine.low %v3263, %v3295
    %v3303 = vcombine.high %v3263, %v3295
    %v3304 = vcombine.low %v3145, %v3157
    %v3305 = vcombine.high %v3145, %v3157
    %v3307 = vunpack.c.l.s4 1983009808
    %v3308 = vunpack.c.0.s8 %v3307
    %v3309 = vlaneseq
    %v3310 = vshrl.u32 %v3309, 7
    %v3311 = vsub.s32 %v3308, %v3310
    %v3312 = vrot.slane %v3304, %v3311
    %v3314 = vunpack.c.l.s4 1983009808
    %v3315 = vunpack.c.0.s8 %v3314
    %v3316 = vlaneseq
    %v3317 = vshrl.u32 %v3316, 7
    %v3318 = vsub.s32 %v3315, %v3317
    %v3319 = vrot.slane %v3305, %v3318
    %v3320 = vcombine.low %v3151, %v3163
    %v3321 = vcombine.high %v3151, %v3163
    %v3323 = vunpack.c.l.s4 1983009808
    %v3324 = vunpack.c.0.s8 %v3323
    %v3325 = vlaneseq
    %v3326 = vshrl.u32 %v3325, 7
    %v3327 = vsub.s32 %v3324, %v3326
    %v3328 = vrot.slane %v3320, %v3327
    %v3330 = vunpack.c.l.s4 1983009808
    %v3331 = vunpack.c.0.s8 %v3330
    %v3332 = vlaneseq
    %v3333 = vshrl.u32 %v3332, 7
    %v3334 = vsub.s32 %v3331, %v3333
    %v3335 = vrot.slane %v3321, %v3334
    %v3336 = vcombine.low %v3312, %v3328
    %v3337 = vcombine.high %v3312, %v3328
    %v3339 = vunpack.c.l.s4 1934713408
    %v3340 = vunpack.c.0.s8 %v3339
    %v3341 = vlaneseq
    %v3342 = vshrl.u32 %v3341, 7
    %v3343 = vsub.s32 %v3340, %v3342
    %v3344 = vrot.slane %v3336, %v3343
    %v3346 = vunpack.c.l.s4 1934713408
    %v3347 = vunpack.c.0.s8 %v3346
    %v3348 = vlaneseq
    %v3349 = vshrl.u32 %v3348, 7
    %v3350 = vsub.s32 %v3347, %v3349
    %v3351 = vrot.slane %v3337, %v3350
    %v3352 = vcombine.low %v3319, %v3335
    %v3353 = vcombine.high %v3319, %v3335
    %v3355 = vunpack.c.l.s4 1934713408
    %v3356 = vunpack.c.0.s8 %v3355
    %v3357 = vlaneseq
    %v3358 = vshrl.u32 %v3357, 7
    %v3359 = vsub.s32 %v3356, %v3358
    %v3360 = vrot.slane %v3352, %v3359
    %v3362 = vunpack.c.l.s4 1934713408
    %v3363 = vunpack.c.0.s8 %v3362
    %v3364 = vlaneseq
    %v3365 = vshrl.u32 %v3364, 7
    %v3366 = vsub.s32 %v3363, %v3365
    %v3367 = vrot.slane %v3353, %v3366
    %v3368 = vcombine.high %v3344, 0.0
    %v3369 = vcombine.high %v3351, 0.0
    %v3370 = vcombine.high %v3360, 0.0
    %v3371 = vcombine.high %v3367, 0.0
    %v3372 = vcombine.low %v3097, %v3111
    %v3373 = vcombine.high %v3097, %v3111
    %v3375 = vunpack.c.l.s4 1983009808
    %v3376 = vunpack.c.0.s8 %v3375
    %v3377 = vlaneseq
    %v3378 = vshrl.u32 %v3377, 7
    %v3379 = vsub.s32 %v3376, %v3378
    %v3380 = vrot.slane %v3372, %v3379
    %v3382 = vunpack.c.l.s4 1983009808
    %v3383 = vunpack.c.0.s8 %v3382
    %v3384 = vlaneseq
    %v3385 = vshrl.u32 %v3384, 7
    %v3386 = vsub.s32 %v3383, %v3385
    %v3387 = vrot.slane %v3373, %v3386
    %v3388 = vcombine.low %v3105, %v3117
    %v3389 = vcombine.high %v3105, %v3117
    %v3391 = vunpack.c.l.s4 1983009808
    %v3392 = vunpack.c.0.s8 %v3391
    %v3393 = vlaneseq
    %v3394 = vshrl.u32 %v3393, 7
    %v3395 = vsub.s32 %v3392, %v3394
    %v3396 = vrot.slane %v3388, %v3395
    %v3398 = vunpack.c.l.s4 1983009808
    %v3399 = vunpack.c.0.s8 %v3398
    %v3400 = vlaneseq
    %v3401 = vshrl.u32 %v3400, 7
    %v3402 = vsub.s32 %v3399, %v3401
    %v3403 = vrot.slane %v3389, %v3402
    %v3404 = vcombine.low %v3123, %v3135
    %v3405 = vcombine.high %v3123, %v3135
    %v3407 = vunpack.c.l.s4 1983009808
    %v3408 = vunpack.c.0.s8 %v3407
    %v3409 = vlaneseq
    %v3410 = vshrl.u32 %v3409, 7
    %v3411 = vsub.s32 %v3408, %v3410
    %v3412 = vrot.slane %v3404, %v3411
    %v3414 = vunpack.c.l.s4 1983009808
    %v3415 = vunpack.c.0.s8 %v3414
    %v3416 = vlaneseq
    %v3417 = vshrl.u32 %v3416, 7
    %v3418 = vsub.s32 %v3415, %v3417
    %v3419 = vrot.slane %v3405, %v3418
    %v3420 = vcombine.low %v3129, %v3141
    %v3421 = vcombine.high %v3129, %v3141
    %v3423 = vunpack.c.l.s4 1983009808
    %v3424 = vunpack.c.0.s8 %v3423
    %v3425 = vlaneseq
    %v3426 = vshrl.u32 %v3425, 7
    %v3427 = vsub.s32 %v3424, %v3426
    %v3428 = vrot.slane %v3420, %v3427
    %v3430 = vunpack.c.l.s4 1983009808
    %v3431 = vunpack.c.0.s8 %v3430
    %v3432 = vlaneseq
    %v3433 = vshrl.u32 %v3432, 7
    %v3434 = vsub.s32 %v3431, %v3433
    %v3435 = vrot.slane %v3421, %v3434
    %v3436 = vcombine.low %v3380, %v3396
    %v3437 = vcombine.high %v3380, %v3396
    %v3439 = vunpack.c.l.s4 1934713408
    %v3440 = vunpack.c.0.s8 %v3439
    %v3441 = vlaneseq
    %v3442 = vshrl.u32 %v3441, 7
    %v3443 = vsub.s32 %v3440, %v3442
    %v3444 = vrot.slane %v3436, %v3443
    %v3446 = vunpack.c.l.s4 1934713408
    %v3447 = vunpack.c.0.s8 %v3446
    %v3448 = vlaneseq
    %v3449 = vshrl.u32 %v3448, 7
    %v3450 = vsub.s32 %v3447, %v3449
    %v3451 = vrot.slane %v3437, %v3450
    %v3452 = vcombine.low %v3387, %v3403
    %v3453 = vcombine.high %v3387, %v3403
    %v3455 = vunpack.c.l.s4 1934713408
    %v3456 = vunpack.c.0.s8 %v3455
    %v3457 = vlaneseq
    %v3458 = vshrl.u32 %v3457, 7
    %v3459 = vsub.s32 %v3456, %v3458
    %v3460 = vrot.slane %v3452, %v3459
    %v3462 = vunpack.c.l.s4 1934713408
    %v3463 = vunpack.c.0.s8 %v3462
    %v3464 = vlaneseq
    %v3465 = vshrl.u32 %v3464, 7
    %v3466 = vsub.s32 %v3463, %v3465
    %v3467 = vrot.slane %v3453, %v3466
    %v3468 = vcombine.low %v3412, %v3428
    %v3469 = vcombine.high %v3412, %v3428
    %v3471 = vunpack.c.l.s4 1934713408
    %v3472 = vunpack.c.0.s8 %v3471
    %v3473 = vlaneseq
    %v3474 = vshrl.u32 %v3473, 7
    %v3475 = vsub.s32 %v3472, %v3474
    %v3476 = vrot.slane %v3468, %v3475
    %v3478 = vunpack.c.l.s4 1934713408
    %v3479 = vunpack.c.0.s8 %v3478
    %v3480 = vlaneseq
    %v3481 = vshrl.u32 %v3480, 7
    %v3482 = vsub.s32 %v3479, %v3481
    %v3483 = vrot.slane %v3469, %v3482
    %v3484 = vcombine.low %v3419, %v3435
    %v3485 = vcombine.high %v3419, %v3435
    %v3487 = vunpack.c.l.s4 1934713408
    %v3488 = vunpack.c.0.s8 %v3487
    %v3489 = vlaneseq
    %v3490 = vshrl.u32 %v3489, 7
    %v3491 = vsub.s32 %v3488, %v3490
    %v3492 = vrot.slane %v3484, %v3491
    %v3494 = vunpack.c.l.s4 1934713408
    %v3495 = vunpack.c.0.s8 %v3494
    %v3496 = vlaneseq
    %v3497 = vshrl.u32 %v3496, 7
    %v3498 = vsub.s32 %v3495, %v3497
    %v3499 = vrot.slane %v3485, %v3498
    %v3500 = vcombine.low %v3444, %v3476
    %v3501 = vcombine.high %v3444, %v3476
    %v3502 = vcombine.low %v3451, %v3483
    %v3503 = vcombine.high %v3451, %v3483
    %v3504 = vcombine.low %v3460, %v3492
    %v3505 = vcombine.high %v3460, %v3492
    %v3506 = vcombine.low %v3467, %v3499
    %v3507 = vcombine.high %v3467, %v3499
    %v3508 = vcombine.low %v3147, %v3159
    %v3509 = vcombine.high %v3147, %v3159
    %v3511 = vunpack.c.l.s4 1983009808
    %v3512 = vunpack.c.0.s8 %v3511
    %v3513 = vlaneseq
    %v3514 = vshrl.u32 %v3513, 7
    %v3515 = vsub.s32 %v3512, %v3514
    %v3516 = vrot.slane %v3508, %v3515
    %v3518 = vunpack.c.l.s4 1983009808
    %v3519 = vunpack.c.0.s8 %v3518
    %v3520 = vlaneseq
    %v3521 = vshrl.u32 %v3520, 7
    %v3522 = vsub.s32 %v3519, %v3521
    %v3523 = vrot.slane %v3509, %v3522
    %v3524 = vcombine.low %v3153, %v3165
    %v3525 = vcombine.high %v3153, %v3165
    %v3527 = vunpack.c.l.s4 1983009808
    %v3528 = vunpack.c.0.s8 %v3527
    %v3529 = vlaneseq
    %v3530 = vshrl.u32 %v3529, 7
    %v3531 = vsub.s32 %v3528, %v3530
    %v3532 = vrot.slane %v3524, %v3531
    %v3534 = vunpack.c.l.s4 1983009808
    %v3535 = vunpack.c.0.s8 %v3534
    %v3536 = vlaneseq
    %v3537 = vshrl.u32 %v3536, 7
    %v3538 = vsub.s32 %v3535, %v3537
    %v3539 = vrot.slane %v3525, %v3538
    %v3540 = vcombine.low %v3516, %v3532
    %v3541 = vcombine.high %v3516, %v3532
    %v3543 = vunpack.c.l.s4 1934713408
    %v3544 = vunpack.c.0.s8 %v3543
    %v3545 = vlaneseq
    %v3546 = vshrl.u32 %v3545, 7
    %v3547 = vsub.s32 %v3544, %v3546
    %v3548 = vrot.slane %v3540, %v3547
    %v3550 = vunpack.c.l.s4 1934713408
    %v3551 = vunpack.c.0.s8 %v3550
    %v3552 = vlaneseq
    %v3553 = vshrl.u32 %v3552, 7
    %v3554 = vsub.s32 %v3551, %v3553
    %v3555 = vrot.slane %v3541, %v3554
    %v3556 = vcombine.low %v3523, %v3539
    %v3557 = vcombine.high %v3523, %v3539
    %v3559 = vunpack.c.l.s4 1934713408
    %v3560 = vunpack.c.0.s8 %v3559
    %v3561 = vlaneseq
    %v3562 = vshrl.u32 %v3561, 7
    %v3563 = vsub.s32 %v3560, %v3562
    %v3564 = vrot.slane %v3556, %v3563
    %v3566 = vunpack.c.l.s4 1934713408
    %v3567 = vunpack.c.0.s8 %v3566
    %v3568 = vlaneseq
    %v3569 = vshrl.u32 %v3568, 7
    %v3570 = vsub.s32 %v3567, %v3569
    %v3571 = vrot.slane %v3557, %v3570
    %v3572 = vcombine.high %v3548, 0.0
    %v3573 = vcombine.high %v3555, 0.0
    %v3574 = vcombine.high %v3564, 0.0
    %v3575 = vcombine.high %v3571, 0.0
    %v3576 = vcombine.low %v3296, %v3298
    %v3577 = vcombine.high %v3296, %v3298
    %v3579 = vunpack.c.l.s4 1983009808
    %v3580 = vunpack.c.0.s8 %v3579
    %v3581 = vlaneseq
    %v3582 = vshrl.u32 %v3581, 7
    %v3583 = vsub.s32 %v3580, %v3582
    %v3584 = vrot.slane %v3576, %v3583
    %v3586 = vunpack.c.l.s4 1983009808
    %v3587 = vunpack.c.0.s8 %v3586
    %v3588 = vlaneseq
    %v3589 = vshrl.u32 %v3588, 7
    %v3590 = vsub.s32 %v3587, %v3589
    %v3591 = vrot.slane %v3577, %v3590
    %v3592 = vcombine.low %v3297, %v3299
    %v3593 = vcombine.high %v3297, %v3299
    %v3595 = vunpack.c.l.s4 1983009808
    %v3596 = vunpack.c.0.s8 %v3595
    %v3597 = vlaneseq
    %v3598 = vshrl.u32 %v3597, 7
    %v3599 = vsub.s32 %v3596, %v3598
    %v3600 = vrot.slane %v3592, %v3599
    %v3602 = vunpack.c.l.s4 1983009808
    %v3603 = vunpack.c.0.s8 %v3602
    %v3604 = vlaneseq
    %v3605 = vshrl.u32 %v3604, 7
    %v3606 = vsub.s32 %v3603, %v3605
    %v3607 = vrot.slane %v3593, %v3606
    %v3608 = vcombine.low %v3300, %v3302
    %v3609 = vcombine.high %v3300, %v3302
    %v3611 = vunpack.c.l.s4 1983009808
    %v3612 = vunpack.c.0.s8 %v3611
    %v3613 = vlaneseq
    %v3614 = vshrl.u32 %v3613, 7
    %v3615 = vsub.s32 %v3612, %v3614
    %v3616 = vrot.slane %v3608, %v3615
    %v3618 = vunpack.c.l.s4 1983009808
    %v3619 = vunpack.c.0.s8 %v3618
    %v3620 = vlaneseq
    %v3621 = vshrl.u32 %v3620, 7
    %v3622 = vsub.s32 %v3619, %v3621
    %v3623 = vrot.slane %v3609, %v3622
    %v3624 = vcombine.low %v3301, %v3303
    %v3625 = vcombine.high %v3301, %v3303
    %v3627 = vunpack.c.l.s4 1983009808
    %v3628 = vunpack.c.0.s8 %v3627
    %v3629 = vlaneseq
    %v3630 = vshrl.u32 %v3629, 7
    %v3631 = vsub.s32 %v3628, %v3630
    %v3632 = vrot.slane %v3624, %v3631
    %v3634 = vunpack.c.l.s4 1983009808
    %v3635 = vunpack.c.0.s8 %v3634
    %v3636 = vlaneseq
    %v3637 = vshrl.u32 %v3636, 7
    %v3638 = vsub.s32 %v3635, %v3637
    %v3639 = vrot.slane %v3625, %v3638
    %v3640 = vcombine.low %v3584, %v3600
    %v3641 = vcombine.high %v3584, %v3600
    %v3643 = vunpack.c.l.s4 1934713408
    %v3644 = vunpack.c.0.s8 %v3643
    %v3645 = vlaneseq
    %v3646 = vshrl.u32 %v3645, 7
    %v3647 = vsub.s32 %v3644, %v3646
    %v3648 = vrot.slane %v3640, %v3647
    %v3650 = vunpack.c.l.s4 1934713408
    %v3651 = vunpack.c.0.s8 %v3650
    %v3652 = vlaneseq
    %v3653 = vshrl.u32 %v3652, 7
    %v3654 = vsub.s32 %v3651, %v3653
    %v3655 = vrot.slane %v3641, %v3654
    %v3656 = vcombine.low %v3591, %v3607
    %v3657 = vcombine.high %v3591, %v3607
    %v3659 = vunpack.c.l.s4 1934713408
    %v3660 = vunpack.c.0.s8 %v3659
    %v3661 = vlaneseq
    %v3662 = vshrl.u32 %v3661, 7
    %v3663 = vsub.s32 %v3660, %v3662
    %v3664 = vrot.slane %v3656, %v3663
    %v3666 = vunpack.c.l.s4 1934713408
    %v3667 = vunpack.c.0.s8 %v3666
    %v3668 = vlaneseq
    %v3669 = vshrl.u32 %v3668, 7
    %v3670 = vsub.s32 %v3667, %v3669
    %v3671 = vrot.slane %v3657, %v3670
    %v3672 = vcombine.low %v3616, %v3632
    %v3673 = vcombine.high %v3616, %v3632
    %v3675 = vunpack.c.l.s4 1934713408
    %v3676 = vunpack.c.0.s8 %v3675
    %v3677 = vlaneseq
    %v3678 = vshrl.u32 %v3677, 7
    %v3679 = vsub.s32 %v3676, %v3678
    %v3680 = vrot.slane %v3672, %v3679
    %v3682 = vunpack.c.l.s4 1934713408
    %v3683 = vunpack.c.0.s8 %v3682
    %v3684 = vlaneseq
    %v3685 = vshrl.u32 %v3684, 7
    %v3686 = vsub.s32 %v3683, %v3685
    %v3687 = vrot.slane %v3673, %v3686
    %v3688 = vcombine.low %v3623, %v3639
    %v3689 = vcombine.high %v3623, %v3639
    %v3691 = vunpack.c.l.s4 1934713408
    %v3692 = vunpack.c.0.s8 %v3691
    %v3693 = vlaneseq
    %v3694 = vshrl.u32 %v3693, 7
    %v3695 = vsub.s32 %v3692, %v3694
    %v3696 = vrot.slane %v3688, %v3695
    %v3698 = vunpack.c.l.s4 1934713408
    %v3699 = vunpack.c.0.s8 %v3698
    %v3700 = vlaneseq
    %v3701 = vshrl.u32 %v3700, 7
    %v3702 = vsub.s32 %v3699, %v3701
    %v3703 = vrot.slane %v3689, %v3702
    %v3704 = vcombine.low %v3648, %v3680
    %v3705 = vcombine.high %v3648, %v3680
    %v3706 = vcombine.low %v3655, %v3687
    %v3707 = vcombine.high %v3655, %v3687
    %v3708 = vcombine.low %v3664, %v3696
    %v3709 = vcombine.high %v3664, %v3696
    %v3710 = vcombine.low %v3671, %v3703
    %v3711 = vcombine.high %v3671, %v3703
    %v3712 = vcombine.low %v3344, %v3351
    %v3714 = vunpack.c.l.s4 1983009808
    %v3715 = vunpack.c.0.s8 %v3714
    %v3716 = vlaneseq
    %v3717 = vshrl.u32 %v3716, 7
    %v3718 = vsub.s32 %v3715, %v3717
    %v3719 = vrot.slane %v3712, %v3718
    %v3720 = vcombine.low %v3368, %v3369
    %v3722 = vunpack.c.l.s4 1983009808
    %v3723 = vunpack.c.0.s8 %v3722
    %v3724 = vlaneseq
    %v3725 = vshrl.u32 %v3724, 7
    %v3726 = vsub.s32 %v3723, %v3725
    %v3727 = vrot.slane %v3720, %v3726
    %v3728 = vcombine.low %v3360, %v3367
    %v3730 = vunpack.c.l.s4 1983009808
    %v3731 = vunpack.c.0.s8 %v3730
    %v3732 = vlaneseq
    %v3733 = vshrl.u32 %v3732, 7
    %v3734 = vsub.s32 %v3731, %v3733
    %v3735 = vrot.slane %v3728, %v3734
    %v3736 = vcombine.low %v3370, %v3371
    %v3738 = vunpack.c.l.s4 1983009808
    %v3739 = vunpack.c.0.s8 %v3738
    %v3740 = vlaneseq
    %v3741 = vshrl.u32 %v3740, 7
    %v3742 = vsub.s32 %v3739, %v3741
    %v3743 = vrot.slane %v3736, %v3742
    %v3744 = vcombine.low %v3719, %v3727
    %v3745 = vcombine.high %v3719, %v3727
    %v3747 = vunpack.c.l.s4 1934713408
    %v3748 = vunpack.c.0.s8 %v3747
    %v3749 = vlaneseq
    %v3750 = vshrl.u32 %v3749, 7
    %v3751 = vsub.s32 %v3748, %v3750
    %v3752 = vrot.slane %v3744, %v3751
    %v3754 = vunpack.c.l.s4 1934713408
    %v3755 = vunpack.c.0.s8 %v3754
    %v3756 = vlaneseq
    %v3757 = vshrl.u32 %v3756, 7
    %v3758 = vsub.s32 %v3755, %v3757
    %v3759 = vrot.slane %v3745, %v3758
    %v3760 = vcombine.low %v3735, %v3743
    %v3761 = vcombine.high %v3735, %v3743
    %v3763 = vunpack.c.l.s4 1934713408
    %v3764 = vunpack.c.0.s8 %v3763
    %v3765 = vlaneseq
    %v3766 = vshrl.u32 %v3765, 7
    %v3767 = vsub.s32 %v3764, %v3766
    %v3768 = vrot.slane %v3760, %v3767
    %v3770 = vunpack.c.l.s4 1934713408
    %v3771 = vunpack.c.0.s8 %v3770
    %v3772 = vlaneseq
    %v3773 = vshrl.u32 %v3772, 7
    %v3774 = vsub.s32 %v3771, %v3773
    %v3775 = vrot.slane %v3761, %v3774
    %v3776 = vcombine.low %v3752, %v3768
    %v3777 = vcombine.high %v3752, %v3768
    %v3778 = vcombine.low %v3759, %v3775
    %v3779 = vcombine.high %v3759, %v3775
    %v3780 = vcombine.low %v3500, %v3502
    %v3781 = vcombine.high %v3500, %v3502
    %v3783 = vunpack.c.l.s4 1983009808
    %v3784 = vunpack.c.0.s8 %v3783
    %v3785 = vlaneseq
    %v3786 = vshrl.u32 %v3785, 7
    %v3787 = vsub.s32 %v3784, %v3786
    %v3788 = vrot.slane %v3780, %v3787
    %v3790 = vunpack.c.l.s4 1983009808
    %v3791 = vunpack.c.0.s8 %v3790
    %v3792 = vlaneseq
    %v3793 = vshrl.u32 %v3792, 7
    %v3794 = vsub.s32 %v3791, %v3793
    %v3795 = vrot.slane %v3781, %v3794
    %v3796 = vcombine.low %v3501, %v3503
    %v3797 = vcombine.high %v3501, %v3503
    %v3799 = vunpack.c.l.s4 1983009808
    %v3800 = vunpack.c.0.s8 %v3799
    %v3801 = vlaneseq
    %v3802 = vshrl.u32 %v3801, 7
    %v3803 = vsub.s32 %v3800, %v3802
    %v3804 = vrot.slane %v3796, %v3803
    %v3806 = vunpack.c.l.s4 1983009808
    %v3807 = vunpack.c.0.s8 %v3806
    %v3808 = vlaneseq
    %v3809 = vshrl.u32 %v3808, 7
    %v3810 = vsub.s32 %v3807, %v3809
    %v3811 = vrot.slane %v3797, %v3810
    %v3812 = vcombine.low %v3504, %v3506
    %v3813 = vcombine.high %v3504, %v3506
    %v3815 = vunpack.c.l.s4 1983009808
    %v3816 = vunpack.c.0.s8 %v3815
    %v3817 = vlaneseq
    %v3818 = vshrl.u32 %v3817, 7
    %v3819 = vsub.s32 %v3816, %v3818
    %v3820 = vrot.slane %v3812, %v3819
    %v3822 = vunpack.c.l.s4 1983009808
    %v3823 = vunpack.c.0.s8 %v3822
    %v3824 = vlaneseq
    %v3825 = vshrl.u32 %v3824, 7
    %v3826 = vsub.s32 %v3823, %v3825
    %v3827 = vrot.slane %v3813, %v3826
    %v3828 = vcombine.low %v3505, %v3507
    %v3829 = vcombine.high %v3505, %v3507
    %v3831 = vunpack.c.l.s4 1983009808
    %v3832 = vunpack.c.0.s8 %v3831
    %v3833 = vlaneseq
    %v3834 = vshrl.u32 %v3833, 7
    %v3835 = vsub.s32 %v3832, %v3834
    %v3836 = vrot.slane %v3828, %v3835
    %v3838 = vunpack.c.l.s4 1983009808
    %v3839 = vunpack.c.0.s8 %v3838
    %v3840 = vlaneseq
    %v3841 = vshrl.u32 %v3840, 7
    %v3842 = vsub.s32 %v3839, %v3841
    %v3843 = vrot.slane %v3829, %v3842
    %v3844 = vcombine.low %v3788, %v3804
    %v3845 = vcombine.high %v3788, %v3804
    %v3847 = vunpack.c.l.s4 1934713408
    %v3848 = vunpack.c.0.s8 %v3847
    %v3849 = vlaneseq
    %v3850 = vshrl.u32 %v3849, 7
    %v3851 = vsub.s32 %v3848, %v3850
    %v3852 = vrot.slane %v3844, %v3851
    %v3854 = vunpack.c.l.s4 1934713408
    %v3855 = vunpack.c.0.s8 %v3854
    %v3856 = vlaneseq
    %v3857 = vshrl.u32 %v3856, 7
    %v3858 = vsub.s32 %v3855, %v3857
    %v3859 = vrot.slane %v3845, %v3858
    %v3860 = vcombine.low %v3795, %v3811
    %v3861 = vcombine.high %v3795, %v3811
    %v3863 = vunpack.c.l.s4 1934713408
    %v3864 = vunpack.c.0.s8 %v3863
    %v3865 = vlaneseq
    %v3866 = vshrl.u32 %v3865, 7
    %v3867 = vsub.s32 %v3864, %v3866
    %v3868 = vrot.slane %v3860, %v3867
    %v3870 = vunpack.c.l.s4 1934713408
    %v3871 = vunpack.c.0.s8 %v3870
    %v3872 = vlaneseq
    %v3873 = vshrl.u32 %v3872, 7
    %v3874 = vsub.s32 %v3871, %v3873
    %v3875 = vrot.slane %v3861, %v3874
    %v3876 = vcombine.low %v3820, %v3836
    %v3877 = vcombine.high %v3820, %v3836
    %v3879 = vunpack.c.l.s4 1934713408
    %v3880 = vunpack.c.0.s8 %v3879
    %v3881 = vlaneseq
    %v3882 = vshrl.u32 %v3881, 7
    %v3883 = vsub.s32 %v3880, %v3882
    %v3884 = vrot.slane %v3876, %v3883
    %v3886 = vunpack.c.l.s4 1934713408
    %v3887 = vunpack.c.0.s8 %v3886
    %v3888 = vlaneseq
    %v3889 = vshrl.u32 %v3888, 7
    %v3890 = vsub.s32 %v3887, %v3889
    %v3891 = vrot.slane %v3877, %v3890
    %v3892 = vcombine.low %v3827, %v3843
    %v3893 = vcombine.high %v3827, %v3843
    %v3895 = vunpack.c.l.s4 1934713408
    %v3896 = vunpack.c.0.s8 %v3895
    %v3897 = vlaneseq
    %v3898 = vshrl.u32 %v3897, 7
    %v3899 = vsub.s32 %v3896, %v3898
    %v3900 = vrot.slane %v3892, %v3899
    %v3902 = vunpack.c.l.s4 1934713408
    %v3903 = vunpack.c.0.s8 %v3902
    %v3904 = vlaneseq
    %v3905 = vshrl.u32 %v3904, 7
    %v3906 = vsub.s32 %v3903, %v3905
    %v3907 = vrot.slane %v3893, %v3906
    %v3908 = vcombine.low %v3852, %v3884
    %v3909 = vcombine.high %v3852, %v3884
    %v3910 = vcombine.low %v3859, %v3891
    %v3911 = vcombine.high %v3859, %v3891
    %v3912 = vcombine.low %v3868, %v3900
    %v3913 = vcombine.high %v3868, %v3900
    %v3914 = vcombine.low %v3875, %v3907
    %v3915 = vcombine.high %v3875, %v3907
    %v3916 = vcombine.low %v3548, %v3555
    %v3918 = vunpack.c.l.s4 1983009808
    %v3919 = vunpack.c.0.s8 %v3918
    %v3920 = vlaneseq
    %v3921 = vshrl.u32 %v3920, 7
    %v3922 = vsub.s32 %v3919, %v3921
    %v3923 = vrot.slane %v3916, %v3922
    %v3924 = vcombine.low %v3572, %v3573
    %v3926 = vunpack.c.l.s4 1983009808
    %v3927 = vunpack.c.0.s8 %v3926
    %v3928 = vlaneseq
    %v3929 = vshrl.u32 %v3928, 7
    %v3930 = vsub.s32 %v3927, %v3929
    %v3931 = vrot.slane %v3924, %v3930
    %v3932 = vcombine.low %v3564, %v3571
    %v3934 = vunpack.c.l.s4 1983009808
    %v3935 = vunpack.c.0.s8 %v3934
    %v3936 = vlaneseq
    %v3937 = vshrl.u32 %v3936, 7
    %v3938 = vsub.s32 %v3935, %v3937
    %v3939 = vrot.slane %v3932, %v3938
    %v3940 = vcombine.low %v3574, %v3575
    %v3942 = vunpack.c.l.s4 1983009808
    %v3943 = vunpack.c.0.s8 %v3942
    %v3944 = vlaneseq
    %v3945 = vshrl.u32 %v3944, 7
    %v3946 = vsub.s32 %v3943, %v3945
    %v3947 = vrot.slane %v3940, %v3946
    %v3948 = vcombine.low %v3923, %v3931
    %v3949 = vcombine.high %v3923, %v3931
    %v3951 = vunpack.c.l.s4 1934713408
    %v3952 = vunpack.c.0.s8 %v3951
    %v3953 = vlaneseq
    %v3954 = vshrl.u32 %v3953, 7
    %v3955 = vsub.s32 %v3952, %v3954
    %v3956 = vrot.slane %v3948, %v3955
    %v3958 = vunpack.c.l.s4 1934713408
    %v3959 = vunpack.c.0.s8 %v3958
    %v3960 = vlaneseq
    %v3961 = vshrl.u32 %v3960, 7
    %v3962 = vsub.s32 %v3959, %v3961
    %v3963 = vrot.slane %v3949, %v3962
    %v3964 = vcombine.low %v3939, %v3947
    %v3965 = vcombine.high %v3939, %v3947
    %v3967 = vunpack.c.l.s4 1934713408
    %v3968 = vunpack.c.0.s8 %v3967
    %v3969 = vlaneseq
    %v3970 = vshrl.u32 %v3969, 7
    %v3971 = vsub.s32 %v3968, %v3970
    %v3972 = vrot.slane %v3964, %v3971
    %v3974 = vunpack.c.l.s4 1934713408
    %v3975 = vunpack.c.0.s8 %v3974
    %v3976 = vlaneseq
    %v3977 = vshrl.u32 %v3976, 7
    %v3978 = vsub.s32 %v3975, %v3977
    %v3979 = vrot.slane %v3965, %v3978
    %v3980 = vcombine.low %v3956, %v3972
    %v3981 = vcombine.high %v3956, %v3972
    %v3982 = vcombine.low %v3963, %v3979
    %v3983 = vcombine.high %v3963, %v3979
    %v3985 = vsel %vm1014, %v3704, 0
    %v3988 = vsel %vm1014, %v3708, 0
    %3990 = vmatprep.subr.mxu0 0.0
    %3991 = vmatpush1.xpose.msra.mxu0 0.0
    %3992 = vmatprep.subr.mxu0 0.0
    %3993 = vmatpush1.xpose.msra.mxu0 0.0
    %3994 = vmatprep.subr.mxu0 0.0
    %3995 = vmatpush1.xpose.msra.mxu0 0.0
    %3996 = vmatprep.subr.mxu0 0.0
    %3997 = vmatpush1.xpose.msra.mxu0 0.0
    %3998 = vmatprep.subr.mxu0 0.0
    %3999 = vmatpush1.xpose.msra.mxu0 0.0
    %4000 = vmatprep.subr.mxu0 0.0
    %4001 = vmatpush1.xpose.msra.mxu0 0.0
    %4002 = vmatprep.subr.mxu0 0.0
    %4003 = vmatpush1.xpose.msra.mxu0 0.0
    %4004 = vmatprep.subr.mxu0 0.0
    %4005 = vmatpush1.xpose.msra.mxu0 0.0
    %4006 = vmatprep.subr.mxu0 0.0
    %4007 = vmatpush1.xpose.msra.mxu0 0.0
    %4008 = vmatprep.subr.mxu0 0.0
    %4009 = vmatpush1.xpose.msra.mxu0 0.0
    %4010 = vmatprep.subr.mxu0 0.0
    %4011 = vmatpush1.xpose.msra.mxu0 0.0
    %4012 = vmatprep.subr.mxu0 0.0
    %4013 = vmatpush1.xpose.msra.mxu0 0.0
    %4014 = vmatprep.subr.mxu0 0.0
    %4015 = vmatpush1.xpose.msra.mxu0 0.0
    %4016 = vmatprep.subr.mxu0 0.0
    %4017 = vmatpush1.xpose.msra.mxu0 0.0
    %4018 = vmatprep.subr.mxu0 0.0
    %4019 = vmatpush1.xpose.msra.mxu0 0.0
    %4020 = vmatprep.subr.mxu0 0.0
    %4021 = vmatpush1.xpose.msra.mxu0 %v3988
    %4022 = vmatprep.subr.mxu0 0.0
    %4023 = vmatpush2.xpose.msra.mxu0 0.0
    %4024 = vmatprep.subr.mxu0 0.0
    %4025 = vmatpush2.xpose.msra.mxu0 0.0
    %4026 = vmatprep.subr.mxu0 0.0
    %4027 = vmatpush2.xpose.msra.mxu0 0.0
    %4028 = vmatprep.subr.mxu0 0.0
    %4029 = vmatpush2.xpose.msra.mxu0 0.0
    %4030 = vmatprep.subr.mxu0 0.0
    %4031 = vmatpush2.xpose.msra.mxu0 0.0
    %4032 = vmatprep.subr.mxu0 0.0
    %4033 = vmatpush2.xpose.msra.mxu0 0.0
    %4034 = vmatprep.subr.mxu0 0.0
    %4035 = vmatpush2.xpose.msra.mxu0 0.0
    %4036 = vmatprep.subr.mxu0 0.0
    %4037 = vmatpush2.xpose.msra.mxu0 0.0
    %4038 = vmatprep.subr.mxu0 0.0
    %4039 = vmatpush2.xpose.msra.mxu0 0.0
    %4040 = vmatprep.subr.mxu0 0.0
    %4041 = vmatpush2.xpose.msra.mxu0 0.0
    %4042 = vmatprep.subr.mxu0 0.0
    %4043 = vmatpush2.xpose.msra.mxu0 0.0
    %4044 = vmatprep.subr.mxu0 0.0
    %4045 = vmatpush2.xpose.msra.mxu0 0.0
    %4046 = vmatprep.subr.mxu0 0.0
    %4047 = vmatpush2.xpose.msra.mxu0 0.0
    %4048 = vmatprep.subr.mxu0 0.0
    %4049 = vmatpush2.xpose.msra.mxu0 0.0
    %4050 = vmatprep.subr.mxu0 0.0
    %4051 = vmatpush2.xpose.msra.mxu0 0.0
    %4052 = vmatprep.subr.mxu0 0.0
    %4053 = vmatpush2.xpose.msra.mxu0 0.0
    %4054 = vmatprep.mubr.f32.mxu0 0.0
    %4055 = vmatmul.mubr.f32.gmra.mxu0 %v3985
    %v4056 = vpop.f32.mrf.mxu0
    %v4057 = vadd.f32 0.0, %v4056
    %v4058 = vpop.f32.mrf.mxu0
    %4059 = vdwg.mxu0
    %v4061 = vsel %vm1014, %v3705, 0
    %v4064 = vsel %vm1014, %v3709, 0
    %4066 = vmatprep.subr.mxu0 0.0
    %4067 = vmatpush1.xpose.msra.mxu0 0.0
    %4068 = vmatprep.subr.mxu0 0.0
    %4069 = vmatpush1.xpose.msra.mxu0 0.0
    %4070 = vmatprep.subr.mxu0 0.0
    %4071 = vmatpush1.xpose.msra.mxu0 0.0
    %4072 = vmatprep.subr.mxu0 0.0
    %4073 = vmatpush1.xpose.msra.mxu0 0.0
    %4074 = vmatprep.subr.mxu0 0.0
    %4075 = vmatpush1.xpose.msra.mxu0 0.0
    %4076 = vmatprep.subr.mxu0 0.0
    %4077 = vmatpush1.xpose.msra.mxu0 0.0
    %4078 = vmatprep.subr.mxu0 0.0
    %4079 = vmatpush1.xpose.msra.mxu0 0.0
    %4080 = vmatprep.subr.mxu0 0.0
    %4081 = vmatpush1.xpose.msra.mxu0 0.0
    %4082 = vmatprep.subr.mxu0 0.0
    %4083 = vmatpush1.xpose.msra.mxu0 0.0
    %4084 = vmatprep.subr.mxu0 0.0
    %4085 = vmatpush1.xpose.msra.mxu0 0.0
    %4086 = vmatprep.subr.mxu0 0.0
    %4087 = vmatpush1.xpose.msra.mxu0 0.0
    %4088 = vmatprep.subr.mxu0 0.0
    %4089 = vmatpush1.xpose.msra.mxu0 0.0
    %4090 = vmatprep.subr.mxu0 0.0
    %4091 = vmatpush1.xpose.msra.mxu0 0.0
    %4092 = vmatprep.subr.mxu0 0.0
    %4093 = vmatpush1.xpose.msra.mxu0 0.0
    %4094 = vmatprep.subr.mxu0 0.0
    %4095 = vmatpush1.xpose.msra.mxu0 0.0
    %4096 = vmatprep.subr.mxu0 0.0
    %4097 = vmatpush1.xpose.msra.mxu0 %v4064
    %4098 = vmatprep.subr.mxu0 0.0
    %4099 = vmatpush2.xpose.msra.mxu0 0.0
    %4100 = vmatprep.subr.mxu0 0.0
    %4101 = vmatpush2.xpose.msra.mxu0 0.0
    %4102 = vmatprep.subr.mxu0 0.0
    %4103 = vmatpush2.xpose.msra.mxu0 0.0
    %4104 = vmatprep.subr.mxu0 0.0
    %4105 = vmatpush2.xpose.msra.mxu0 0.0
    %4106 = vmatprep.subr.mxu0 0.0
    %4107 = vmatpush2.xpose.msra.mxu0 0.0
    %4108 = vmatprep.subr.mxu0 0.0
    %4109 = vmatpush2.xpose.msra.mxu0 0.0
    %4110 = vmatprep.subr.mxu0 0.0
    %4111 = vmatpush2.xpose.msra.mxu0 0.0
    %4112 = vmatprep.subr.mxu0 0.0
    %4113 = vmatpush2.xpose.msra.mxu0 0.0
    %4114 = vmatprep.subr.mxu0 0.0
    %4115 = vmatpush2.xpose.msra.mxu0 0.0
    %4116 = vmatprep.subr.mxu0 0.0
    %4117 = vmatpush2.xpose.msra.mxu0 0.0
    %4118 = vmatprep.subr.mxu0 0.0
    %4119 = vmatpush2.xpose.msra.mxu0 0.0
    %4120 = vmatprep.subr.mxu0 0.0
    %4121 = vmatpush2.xpose.msra.mxu0 0.0
    %4122 = vmatprep.subr.mxu0 0.0
    %4123 = vmatpush2.xpose.msra.mxu0 0.0
    %4124 = vmatprep.subr.mxu0 0.0
    %4125 = vmatpush2.xpose.msra.mxu0 0.0
    %4126 = vmatprep.subr.mxu0 0.0
    %4127 = vmatpush2.xpose.msra.mxu0 0.0
    %4128 = vmatprep.subr.mxu0 0.0
    %4129 = vmatpush2.xpose.msra.mxu0 0.0
    %4130 = vmatprep.mubr.f32.mxu0 0.0
    %4131 = vmatmul.mubr.f32.gmra.mxu0 %v4061
    %v4132 = vpop.f32.mrf.mxu0
    %v4133 = vadd.f32 0.0, %v4132
    %v4134 = vpop.f32.mrf.mxu0
    %4135 = vdwg.mxu0
    %v4137 = vsel %vm1014, %v3706, 0
    %v4140 = vsel %vm1014, %v3710, 0
    %4142 = vmatprep.subr.mxu0 0.0
    %4143 = vmatpush1.xpose.msra.mxu0 0.0
    %4144 = vmatprep.subr.mxu0 0.0
    %4145 = vmatpush1.xpose.msra.mxu0 0.0
    %4146 = vmatprep.subr.mxu0 0.0
    %4147 = vmatpush1.xpose.msra.mxu0 0.0
    %4148 = vmatprep.subr.mxu0 0.0
    %4149 = vmatpush1.xpose.msra.mxu0 0.0
    %4150 = vmatprep.subr.mxu0 0.0
    %4151 = vmatpush1.xpose.msra.mxu0 0.0
    %4152 = vmatprep.subr.mxu0 0.0
    %4153 = vmatpush1.xpose.msra.mxu0 0.0
    %4154 = vmatprep.subr.mxu0 0.0
    %4155 = vmatpush1.xpose.msra.mxu0 0.0
    %4156 = vmatprep.subr.mxu0 0.0
    %4157 = vmatpush1.xpose.msra.mxu0 0.0
    %4158 = vmatprep.subr.mxu0 0.0
    %4159 = vmatpush1.xpose.msra.mxu0 0.0
    %4160 = vmatprep.subr.mxu0 0.0
    %4161 = vmatpush1.xpose.msra.mxu0 0.0
    %4162 = vmatprep.subr.mxu0 0.0
    %4163 = vmatpush1.xpose.msra.mxu0 0.0
    %4164 = vmatprep.subr.mxu0 0.0
    %4165 = vmatpush1.xpose.msra.mxu0 0.0
    %4166 = vmatprep.subr.mxu0 0.0
    %4167 = vmatpush1.xpose.msra.mxu0 0.0
    %4168 = vmatprep.subr.mxu0 0.0
    %4169 = vmatpush1.xpose.msra.mxu0 0.0
    %4170 = vmatprep.subr.mxu0 0.0
    %4171 = vmatpush1.xpose.msra.mxu0 0.0
    %4172 = vmatprep.subr.mxu0 0.0
    %4173 = vmatpush1.xpose.msra.mxu0 %v4140
    %4174 = vmatprep.subr.mxu0 0.0
    %4175 = vmatpush2.xpose.msra.mxu0 0.0
    %4176 = vmatprep.subr.mxu0 0.0
    %4177 = vmatpush2.xpose.msra.mxu0 0.0
    %4178 = vmatprep.subr.mxu0 0.0
    %4179 = vmatpush2.xpose.msra.mxu0 0.0
    %4180 = vmatprep.subr.mxu0 0.0
    %4181 = vmatpush2.xpose.msra.mxu0 0.0
    %4182 = vmatprep.subr.mxu0 0.0
    %4183 = vmatpush2.xpose.msra.mxu0 0.0
    %4184 = vmatprep.subr.mxu0 0.0
    %4185 = vmatpush2.xpose.msra.mxu0 0.0
    %4186 = vmatprep.subr.mxu0 0.0
    %4187 = vmatpush2.xpose.msra.mxu0 0.0
    %4188 = vmatprep.subr.mxu0 0.0
    %4189 = vmatpush2.xpose.msra.mxu0 0.0
    %4190 = vmatprep.subr.mxu0 0.0
    %4191 = vmatpush2.xpose.msra.mxu0 0.0
    %4192 = vmatprep.subr.mxu0 0.0
    %4193 = vmatpush2.xpose.msra.mxu0 0.0
    %4194 = vmatprep.subr.mxu0 0.0
    %4195 = vmatpush2.xpose.msra.mxu0 0.0
    %4196 = vmatprep.subr.mxu0 0.0
    %4197 = vmatpush2.xpose.msra.mxu0 0.0
    %4198 = vmatprep.subr.mxu0 0.0
    %4199 = vmatpush2.xpose.msra.mxu0 0.0
    %4200 = vmatprep.subr.mxu0 0.0
    %4201 = vmatpush2.xpose.msra.mxu0 0.0
    %4202 = vmatprep.subr.mxu0 0.0
    %4203 = vmatpush2.xpose.msra.mxu0 0.0
    %4204 = vmatprep.subr.mxu0 0.0
    %4205 = vmatpush2.xpose.msra.mxu0 0.0
    %4206 = vmatprep.mubr.f32.mxu0 0.0
    %4207 = vmatmul.mubr.f32.gmra.mxu0 %v4137
    %v4208 = vpop.f32.mrf.mxu0
    %v4209 = vadd.f32 0.0, %v4208
    %v4210 = vpop.f32.mrf.mxu0
    %4211 = vdwg.mxu0
    %v4213 = vsel %vm1014, %v3707, 0
    %v4216 = vsel %vm1014, %v3711, 0
    %4218 = vmatprep.subr.mxu0 0.0
    %4219 = vmatpush1.xpose.msra.mxu0 0.0
    %4220 = vmatprep.subr.mxu0 0.0
    %4221 = vmatpush1.xpose.msra.mxu0 0.0
    %4222 = vmatprep.subr.mxu0 0.0
    %4223 = vmatpush1.xpose.msra.mxu0 0.0
    %4224 = vmatprep.subr.mxu0 0.0
    %4225 = vmatpush1.xpose.msra.mxu0 0.0
    %4226 = vmatprep.subr.mxu0 0.0
    %4227 = vmatpush1.xpose.msra.mxu0 0.0
    %4228 = vmatprep.subr.mxu0 0.0
    %4229 = vmatpush1.xpose.msra.mxu0 0.0
    %4230 = vmatprep.subr.mxu0 0.0
    %4231 = vmatpush1.xpose.msra.mxu0 0.0
    %4232 = vmatprep.subr.mxu0 0.0
    %4233 = vmatpush1.xpose.msra.mxu0 0.0
    %4234 = vmatprep.subr.mxu0 0.0
    %4235 = vmatpush1.xpose.msra.mxu0 0.0
    %4236 = vmatprep.subr.mxu0 0.0
    %4237 = vmatpush1.xpose.msra.mxu0 0.0
    %4238 = vmatprep.subr.mxu0 0.0
    %4239 = vmatpush1.xpose.msra.mxu0 0.0
    %4240 = vmatprep.subr.mxu0 0.0
    %4241 = vmatpush1.xpose.msra.mxu0 0.0
    %4242 = vmatprep.subr.mxu0 0.0
    %4243 = vmatpush1.xpose.msra.mxu0 0.0
    %4244 = vmatprep.subr.mxu0 0.0
    %4245 = vmatpush1.xpose.msra.mxu0 0.0
    %4246 = vmatprep.subr.mxu0 0.0
    %4247 = vmatpush1.xpose.msra.mxu0 0.0
    %4248 = vmatprep.subr.mxu0 0.0
    %4249 = vmatpush1.xpose.msra.mxu0 %v4216
    %4250 = vmatprep.subr.mxu0 0.0
    %4251 = vmatpush2.xpose.msra.mxu0 0.0
    %4252 = vmatprep.subr.mxu0 0.0
    %4253 = vmatpush2.xpose.msra.mxu0 0.0
    %4254 = vmatprep.subr.mxu0 0.0
    %4255 = vmatpush2.xpose.msra.mxu0 0.0
    %4256 = vmatprep.subr.mxu0 0.0
    %4257 = vmatpush2.xpose.msra.mxu0 0.0
    %4258 = vmatprep.subr.mxu0 0.0
    %4259 = vmatpush2.xpose.msra.mxu0 0.0
    %4260 = vmatprep.subr.mxu0 0.0
    %4261 = vmatpush2.xpose.msra.mxu0 0.0
    %4262 = vmatprep.subr.mxu0 0.0
    %4263 = vmatpush2.xpose.msra.mxu0 0.0
    %4264 = vmatprep.subr.mxu0 0.0
    %4265 = vmatpush2.xpose.msra.mxu0 0.0
    %4266 = vmatprep.subr.mxu0 0.0
    %4267 = vmatpush2.xpose.msra.mxu0 0.0
    %4268 = vmatprep.subr.mxu0 0.0
    %4269 = vmatpush2.xpose.msra.mxu0 0.0
    %4270 = vmatprep.subr.mxu0 0.0
    %4271 = vmatpush2.xpose.msra.mxu0 0.0
    %4272 = vmatprep.subr.mxu0 0.0
    %4273 = vmatpush2.xpose.msra.mxu0 0.0
    %4274 = vmatprep.subr.mxu0 0.0
    %4275 = vmatpush2.xpose.msra.mxu0 0.0
    %4276 = vmatprep.subr.mxu0 0.0
    %4277 = vmatpush2.xpose.msra.mxu0 0.0
    %4278 = vmatprep.subr.mxu0 0.0
    %4279 = vmatpush2.xpose.msra.mxu0 0.0
    %4280 = vmatprep.subr.mxu0 0.0
    %4281 = vmatpush2.xpose.msra.mxu0 0.0
    %4282 = vmatprep.mubr.f32.mxu0 0.0
    %4283 = vmatmul.mubr.f32.gmra.mxu0 %v4213
    %v4284 = vpop.f32.mrf.mxu0
    %v4285 = vadd.f32 0.0, %v4284
    %v4286 = vpop.f32.mrf.mxu0
    %4287 = vdwg.mxu0
    %v4289 = vsel %vm1014, %v3908, 0
    %v4292 = vsel %vm1014, %v3912, 0
    %4294 = vmatprep.subr.mxu0 0.0
    %4295 = vmatpush1.xpose.msra.mxu0 0.0
    %4296 = vmatprep.subr.mxu0 0.0
    %4297 = vmatpush1.xpose.msra.mxu0 0.0
    %4298 = vmatprep.subr.mxu0 0.0
    %4299 = vmatpush1.xpose.msra.mxu0 0.0
    %4300 = vmatprep.subr.mxu0 0.0
    %4301 = vmatpush1.xpose.msra.mxu0 0.0
    %4302 = vmatprep.subr.mxu0 0.0
    %4303 = vmatpush1.xpose.msra.mxu0 0.0
    %4304 = vmatprep.subr.mxu0 0.0
    %4305 = vmatpush1.xpose.msra.mxu0 0.0
    %4306 = vmatprep.subr.mxu0 0.0
    %4307 = vmatpush1.xpose.msra.mxu0 0.0
    %4308 = vmatprep.subr.mxu0 0.0
    %4309 = vmatpush1.xpose.msra.mxu0 0.0
    %4310 = vmatprep.subr.mxu0 0.0
    %4311 = vmatpush1.xpose.msra.mxu0 0.0
    %4312 = vmatprep.subr.mxu0 0.0
    %4313 = vmatpush1.xpose.msra.mxu0 0.0
    %4314 = vmatprep.subr.mxu0 0.0
    %4315 = vmatpush1.xpose.msra.mxu0 0.0
    %4316 = vmatprep.subr.mxu0 0.0
    %4317 = vmatpush1.xpose.msra.mxu0 0.0
    %4318 = vmatprep.subr.mxu0 0.0
    %4319 = vmatpush1.xpose.msra.mxu0 0.0
    %4320 = vmatprep.subr.mxu0 0.0
    %4321 = vmatpush1.xpose.msra.mxu0 0.0
    %4322 = vmatprep.subr.mxu0 0.0
    %4323 = vmatpush1.xpose.msra.mxu0 0.0
    %4324 = vmatprep.subr.mxu0 0.0
    %4325 = vmatpush1.xpose.msra.mxu0 %v4292
    %4326 = vmatprep.subr.mxu0 0.0
    %4327 = vmatpush2.xpose.msra.mxu0 0.0
    %4328 = vmatprep.subr.mxu0 0.0
    %4329 = vmatpush2.xpose.msra.mxu0 0.0
    %4330 = vmatprep.subr.mxu0 0.0
    %4331 = vmatpush2.xpose.msra.mxu0 0.0
    %4332 = vmatprep.subr.mxu0 0.0
    %4333 = vmatpush2.xpose.msra.mxu0 0.0
    %4334 = vmatprep.subr.mxu0 0.0
    %4335 = vmatpush2.xpose.msra.mxu0 0.0
    %4336 = vmatprep.subr.mxu0 0.0
    %4337 = vmatpush2.xpose.msra.mxu0 0.0
    %4338 = vmatprep.subr.mxu0 0.0
    %4339 = vmatpush2.xpose.msra.mxu0 0.0
    %4340 = vmatprep.subr.mxu0 0.0
    %4341 = vmatpush2.xpose.msra.mxu0 0.0
    %4342 = vmatprep.subr.mxu0 0.0
    %4343 = vmatpush2.xpose.msra.mxu0 0.0
    %4344 = vmatprep.subr.mxu0 0.0
    %4345 = vmatpush2.xpose.msra.mxu0 0.0
    %4346 = vmatprep.subr.mxu0 0.0
    %4347 = vmatpush2.xpose.msra.mxu0 0.0
    %4348 = vmatprep.subr.mxu0 0.0
    %4349 = vmatpush2.xpose.msra.mxu0 0.0
    %4350 = vmatprep.subr.mxu0 0.0
    %4351 = vmatpush2.xpose.msra.mxu0 0.0
    %4352 = vmatprep.subr.mxu0 0.0
    %4353 = vmatpush2.xpose.msra.mxu0 0.0
    %4354 = vmatprep.subr.mxu0 0.0
    %4355 = vmatpush2.xpose.msra.mxu0 0.0
    %4356 = vmatprep.subr.mxu0 0.0
    %4357 = vmatpush2.xpose.msra.mxu0 0.0
    %4358 = vmatprep.mubr.f32.mxu0 0.0
    %4359 = vmatmul.mubr.f32.gmra.mxu0 %v4289
    %v4360 = vpop.f32.mrf.mxu0
    %v4361 = vadd.f32 0.0, %v4360
    %v4362 = vpop.f32.mrf.mxu0
    %4363 = vdwg.mxu0
    %v4365 = vsel %vm1014, %v3909, 0
    %v4368 = vsel %vm1014, %v3913, 0
    %4370 = vmatprep.subr.mxu0 0.0
    %4371 = vmatpush1.xpose.msra.mxu0 0.0
    %4372 = vmatprep.subr.mxu0 0.0
    %4373 = vmatpush1.xpose.msra.mxu0 0.0
    %4374 = vmatprep.subr.mxu0 0.0
    %4375 = vmatpush1.xpose.msra.mxu0 0.0
    %4376 = vmatprep.subr.mxu0 0.0
    %4377 = vmatpush1.xpose.msra.mxu0 0.0
    %4378 = vmatprep.subr.mxu0 0.0
    %4379 = vmatpush1.xpose.msra.mxu0 0.0
    %4380 = vmatprep.subr.mxu0 0.0
    %4381 = vmatpush1.xpose.msra.mxu0 0.0
    %4382 = vmatprep.subr.mxu0 0.0
    %4383 = vmatpush1.xpose.msra.mxu0 0.0
    %4384 = vmatprep.subr.mxu0 0.0
    %4385 = vmatpush1.xpose.msra.mxu0 0.0
    %4386 = vmatprep.subr.mxu0 0.0
    %4387 = vmatpush1.xpose.msra.mxu0 0.0
    %4388 = vmatprep.subr.mxu0 0.0
    %4389 = vmatpush1.xpose.msra.mxu0 0.0
    %4390 = vmatprep.subr.mxu0 0.0
    %4391 = vmatpush1.xpose.msra.mxu0 0.0
    %4392 = vmatprep.subr.mxu0 0.0
    %4393 = vmatpush1.xpose.msra.mxu0 0.0
    %4394 = vmatprep.subr.mxu0 0.0
    %4395 = vmatpush1.xpose.msra.mxu0 0.0
    %4396 = vmatprep.subr.mxu0 0.0
    %4397 = vmatpush1.xpose.msra.mxu0 0.0
    %4398 = vmatprep.subr.mxu0 0.0
    %4399 = vmatpush1.xpose.msra.mxu0 0.0
    %4400 = vmatprep.subr.mxu0 0.0
    %4401 = vmatpush1.xpose.msra.mxu0 %v4368
    %4402 = vmatprep.subr.mxu0 0.0
    %4403 = vmatpush2.xpose.msra.mxu0 0.0
    %4404 = vmatprep.subr.mxu0 0.0
    %4405 = vmatpush2.xpose.msra.mxu0 0.0
    %4406 = vmatprep.subr.mxu0 0.0
    %4407 = vmatpush2.xpose.msra.mxu0 0.0
    %4408 = vmatprep.subr.mxu0 0.0
    %4409 = vmatpush2.xpose.msra.mxu0 0.0
    %4410 = vmatprep.subr.mxu0 0.0
    %4411 = vmatpush2.xpose.msra.mxu0 0.0
    %4412 = vmatprep.subr.mxu0 0.0
    %4413 = vmatpush2.xpose.msra.mxu0 0.0
    %4414 = vmatprep.subr.mxu0 0.0
    %4415 = vmatpush2.xpose.msra.mxu0 0.0
    %4416 = vmatprep.subr.mxu0 0.0
    %4417 = vmatpush2.xpose.msra.mxu0 0.0
    %4418 = vmatprep.subr.mxu0 0.0
    %4419 = vmatpush2.xpose.msra.mxu0 0.0
    %4420 = vmatprep.subr.mxu0 0.0
    %4421 = vmatpush2.xpose.msra.mxu0 0.0
    %4422 = vmatprep.subr.mxu0 0.0
    %4423 = vmatpush2.xpose.msra.mxu0 0.0
    %4424 = vmatprep.subr.mxu0 0.0
    %4425 = vmatpush2.xpose.msra.mxu0 0.0
    %4426 = vmatprep.subr.mxu0 0.0
    %4427 = vmatpush2.xpose.msra.mxu0 0.0
    %4428 = vmatprep.subr.mxu0 0.0
    %4429 = vmatpush2.xpose.msra.mxu0 0.0
    %4430 = vmatprep.subr.mxu0 0.0
    %4431 = vmatpush2.xpose.msra.mxu0 0.0
    %4432 = vmatprep.subr.mxu0 0.0
    %4433 = vmatpush2.xpose.msra.mxu0 0.0
    %4434 = vmatprep.mubr.f32.mxu0 0.0
    %4435 = vmatmul.mubr.f32.gmra.mxu0 %v4365
    %v4436 = vpop.f32.mrf.mxu0
    %v4437 = vadd.f32 0.0, %v4436
    %v4438 = vpop.f32.mrf.mxu0
    %4439 = vdwg.mxu0
    %v4441 = vsel %vm1014, %v3910, 0
    %v4444 = vsel %vm1014, %v3914, 0
    %4446 = vmatprep.subr.mxu0 0.0
    %4447 = vmatpush1.xpose.msra.mxu0 0.0
    %4448 = vmatprep.subr.mxu0 0.0
    %4449 = vmatpush1.xpose.msra.mxu0 0.0
    %4450 = vmatprep.subr.mxu0 0.0
    %4451 = vmatpush1.xpose.msra.mxu0 0.0
    %4452 = vmatprep.subr.mxu0 0.0
    %4453 = vmatpush1.xpose.msra.mxu0 0.0
    %4454 = vmatprep.subr.mxu0 0.0
    %4455 = vmatpush1.xpose.msra.mxu0 0.0
    %4456 = vmatprep.subr.mxu0 0.0
    %4457 = vmatpush1.xpose.msra.mxu0 0.0
    %4458 = vmatprep.subr.mxu0 0.0
    %4459 = vmatpush1.xpose.msra.mxu0 0.0
    %4460 = vmatprep.subr.mxu0 0.0
    %4461 = vmatpush1.xpose.msra.mxu0 0.0
    %4462 = vmatprep.subr.mxu0 0.0
    %4463 = vmatpush1.xpose.msra.mxu0 0.0
    %4464 = vmatprep.subr.mxu0 0.0
    %4465 = vmatpush1.xpose.msra.mxu0 0.0
    %4466 = vmatprep.subr.mxu0 0.0
    %4467 = vmatpush1.xpose.msra.mxu0 0.0
    %4468 = vmatprep.subr.mxu0 0.0
    %4469 = vmatpush1.xpose.msra.mxu0 0.0
    %4470 = vmatprep.subr.mxu0 0.0
    %4471 = vmatpush1.xpose.msra.mxu0 0.0
    %4472 = vmatprep.subr.mxu0 0.0
    %4473 = vmatpush1.xpose.msra.mxu0 0.0
    %4474 = vmatprep.subr.mxu0 0.0
    %4475 = vmatpush1.xpose.msra.mxu0 0.0
    %4476 = vmatprep.subr.mxu0 0.0
    %4477 = vmatpush1.xpose.msra.mxu0 %v4444
    %4478 = vmatprep.subr.mxu0 0.0
    %4479 = vmatpush2.xpose.msra.mxu0 0.0
    %4480 = vmatprep.subr.mxu0 0.0
    %4481 = vmatpush2.xpose.msra.mxu0 0.0
    %4482 = vmatprep.subr.mxu0 0.0
    %4483 = vmatpush2.xpose.msra.mxu0 0.0
    %4484 = vmatprep.subr.mxu0 0.0
    %4485 = vmatpush2.xpose.msra.mxu0 0.0
    %4486 = vmatprep.subr.mxu0 0.0
    %4487 = vmatpush2.xpose.msra.mxu0 0.0
    %4488 = vmatprep.subr.mxu0 0.0
    %4489 = vmatpush2.xpose.msra.mxu0 0.0
    %4490 = vmatprep.subr.mxu0 0.0
    %4491 = vmatpush2.xpose.msra.mxu0 0.0
    %4492 = vmatprep.subr.mxu0 0.0
    %4493 = vmatpush2.xpose.msra.mxu0 0.0
    %4494 = vmatprep.subr.mxu0 0.0
    %4495 = vmatpush2.xpose.msra.mxu0 0.0
    %4496 = vmatprep.subr.mxu0 0.0
    %4497 = vmatpush2.xpose.msra.mxu0 0.0
    %4498 = vmatprep.subr.mxu0 0.0
    %4499 = vmatpush2.xpose.msra.mxu0 0.0
    %4500 = vmatprep.subr.mxu0 0.0
    %4501 = vmatpush2.xpose.msra.mxu0 0.0
    %4502 = vmatprep.subr.mxu0 0.0
    %4503 = vmatpush2.xpose.msra.mxu0 0.0
    %4504 = vmatprep.subr.mxu0 0.0
    %4505 = vmatpush2.xpose.msra.mxu0 0.0
    %4506 = vmatprep.subr.mxu0 0.0
    %4507 = vmatpush2.xpose.msra.mxu0 0.0
    %4508 = vmatprep.subr.mxu0 0.0
    %4509 = vmatpush2.xpose.msra.mxu0 0.0
    %4510 = vmatprep.mubr.f32.mxu0 0.0
    %4511 = vmatmul.mubr.f32.gmra.mxu0 %v4441
    %v4512 = vpop.f32.mrf.mxu0
    %v4513 = vadd.f32 0.0, %v4512
    %v4514 = vpop.f32.mrf.mxu0
    %4515 = vdwg.mxu0
    %v4517 = vsel %vm1014, %v3911, 0
    %v4520 = vsel %vm1014, %v3915, 0
    %4522 = vmatprep.subr.mxu0 0.0
    %4523 = vmatpush1.xpose.msra.mxu0 0.0
    %4524 = vmatprep.subr.mxu0 0.0
    %4525 = vmatpush1.xpose.msra.mxu0 0.0
    %4526 = vmatprep.subr.mxu0 0.0
    %4527 = vmatpush1.xpose.msra.mxu0 0.0
    %4528 = vmatprep.subr.mxu0 0.0
    %4529 = vmatpush1.xpose.msra.mxu0 0.0
    %4530 = vmatprep.subr.mxu0 0.0
    %4531 = vmatpush1.xpose.msra.mxu0 0.0
    %4532 = vmatprep.subr.mxu0 0.0
    %4533 = vmatpush1.xpose.msra.mxu0 0.0
    %4534 = vmatprep.subr.mxu0 0.0
    %4535 = vmatpush1.xpose.msra.mxu0 0.0
    %4536 = vmatprep.subr.mxu0 0.0
    %4537 = vmatpush1.xpose.msra.mxu0 0.0
    %4538 = vmatprep.subr.mxu0 0.0
    %4539 = vmatpush1.xpose.msra.mxu0 0.0
    %4540 = vmatprep.subr.mxu0 0.0
    %4541 = vmatpush1.xpose.msra.mxu0 0.0
    %4542 = vmatprep.subr.mxu0 0.0
    %4543 = vmatpush1.xpose.msra.mxu0 0.0
    %4544 = vmatprep.subr.mxu0 0.0
    %4545 = vmatpush1.xpose.msra.mxu0 0.0
    %4546 = vmatprep.subr.mxu0 0.0
    %4547 = vmatpush1.xpose.msra.mxu0 0.0
    %4548 = vmatprep.subr.mxu0 0.0
    %4549 = vmatpush1.xpose.msra.mxu0 0.0
    %4550 = vmatprep.subr.mxu0 0.0
    %4551 = vmatpush1.xpose.msra.mxu0 0.0
    %4552 = vmatprep.subr.mxu0 0.0
    %4553 = vmatpush1.xpose.msra.mxu0 %v4520
    %4554 = vmatprep.subr.mxu0 0.0
    %4555 = vmatpush2.xpose.msra.mxu0 0.0
    %4556 = vmatprep.subr.mxu0 0.0
    %4557 = vmatpush2.xpose.msra.mxu0 0.0
    %4558 = vmatprep.subr.mxu0 0.0
    %4559 = vmatpush2.xpose.msra.mxu0 0.0
    %4560 = vmatprep.subr.mxu0 0.0
    %4561 = vmatpush2.xpose.msra.mxu0 0.0
    %4562 = vmatprep.subr.mxu0 0.0
    %4563 = vmatpush2.xpose.msra.mxu0 0.0
    %4564 = vmatprep.subr.mxu0 0.0
    %4565 = vmatpush2.xpose.msra.mxu0 0.0
    %4566 = vmatprep.subr.mxu0 0.0
    %4567 = vmatpush2.xpose.msra.mxu0 0.0
    %4568 = vmatprep.subr.mxu0 0.0
    %4569 = vmatpush2.xpose.msra.mxu0 0.0
    %4570 = vmatprep.subr.mxu0 0.0
    %4571 = vmatpush2.xpose.msra.mxu0 0.0
    %4572 = vmatprep.subr.mxu0 0.0
    %4573 = vmatpush2.xpose.msra.mxu0 0.0
    %4574 = vmatprep.subr.mxu0 0.0
    %4575 = vmatpush2.xpose.msra.mxu0 0.0
    %4576 = vmatprep.subr.mxu0 0.0
    %4577 = vmatpush2.xpose.msra.mxu0 0.0
    %4578 = vmatprep.subr.mxu0 0.0
    %4579 = vmatpush2.xpose.msra.mxu0 0.0
    %4580 = vmatprep.subr.mxu0 0.0
    %4581 = vmatpush2.xpose.msra.mxu0 0.0
    %4582 = vmatprep.subr.mxu0 0.0
    %4583 = vmatpush2.xpose.msra.mxu0 0.0
    %4584 = vmatprep.subr.mxu0 0.0
    %4585 = vmatpush2.xpose.msra.mxu0 0.0
    %4586 = vmatprep.mubr.f32.mxu0 0.0
    %4587 = vmatmul.mubr.f32.gmra.mxu0 %v4517
    %v4588 = vpop.f32.mrf.mxu0
    %v4589 = vadd.f32 0.0, %v4588
    %v4590 = vpop.f32.mrf.mxu0
    %4591 = vdwg.mxu0
    %v4592 = vsel %vm1014, %v4057, -inf
    %4593 = vmax.xlane.f32.xlu0 %v4592
    %v4594 = vpop.xlane.xlu0 %4593
    %v4595 = vsel %vm1014, %v4133, -inf
    %4596 = vmax.xlane.f32.xlu0 %v4595
    %v4597 = vpop.xlane.xlu0 %4596
    %v4598 = vsel %vm1014, %v4209, -inf
    %4599 = vmax.xlane.f32.xlu0 %v4598
    %v4600 = vpop.xlane.xlu0 %4599
    %v4601 = vsel %vm1014, %v4285, -inf
    %4602 = vmax.xlane.f32.xlu0 %v4601
    %v4603 = vpop.xlane.xlu0 %4602
    %v4604 = vsel %vm1014, %v4361, -inf
    %4605 = vmax.xlane.f32.xlu0 %v4604
    %v4606 = vpop.xlane.xlu0 %4605
    %v4607 = vsel %vm1014, %v4437, -inf
    %4608 = vmax.xlane.f32.xlu0 %v4607
    %v4609 = vpop.xlane.xlu0 %4608
    %v4610 = vsel %vm1014, %v4513, -inf
    %4611 = vmax.xlane.f32.xlu0 %v4610
    %v4612 = vpop.xlane.xlu0 %4611
    %v4613 = vsel %vm1014, %v4589, -inf
    %4614 = vmax.xlane.f32.xlu0 %v4613
    %v4615 = vpop.xlane.xlu0 %4614
    %v4616 = vsub.f32 %v4057, %v4594
    %v4617 = vsub.f32 %v4133, %v4597
    %v4618 = vsub.f32 %v4209, %v4600
    %v4619 = vsub.f32 %v4285, %v4603
    %v4620 = vsub.f32 %v4361, %v4606
    %v4621 = vsub.f32 %v4437, %v4609
    %v4622 = vsub.f32 %v4513, %v4612
    %v4623 = vsub.f32 %v4589, %v4615
    %v4624 = vmul.f32 %v4616, 1.442695
    %v4625 = vpow.pop %v4624
    %v4626 = vmul.f32 %v4617, 1.442695
    %v4627 = vpow.pop %v4626
    %v4628 = vmul.f32 %v4618, 1.442695
    %v4629 = vpow.pop %v4628
    %v4630 = vmul.f32 %v4619, 1.442695
    %v4631 = vpow.pop %v4630
    %v4632 = vmul.f32 %v4620, 1.442695
    %v4633 = vpow.pop %v4632
    %v4634 = vmul.f32 %v4621, 1.442695
    %v4635 = vpow.pop %v4634
    %v4636 = vmul.f32 %v4622, 1.442695
    %v4637 = vpow.pop %v4636
    %v4638 = vmul.f32 %v4623, 1.442695
    %v4639 = vpow.pop %v4638
    %v4640 = vsel %vm1014, %v4625, 0.0
    %4641 = vadd.xlane.f32.xlu0 %v4640
    %v4642 = vpop.xlane.xlu0 %4641
    %v4643 = vsel %vm1014, %v4627, 0.0
    %4644 = vadd.xlane.f32.xlu0 %v4643
    %v4645 = vpop.xlane.xlu0 %4644
    %v4646 = vsel %vm1014, %v4629, 0.0
    %4647 = vadd.xlane.f32.xlu0 %v4646
    %v4648 = vpop.xlane.xlu0 %4647
    %v4649 = vsel %vm1014, %v4631, 0.0
    %4650 = vadd.xlane.f32.xlu0 %v4649
    %v4651 = vpop.xlane.xlu0 %4650
    %v4652 = vsel %vm1014, %v4633, 0.0
    %4653 = vadd.xlane.f32.xlu0 %v4652
    %v4654 = vpop.xlane.xlu0 %4653
    %v4655 = vsel %vm1014, %v4635, 0.0
    %4656 = vadd.xlane.f32.xlu0 %v4655
    %v4657 = vpop.xlane.xlu0 %4656
    %v4658 = vsel %vm1014, %v4637, 0.0
    %4659 = vadd.xlane.f32.xlu0 %v4658
    %v4660 = vpop.xlane.xlu0 %4659
    %v4661 = vsel %vm1014, %v4639, 0.0
    %4662 = vadd.xlane.f32.xlu0 %v4661
    %v4663 = vpop.xlane.xlu0 %4662
    %v4664 = vrcp.pop %v4642
    %v4665 = vrcp.pop %v4645
    %v4666 = vrcp.pop %v4648
    %v4667 = vrcp.pop %v4651
    %v4668 = vrcp.pop %v4654
    %v4669 = vrcp.pop %v4657
    %v4670 = vrcp.pop %v4660
    %v4671 = vrcp.pop %v4663
    %v4672 = vmul.f32 %v4625, %v4664
    %v4673 = vmul.f32 %v4627, %v4665
    %v4674 = vmul.f32 %v4629, %v4666
    %v4675 = vmul.f32 %v4631, %v4667
    %v4676 = vmul.f32 %v4633, %v4668
    %v4677 = vmul.f32 %v4635, %v4669
    %v4678 = vmul.f32 %v4637, %v4670
    %v4679 = vmul.f32 %v4639, %v4671
    %v4681 = vsel %vm1014, %v4672, 0
    %4683 = vmatprep.subr.mxu0 0.0
    %4684 = vmatpush1.msra.mxu0 0.0
    %4685 = vmatprep.subr.mxu0 0.0
    %4686 = vmatpush1.msra.mxu0 0.0
    %4687 = vmatprep.subr.mxu0 0.0
    %4688 = vmatpush1.msra.mxu0 0.0
    %4689 = vmatprep.subr.mxu0 0.0
    %4690 = vmatpush1.msra.mxu0 0.0
    %4691 = vmatprep.subr.mxu0 0.0
    %4692 = vmatpush1.msra.mxu0 0.0
    %4693 = vmatprep.subr.mxu0 0.0
    %4694 = vmatpush1.msra.mxu0 0.0
    %4695 = vmatprep.subr.mxu0 0.0
    %4696 = vmatpush1.msra.mxu0 0.0
    %4697 = vmatprep.subr.mxu0 0.0
    %4698 = vmatpush1.msra.mxu0 0.0
    %4699 = vmatprep.subr.mxu0 0.0
    %4700 = vmatpush1.msra.mxu0 0.0
    %4701 = vmatprep.subr.mxu0 0.0
    %4702 = vmatpush1.msra.mxu0 0.0
    %4703 = vmatprep.subr.mxu0 0.0
    %4704 = vmatpush1.msra.mxu0 0.0
    %4705 = vmatprep.subr.mxu0 0.0
    %4706 = vmatpush1.msra.mxu0 0.0
    %4707 = vmatprep.subr.mxu0 0.0
    %4708 = vmatpush1.msra.mxu0 0.0
    %4709 = vmatprep.subr.mxu0 0.0
    %4710 = vmatpush1.msra.mxu0 0.0
    %4711 = vmatprep.subr.mxu0 0.0
    %4712 = vmatpush1.msra.mxu0 0.0
    %4713 = vmatprep.subr.mxu0 0.0
    %4714 = vmatpush1.msra.mxu0 %v3776
    %4715 = vmatprep.subr.mxu0 0.0
    %4716 = vmatpush2.msra.mxu0 0.0
    %4717 = vmatprep.subr.mxu0 0.0
    %4718 = vmatpush2.msra.mxu0 0.0
    %4719 = vmatprep.subr.mxu0 0.0
    %4720 = vmatpush2.msra.mxu0 0.0
    %4721 = vmatprep.subr.mxu0 0.0
    %4722 = vmatpush2.msra.mxu0 0.0
    %4723 = vmatprep.subr.mxu0 0.0
    %4724 = vmatpush2.msra.mxu0 0.0
    %4725 = vmatprep.subr.mxu0 0.0
    %4726 = vmatpush2.msra.mxu0 0.0
    %4727 = vmatprep.subr.mxu0 0.0
    %4728 = vmatpush2.msra.mxu0 0.0
    %4729 = vmatprep.subr.mxu0 0.0
    %4730 = vmatpush2.msra.mxu0 0.0
    %4731 = vmatprep.subr.mxu0 0.0
    %4732 = vmatpush2.msra.mxu0 0.0
    %4733 = vmatprep.subr.mxu0 0.0
    %4734 = vmatpush2.msra.mxu0 0.0
    %4735 = vmatprep.subr.mxu0 0.0
    %4736 = vmatpush2.msra.mxu0 0.0
    %4737 = vmatprep.subr.mxu0 0.0
    %4738 = vmatpush2.msra.mxu0 0.0
    %4739 = vmatprep.subr.mxu0 0.0
    %4740 = vmatpush2.msra.mxu0 0.0
    %4741 = vmatprep.subr.mxu0 0.0
    %4742 = vmatpush2.msra.mxu0 0.0
    %4743 = vmatprep.subr.mxu0 0.0
    %4744 = vmatpush2.msra.mxu0 0.0
    %4745 = vmatprep.subr.mxu0 0.0
    %4746 = vmatpush2.msra.mxu0 0.0
    %4747 = vmatprep.mubr.f32.mxu0 0.0
    %4748 = vmatmul.mubr.f32.gmra.mxu0 %v4681
    %v4749 = vpop.f32.mrf.mxu0
    %v4750 = vadd.f32 0.0, %v4749
    %v4751 = vpop.f32.mrf.mxu0
    %4752 = vdwg.mxu0
    %v4754 = vsel %vm1014, %v4673, 0
    %4756 = vmatprep.subr.mxu0 0.0
    %4757 = vmatpush1.msra.mxu0 0.0
    %4758 = vmatprep.subr.mxu0 0.0
    %4759 = vmatpush1.msra.mxu0 0.0
    %4760 = vmatprep.subr.mxu0 0.0
    %4761 = vmatpush1.msra.mxu0 0.0
    %4762 = vmatprep.subr.mxu0 0.0
    %4763 = vmatpush1.msra.mxu0 0.0
    %4764 = vmatprep.subr.mxu0 0.0
    %4765 = vmatpush1.msra.mxu0 0.0
    %4766 = vmatprep.subr.mxu0 0.0
    %4767 = vmatpush1.msra.mxu0 0.0
    %4768 = vmatprep.subr.mxu0 0.0
    %4769 = vmatpush1.msra.mxu0 0.0
    %4770 = vmatprep.subr.mxu0 0.0
    %4771 = vmatpush1.msra.mxu0 0.0
    %4772 = vmatprep.subr.mxu0 0.0
    %4773 = vmatpush1.msra.mxu0 0.0
    %4774 = vmatprep.subr.mxu0 0.0
    %4775 = vmatpush1.msra.mxu0 0.0
    %4776 = vmatprep.subr.mxu0 0.0
    %4777 = vmatpush1.msra.mxu0 0.0
    %4778 = vmatprep.subr.mxu0 0.0
    %4779 = vmatpush1.msra.mxu0 0.0
    %4780 = vmatprep.subr.mxu0 0.0
    %4781 = vmatpush1.msra.mxu0 0.0
    %4782 = vmatprep.subr.mxu0 0.0
    %4783 = vmatpush1.msra.mxu0 0.0
    %4784 = vmatprep.subr.mxu0 0.0
    %4785 = vmatpush1.msra.mxu0 0.0
    %4786 = vmatprep.subr.mxu0 0.0
    %4787 = vmatpush1.msra.mxu0 %v3777
    %4788 = vmatprep.subr.mxu0 0.0
    %4789 = vmatpush2.msra.mxu0 0.0
    %4790 = vmatprep.subr.mxu0 0.0
    %4791 = vmatpush2.msra.mxu0 0.0
    %4792 = vmatprep.subr.mxu0 0.0
    %4793 = vmatpush2.msra.mxu0 0.0
    %4794 = vmatprep.subr.mxu0 0.0
    %4795 = vmatpush2.msra.mxu0 0.0
    %4796 = vmatprep.subr.mxu0 0.0
    %4797 = vmatpush2.msra.mxu0 0.0
    %4798 = vmatprep.subr.mxu0 0.0
    %4799 = vmatpush2.msra.mxu0 0.0
    %4800 = vmatprep.subr.mxu0 0.0
    %4801 = vmatpush2.msra.mxu0 0.0
    %4802 = vmatprep.subr.mxu0 0.0
    %4803 = vmatpush2.msra.mxu0 0.0
    %4804 = vmatprep.subr.mxu0 0.0
    %4805 = vmatpush2.msra.mxu0 0.0
    %4806 = vmatprep.subr.mxu0 0.0
    %4807 = vmatpush2.msra.mxu0 0.0
    %4808 = vmatprep.subr.mxu0 0.0
    %4809 = vmatpush2.msra.mxu0 0.0
    %4810 = vmatprep.subr.mxu0 0.0
    %4811 = vmatpush2.msra.mxu0 0.0
    %4812 = vmatprep.subr.mxu0 0.0
    %4813 = vmatpush2.msra.mxu0 0.0
    %4814 = vmatprep.subr.mxu0 0.0
    %4815 = vmatpush2.msra.mxu0 0.0
    %4816 = vmatprep.subr.mxu0 0.0
    %4817 = vmatpush2.msra.mxu0 0.0
    %4818 = vmatprep.subr.mxu0 0.0
    %4819 = vmatpush2.msra.mxu0 0.0
    %4820 = vmatprep.mubr.f32.mxu0 0.0
    %4821 = vmatmul.mubr.f32.gmra.mxu0 %v4754
    %v4822 = vpop.f32.mrf.mxu0
    %v4823 = vadd.f32 0.0, %v4822
    %v4824 = vpop.f32.mrf.mxu0
    %4825 = vdwg.mxu0
    %v4827 = vsel %vm1014, %v4674, 0
    %4829 = vmatprep.subr.mxu0 0.0
    %4830 = vmatpush1.msra.mxu0 0.0
    %4831 = vmatprep.subr.mxu0 0.0
    %4832 = vmatpush1.msra.mxu0 0.0
    %4833 = vmatprep.subr.mxu0 0.0
    %4834 = vmatpush1.msra.mxu0 0.0
    %4835 = vmatprep.subr.mxu0 0.0
    %4836 = vmatpush1.msra.mxu0 0.0
    %4837 = vmatprep.subr.mxu0 0.0
    %4838 = vmatpush1.msra.mxu0 0.0
    %4839 = vmatprep.subr.mxu0 0.0
    %4840 = vmatpush1.msra.mxu0 0.0
    %4841 = vmatprep.subr.mxu0 0.0
    %4842 = vmatpush1.msra.mxu0 0.0
    %4843 = vmatprep.subr.mxu0 0.0
    %4844 = vmatpush1.msra.mxu0 0.0
    %4845 = vmatprep.subr.mxu0 0.0
    %4846 = vmatpush1.msra.mxu0 0.0
    %4847 = vmatprep.subr.mxu0 0.0
    %4848 = vmatpush1.msra.mxu0 0.0
    %4849 = vmatprep.subr.mxu0 0.0
    %4850 = vmatpush1.msra.mxu0 0.0
    %4851 = vmatprep.subr.mxu0 0.0
    %4852 = vmatpush1.msra.mxu0 0.0
    %4853 = vmatprep.subr.mxu0 0.0
    %4854 = vmatpush1.msra.mxu0 0.0
    %4855 = vmatprep.subr.mxu0 0.0
    %4856 = vmatpush1.msra.mxu0 0.0
    %4857 = vmatprep.subr.mxu0 0.0
    %4858 = vmatpush1.msra.mxu0 0.0
    %4859 = vmatprep.subr.mxu0 0.0
    %4860 = vmatpush1.msra.mxu0 %v3778
    %4861 = vmatprep.subr.mxu0 0.0
    %4862 = vmatpush2.msra.mxu0 0.0
    %4863 = vmatprep.subr.mxu0 0.0
    %4864 = vmatpush2.msra.mxu0 0.0
    %4865 = vmatprep.subr.mxu0 0.0
    %4866 = vmatpush2.msra.mxu0 0.0
    %4867 = vmatprep.subr.mxu0 0.0
    %4868 = vmatpush2.msra.mxu0 0.0
    %4869 = vmatprep.subr.mxu0 0.0
    %4870 = vmatpush2.msra.mxu0 0.0
    %4871 = vmatprep.subr.mxu0 0.0
    %4872 = vmatpush2.msra.mxu0 0.0
    %4873 = vmatprep.subr.mxu0 0.0
    %4874 = vmatpush2.msra.mxu0 0.0
    %4875 = vmatprep.subr.mxu0 0.0
    %4876 = vmatpush2.msra.mxu0 0.0
    %4877 = vmatprep.subr.mxu0 0.0
    %4878 = vmatpush2.msra.mxu0 0.0
    %4879 = vmatprep.subr.mxu0 0.0
    %4880 = vmatpush2.msra.mxu0 0.0
    %4881 = vmatprep.subr.mxu0 0.0
    %4882 = vmatpush2.msra.mxu0 0.0
    %4883 = vmatprep.subr.mxu0 0.0
    %4884 = vmatpush2.msra.mxu0 0.0
    %4885 = vmatprep.subr.mxu0 0.0
    %4886 = vmatpush2.msra.mxu0 0.0
    %4887 = vmatprep.subr.mxu0 0.0
    %4888 = vmatpush2.msra.mxu0 0.0
    %4889 = vmatprep.subr.mxu0 0.0
    %4890 = vmatpush2.msra.mxu0 0.0
    %4891 = vmatprep.subr.mxu0 0.0
    %4892 = vmatpush2.msra.mxu0 0.0
    %4893 = vmatprep.mubr.f32.mxu0 0.0
    %4894 = vmatmul.mubr.f32.gmra.mxu0 %v4827
    %v4895 = vpop.f32.mrf.mxu0
    %v4896 = vadd.f32 0.0, %v4895
    %v4897 = vpop.f32.mrf.mxu0
    %4898 = vdwg.mxu0
    %v4900 = vsel %vm1014, %v4675, 0
    %4902 = vmatprep.subr.mxu0 0.0
    %4903 = vmatpush1.msra.mxu0 0.0
    %4904 = vmatprep.subr.mxu0 0.0
    %4905 = vmatpush1.msra.mxu0 0.0
    %4906 = vmatprep.subr.mxu0 0.0
    %4907 = vmatpush1.msra.mxu0 0.0
    %4908 = vmatprep.subr.mxu0 0.0
    %4909 = vmatpush1.msra.mxu0 0.0
    %4910 = vmatprep.subr.mxu0 0.0
    %4911 = vmatpush1.msra.mxu0 0.0
    %4912 = vmatprep.subr.mxu0 0.0
    %4913 = vmatpush1.msra.mxu0 0.0
    %4914 = vmatprep.subr.mxu0 0.0
    %4915 = vmatpush1.msra.mxu0 0.0
    %4916 = vmatprep.subr.mxu0 0.0
    %4917 = vmatpush1.msra.mxu0 0.0
    %4918 = vmatprep.subr.mxu0 0.0
    %4919 = vmatpush1.msra.mxu0 0.0
    %4920 = vmatprep.subr.mxu0 0.0
    %4921 = vmatpush1.msra.mxu0 0.0
    %4922 = vmatprep.subr.mxu0 0.0
    %4923 = vmatpush1.msra.mxu0 0.0
    %4924 = vmatprep.subr.mxu0 0.0
    %4925 = vmatpush1.msra.mxu0 0.0
    %4926 = vmatprep.subr.mxu0 0.0
    %4927 = vmatpush1.msra.mxu0 0.0
    %4928 = vmatprep.subr.mxu0 0.0
    %4929 = vmatpush1.msra.mxu0 0.0
    %4930 = vmatprep.subr.mxu0 0.0
    %4931 = vmatpush1.msra.mxu0 0.0
    %4932 = vmatprep.subr.mxu0 0.0
    %4933 = vmatpush1.msra.mxu0 %v3779
    %4934 = vmatprep.subr.mxu0 0.0
    %4935 = vmatpush2.msra.mxu0 0.0
    %4936 = vmatprep.subr.mxu0 0.0
    %4937 = vmatpush2.msra.mxu0 0.0
    %4938 = vmatprep.subr.mxu0 0.0
    %4939 = vmatpush2.msra.mxu0 0.0
    %4940 = vmatprep.subr.mxu0 0.0
    %4941 = vmatpush2.msra.mxu0 0.0
    %4942 = vmatprep.subr.mxu0 0.0
    %4943 = vmatpush2.msra.mxu0 0.0
    %4944 = vmatprep.subr.mxu0 0.0
    %4945 = vmatpush2.msra.mxu0 0.0
    %4946 = vmatprep.subr.mxu0 0.0
    %4947 = vmatpush2.msra.mxu0 0.0
    %4948 = vmatprep.subr.mxu0 0.0
    %4949 = vmatpush2.msra.mxu0 0.0
    %4950 = vmatprep.subr.mxu0 0.0
    %4951 = vmatpush2.msra.mxu0 0.0
    %4952 = vmatprep.subr.mxu0 0.0
    %4953 = vmatpush2.msra.mxu0 0.0
    %4954 = vmatprep.subr.mxu0 0.0
    %4955 = vmatpush2.msra.mxu0 0.0
    %4956 = vmatprep.subr.mxu0 0.0
    %4957 = vmatpush2.msra.mxu0 0.0
    %4958 = vmatprep.subr.mxu0 0.0
    %4959 = vmatpush2.msra.mxu0 0.0
    %4960 = vmatprep.subr.mxu0 0.0
    %4961 = vmatpush2.msra.mxu0 0.0
    %4962 = vmatprep.subr.mxu0 0.0
    %4963 = vmatpush2.msra.mxu0 0.0
    %4964 = vmatprep.subr.mxu0 0.0
    %4965 = vmatpush2.msra.mxu0 0.0
    %4966 = vmatprep.mubr.f32.mxu0 0.0
    %4967 = vmatmul.mubr.f32.gmra.mxu0 %v4900
    %v4968 = vpop.f32.mrf.mxu0
    %v4969 = vadd.f32 0.0, %v4968
    %v4970 = vpop.f32.mrf.mxu0
    %4971 = vdwg.mxu0
    %v4973 = vsel %vm1014, %v4676, 0
    %4975 = vmatprep.subr.mxu0 0.0
    %4976 = vmatpush1.msra.mxu0 0.0
    %4977 = vmatprep.subr.mxu0 0.0
    %4978 = vmatpush1.msra.mxu0 0.0
    %4979 = vmatprep.subr.mxu0 0.0
    %4980 = vmatpush1.msra.mxu0 0.0
    %4981 = vmatprep.subr.mxu0 0.0
    %4982 = vmatpush1.msra.mxu0 0.0
    %4983 = vmatprep.subr.mxu0 0.0
    %4984 = vmatpush1.msra.mxu0 0.0
    %4985 = vmatprep.subr.mxu0 0.0
    %4986 = vmatpush1.msra.mxu0 0.0
    %4987 = vmatprep.subr.mxu0 0.0
    %4988 = vmatpush1.msra.mxu0 0.0
    %4989 = vmatprep.subr.mxu0 0.0
    %4990 = vmatpush1.msra.mxu0 0.0
    %4991 = vmatprep.subr.mxu0 0.0
    %4992 = vmatpush1.msra.mxu0 0.0
    %4993 = vmatprep.subr.mxu0 0.0
    %4994 = vmatpush1.msra.mxu0 0.0
    %4995 = vmatprep.subr.mxu0 0.0
    %4996 = vmatpush1.msra.mxu0 0.0
    %4997 = vmatprep.subr.mxu0 0.0
    %4998 = vmatpush1.msra.mxu0 0.0
    %4999 = vmatprep.subr.mxu0 0.0
    %5000 = vmatpush1.msra.mxu0 0.0
    %5001 = vmatprep.subr.mxu0 0.0
    %5002 = vmatpush1.msra.mxu0 0.0
    %5003 = vmatprep.subr.mxu0 0.0
    %5004 = vmatpush1.msra.mxu0 0.0
    %5005 = vmatprep.subr.mxu0 0.0
    %5006 = vmatpush1.msra.mxu0 %v3980
    %5007 = vmatprep.subr.mxu0 0.0
    %5008 = vmatpush2.msra.mxu0 0.0
    %5009 = vmatprep.subr.mxu0 0.0
    %5010 = vmatpush2.msra.mxu0 0.0
    %5011 = vmatprep.subr.mxu0 0.0
    %5012 = vmatpush2.msra.mxu0 0.0
    %5013 = vmatprep.subr.mxu0 0.0
    %5014 = vmatpush2.msra.mxu0 0.0
    %5015 = vmatprep.subr.mxu0 0.0
    %5016 = vmatpush2.msra.mxu0 0.0
    %5017 = vmatprep.subr.mxu0 0.0
    %5018 = vmatpush2.msra.mxu0 0.0
    %5019 = vmatprep.subr.mxu0 0.0
    %5020 = vmatpush2.msra.mxu0 0.0
    %5021 = vmatprep.subr.mxu0 0.0
    %5022 = vmatpush2.msra.mxu0 0.0
    %5023 = vmatprep.subr.mxu0 0.0
    %5024 = vmatpush2.msra.mxu0 0.0
    %5025 = vmatprep.subr.mxu0 0.0
    %5026 = vmatpush2.msra.mxu0 0.0
    %5027 = vmatprep.subr.mxu0 0.0
    %5028 = vmatpush2.msra.mxu0 0.0
    %5029 = vmatprep.subr.mxu0 0.0
    %5030 = vmatpush2.msra.mxu0 0.0
    %5031 = vmatprep.subr.mxu0 0.0
    %5032 = vmatpush2.msra.mxu0 0.0
    %5033 = vmatprep.subr.mxu0 0.0
    %5034 = vmatpush2.msra.mxu0 0.0
    %5035 = vmatprep.subr.mxu0 0.0
    %5036 = vmatpush2.msra.mxu0 0.0
    %5037 = vmatprep.subr.mxu0 0.0
    %5038 = vmatpush2.msra.mxu0 0.0
    %5039 = vmatprep.mubr.f32.mxu0 0.0
    %5040 = vmatmul.mubr.f32.gmra.mxu0 %v4973
    %v5041 = vpop.f32.mrf.mxu0
    %v5042 = vadd.f32 0.0, %v5041
    %v5043 = vpop.f32.mrf.mxu0
    %5044 = vdwg.mxu0
    %v5046 = vsel %vm1014, %v4677, 0
    %5048 = vmatprep.subr.mxu0 0.0
    %5049 = vmatpush1.msra.mxu0 0.0
    %5050 = vmatprep.subr.mxu0 0.0
    %5051 = vmatpush1.msra.mxu0 0.0
    %5052 = vmatprep.subr.mxu0 0.0
    %5053 = vmatpush1.msra.mxu0 0.0
    %5054 = vmatprep.subr.mxu0 0.0
    %5055 = vmatpush1.msra.mxu0 0.0
    %5056 = vmatprep.subr.mxu0 0.0
    %5057 = vmatpush1.msra.mxu0 0.0
    %5058 = vmatprep.subr.mxu0 0.0
    %5059 = vmatpush1.msra.mxu0 0.0
    %5060 = vmatprep.subr.mxu0 0.0
    %5061 = vmatpush1.msra.mxu0 0.0
    %5062 = vmatprep.subr.mxu0 0.0
    %5063 = vmatpush1.msra.mxu0 0.0
    %5064 = vmatprep.subr.mxu0 0.0
    %5065 = vmatpush1.msra.mxu0 0.0
    %5066 = vmatprep.subr.mxu0 0.0
    %5067 = vmatpush1.msra.mxu0 0.0
    %5068 = vmatprep.subr.mxu0 0.0
    %5069 = vmatpush1.msra.mxu0 0.0
    %5070 = vmatprep.subr.mxu0 0.0
    %5071 = vmatpush1.msra.mxu0 0.0
    %5072 = vmatprep.subr.mxu0 0.0
    %5073 = vmatpush1.msra.mxu0 0.0
    %5074 = vmatprep.subr.mxu0 0.0
    %5075 = vmatpush1.msra.mxu0 0.0
    %5076 = vmatprep.subr.mxu0 0.0
    %5077 = vmatpush1.msra.mxu0 0.0
    %5078 = vmatprep.subr.mxu0 0.0
    %5079 = vmatpush1.msra.mxu0 %v3981
    %5080 = vmatprep.subr.mxu0 0.0
    %5081 = vmatpush2.msra.mxu0 0.0
    %5082 = vmatprep.subr.mxu0 0.0
    %5083 = vmatpush2.msra.mxu0 0.0
    %5084 = vmatprep.subr.mxu0 0.0
    %5085 = vmatpush2.msra.mxu0 0.0
    %5086 = vmatprep.subr.mxu0 0.0
    %5087 = vmatpush2.msra.mxu0 0.0
    %5088 = vmatprep.subr.mxu0 0.0
    %5089 = vmatpush2.msra.mxu0 0.0
    %5090 = vmatprep.subr.mxu0 0.0
    %5091 = vmatpush2.msra.mxu0 0.0
    %5092 = vmatprep.subr.mxu0 0.0
    %5093 = vmatpush2.msra.mxu0 0.0
    %5094 = vmatprep.subr.mxu0 0.0
    %5095 = vmatpush2.msra.mxu0 0.0
    %5096 = vmatprep.subr.mxu0 0.0
    %5097 = vmatpush2.msra.mxu0 0.0
    %5098 = vmatprep.subr.mxu0 0.0
    %5099 = vmatpush2.msra.mxu0 0.0
    %5100 = vmatprep.subr.mxu0 0.0
    %5101 = vmatpush2.msra.mxu0 0.0
    %5102 = vmatprep.subr.mxu0 0.0
    %5103 = vmatpush2.msra.mxu0 0.0
    %5104 = vmatprep.subr.mxu0 0.0
    %5105 = vmatpush2.msra.mxu0 0.0
    %5106 = vmatprep.subr.mxu0 0.0
    %5107 = vmatpush2.msra.mxu0 0.0
    %5108 = vmatprep.subr.mxu0 0.0
    %5109 = vmatpush2.msra.mxu0 0.0
    %5110 = vmatprep.subr.mxu0 0.0
    %5111 = vmatpush2.msra.mxu0 0.0
    %5112 = vmatprep.mubr.f32.mxu0 0.0
    %5113 = vmatmul.mubr.f32.gmra.mxu0 %v5046
    %v5114 = vpop.f32.mrf.mxu0
    %v5115 = vadd.f32 0.0, %v5114
    %v5116 = vpop.f32.mrf.mxu0
    %5117 = vdwg.mxu0
    %v5119 = vsel %vm1014, %v4678, 0
    %5121 = vmatprep.subr.mxu0 0.0
    %5122 = vmatpush1.msra.mxu0 0.0
    %5123 = vmatprep.subr.mxu0 0.0
    %5124 = vmatpush1.msra.mxu0 0.0
    %5125 = vmatprep.subr.mxu0 0.0
    %5126 = vmatpush1.msra.mxu0 0.0
    %5127 = vmatprep.subr.mxu0 0.0
    %5128 = vmatpush1.msra.mxu0 0.0
    %5129 = vmatprep.subr.mxu0 0.0
    %5130 = vmatpush1.msra.mxu0 0.0
    %5131 = vmatprep.subr.mxu0 0.0
    %5132 = vmatpush1.msra.mxu0 0.0
    %5133 = vmatprep.subr.mxu0 0.0
    %5134 = vmatpush1.msra.mxu0 0.0
    %5135 = vmatprep.subr.mxu0 0.0
    %5136 = vmatpush1.msra.mxu0 0.0
    %5137 = vmatprep.subr.mxu0 0.0
    %5138 = vmatpush1.msra.mxu0 0.0
    %5139 = vmatprep.subr.mxu0 0.0
    %5140 = vmatpush1.msra.mxu0 0.0
    %5141 = vmatprep.subr.mxu0 0.0
    %5142 = vmatpush1.msra.mxu0 0.0
    %5143 = vmatprep.subr.mxu0 0.0
    %5144 = vmatpush1.msra.mxu0 0.0
    %5145 = vmatprep.subr.mxu0 0.0
    %5146 = vmatpush1.msra.mxu0 0.0
    %5147 = vmatprep.subr.mxu0 0.0
    %5148 = vmatpush1.msra.mxu0 0.0
    %5149 = vmatprep.subr.mxu0 0.0
    %5150 = vmatpush1.msra.mxu0 0.0
    %5151 = vmatprep.subr.mxu0 0.0
    %5152 = vmatpush1.msra.mxu0 %v3982
    %5153 = vmatprep.subr.mxu0 0.0
    %5154 = vmatpush2.msra.mxu0 0.0
    %5155 = vmatprep.subr.mxu0 0.0
    %5156 = vmatpush2.msra.mxu0 0.0
    %5157 = vmatprep.subr.mxu0 0.0
    %5158 = vmatpush2.msra.mxu0 0.0
    %5159 = vmatprep.subr.mxu0 0.0
    %5160 = vmatpush2.msra.mxu0 0.0
    %5161 = vmatprep.subr.mxu0 0.0
    %5162 = vmatpush2.msra.mxu0 0.0
    %5163 = vmatprep.subr.mxu0 0.0
    %5164 = vmatpush2.msra.mxu0 0.0
    %5165 = vmatprep.subr.mxu0 0.0
    %5166 = vmatpush2.msra.mxu0 0.0
    %5167 = vmatprep.subr.mxu0 0.0
    %5168 = vmatpush2.msra.mxu0 0.0
    %5169 = vmatprep.subr.mxu0 0.0
    %5170 = vmatpush2.msra.mxu0 0.0
    %5171 = vmatprep.subr.mxu0 0.0
    %5172 = vmatpush2.msra.mxu0 0.0
    %5173 = vmatprep.subr.mxu0 0.0
    %5174 = vmatpush2.msra.mxu0 0.0
    %5175 = vmatprep.subr.mxu0 0.0
    %5176 = vmatpush2.msra.mxu0 0.0
    %5177 = vmatprep.subr.mxu0 0.0
    %5178 = vmatpush2.msra.mxu0 0.0
    %5179 = vmatprep.subr.mxu0 0.0
    %5180 = vmatpush2.msra.mxu0 0.0
    %5181 = vmatprep.subr.mxu0 0.0
    %5182 = vmatpush2.msra.mxu0 0.0
    %5183 = vmatprep.subr.mxu0 0.0
    %5184 = vmatpush2.msra.mxu0 0.0
    %5185 = vmatprep.mubr.f32.mxu0 0.0
    %5186 = vmatmul.mubr.f32.gmra.mxu0 %v5119
    %v5187 = vpop.f32.mrf.mxu0
    %v5188 = vadd.f32 0.0, %v5187
    %v5189 = vpop.f32.mrf.mxu0
    %5190 = vdwg.mxu0
    %v5192 = vsel %vm1014, %v4679, 0
    %5194 = vmatprep.subr.mxu0 0.0
    %5195 = vmatpush1.msra.mxu0 0.0
    %5196 = vmatprep.subr.mxu0 0.0
    %5197 = vmatpush1.msra.mxu0 0.0
    %5198 = vmatprep.subr.mxu0 0.0
    %5199 = vmatpush1.msra.mxu0 0.0
    %5200 = vmatprep.subr.mxu0 0.0
    %5201 = vmatpush1.msra.mxu0 0.0
    %5202 = vmatprep.subr.mxu0 0.0
    %5203 = vmatpush1.msra.mxu0 0.0
    %5204 = vmatprep.subr.mxu0 0.0
    %5205 = vmatpush1.msra.mxu0 0.0
    %5206 = vmatprep.subr.mxu0 0.0
    %5207 = vmatpush1.msra.mxu0 0.0
    %5208 = vmatprep.subr.mxu0 0.0
    %5209 = vmatpush1.msra.mxu0 0.0
    %5210 = vmatprep.subr.mxu0 0.0
    %5211 = vmatpush1.msra.mxu0 0.0
    %5212 = vmatprep.subr.mxu0 0.0
    %5213 = vmatpush1.msra.mxu0 0.0
    %5214 = vmatprep.subr.mxu0 0.0
    %5215 = vmatpush1.msra.mxu0 0.0
    %5216 = vmatprep.subr.mxu0 0.0
    %5217 = vmatpush1.msra.mxu0 0.0
    %5218 = vmatprep.subr.mxu0 0.0
    %5219 = vmatpush1.msra.mxu0 0.0
    %5220 = vmatprep.subr.mxu0 0.0
    %5221 = vmatpush1.msra.mxu0 0.0
    %5222 = vmatprep.subr.mxu0 0.0
    %5223 = vmatpush1.msra.mxu0 0.0
    %5224 = vmatprep.subr.mxu0 0.0
    %5225 = vmatpush1.msra.mxu0 %v3983
    %5226 = vmatprep.subr.mxu0 0.0
    %5227 = vmatpush2.msra.mxu0 0.0
    %5228 = vmatprep.subr.mxu0 0.0
    %5229 = vmatpush2.msra.mxu0 0.0
    %5230 = vmatprep.subr.mxu0 0.0
    %5231 = vmatpush2.msra.mxu0 0.0
    %5232 = vmatprep.subr.mxu0 0.0
    %5233 = vmatpush2.msra.mxu0 0.0
    %5234 = vmatprep.subr.mxu0 0.0
    %5235 = vmatpush2.msra.mxu0 0.0
    %5236 = vmatprep.subr.mxu0 0.0
    %5237 = vmatpush2.msra.mxu0 0.0
    %5238 = vmatprep.subr.mxu0 0.0
    %5239 = vmatpush2.msra.mxu0 0.0
    %5240 = vmatprep.subr.mxu0 0.0
    %5241 = vmatpush2.msra.mxu0 0.0
    %5242 = vmatprep.subr.mxu0 0.0
    %5243 = vmatpush2.msra.mxu0 0.0
    %5244 = vmatprep.subr.mxu0 0.0
    %5245 = vmatpush2.msra.mxu0 0.0
    %5246 = vmatprep.subr.mxu0 0.0
    %5247 = vmatpush2.msra.mxu0 0.0
    %5248 = vmatprep.subr.mxu0 0.0
    %5249 = vmatpush2.msra.mxu0 0.0
    %5250 = vmatprep.subr.mxu0 0.0
    %5251 = vmatpush2.msra.mxu0 0.0
    %5252 = vmatprep.subr.mxu0 0.0
    %5253 = vmatpush2.msra.mxu0 0.0
    %5254 = vmatprep.subr.mxu0 0.0
    %5255 = vmatpush2.msra.mxu0 0.0
    %5256 = vmatprep.subr.mxu0 0.0
    %5257 = vmatpush2.msra.mxu0 0.0
    %5258 = vmatprep.mubr.f32.mxu0 0.0
    %5259 = vmatmul.mubr.f32.gmra.mxu0 %v5192
    %v5260 = vpop.f32.mrf.mxu0
    %v5261 = vadd.f32 0.0, %v5260
    %v5262 = vpop.f32.mrf.mxu0
    %5263 = vdwg.mxu0
    %v5264 = vcombine.low %v4750, %v4896
    %v5265 = vcombine.high %v4750, %v4896
    %v5267 = vunpack.c.l.s4 1983009808
    %v5268 = vunpack.c.0.s8 %v5267
    %v5269 = vlaneseq
    %v5270 = vshrl.u32 %v5269, 7
    %v5271 = vsub.s32 %v5268, %v5270
    %v5272 = vrot.slane %v5264, %v5271
    %v5274 = vunpack.c.l.s4 1983009808
    %v5275 = vunpack.c.0.s8 %v5274
    %v5276 = vlaneseq
    %v5277 = vshrl.u32 %v5276, 7
    %v5278 = vsub.s32 %v5275, %v5277
    %v5279 = vrot.slane %v5265, %v5278
    %v5280 = vcombine.low %v4823, %v4969
    %v5281 = vcombine.high %v4823, %v4969
    %v5283 = vunpack.c.l.s4 1983009808
    %v5284 = vunpack.c.0.s8 %v5283
    %v5285 = vlaneseq
    %v5286 = vshrl.u32 %v5285, 7
    %v5287 = vsub.s32 %v5284, %v5286
    %v5288 = vrot.slane %v5280, %v5287
    %v5290 = vunpack.c.l.s4 1983009808
    %v5291 = vunpack.c.0.s8 %v5290
    %v5292 = vlaneseq
    %v5293 = vshrl.u32 %v5292, 7
    %v5294 = vsub.s32 %v5291, %v5293
    %v5295 = vrot.slane %v5281, %v5294
    %v5296 = vcombine.low %v5272, %v5288
    %v5297 = vcombine.high %v5272, %v5288
    %v5299 = vunpack.c.l.s4 1934713408
    %v5300 = vunpack.c.0.s8 %v5299
    %v5301 = vlaneseq
    %v5302 = vshrl.u32 %v5301, 7
    %v5303 = vsub.s32 %v5300, %v5302
    %v5304 = vrot.slane %v5296, %v5303
    %v5306 = vunpack.c.l.s4 1934713408
    %v5307 = vunpack.c.0.s8 %v5306
    %v5308 = vlaneseq
    %v5309 = vshrl.u32 %v5308, 7
    %v5310 = vsub.s32 %v5307, %v5309
    %v5311 = vrot.slane %v5297, %v5310
    %v5312 = vcombine.low %v5279, %v5295
    %v5313 = vcombine.high %v5279, %v5295
    %v5315 = vunpack.c.l.s4 1934713408
    %v5316 = vunpack.c.0.s8 %v5315
    %v5317 = vlaneseq
    %v5318 = vshrl.u32 %v5317, 7
    %v5319 = vsub.s32 %v5316, %v5318
    %v5320 = vrot.slane %v5312, %v5319
    %v5322 = vunpack.c.l.s4 1934713408
    %v5323 = vunpack.c.0.s8 %v5322
    %v5324 = vlaneseq
    %v5325 = vshrl.u32 %v5324, 7
    %v5326 = vsub.s32 %v5323, %v5325
    %v5327 = vrot.slane %v5313, %v5326
    %v5328 = vcombine.high %v5304, 0.0
    %v5329 = vcombine.high %v5311, 0.0
    %v5330 = vcombine.high %v5320, 0.0
    %v5331 = vcombine.high %v5327, 0.0
    %v5332 = vcombine.low %v5042, %v5188
    %v5333 = vcombine.high %v5042, %v5188
    %v5335 = vunpack.c.l.s4 1983009808
    %v5336 = vunpack.c.0.s8 %v5335
    %v5337 = vlaneseq
    %v5338 = vshrl.u32 %v5337, 7
    %v5339 = vsub.s32 %v5336, %v5338
    %v5340 = vrot.slane %v5332, %v5339
    %v5342 = vunpack.c.l.s4 1983009808
    %v5343 = vunpack.c.0.s8 %v5342
    %v5344 = vlaneseq
    %v5345 = vshrl.u32 %v5344, 7
    %v5346 = vsub.s32 %v5343, %v5345
    %v5347 = vrot.slane %v5333, %v5346
    %v5348 = vcombine.low %v5115, %v5261
    %v5349 = vcombine.high %v5115, %v5261
    %v5351 = vunpack.c.l.s4 1983009808
    %v5352 = vunpack.c.0.s8 %v5351
    %v5353 = vlaneseq
    %v5354 = vshrl.u32 %v5353, 7
    %v5355 = vsub.s32 %v5352, %v5354
    %v5356 = vrot.slane %v5348, %v5355
    %v5358 = vunpack.c.l.s4 1983009808
    %v5359 = vunpack.c.0.s8 %v5358
    %v5360 = vlaneseq
    %v5361 = vshrl.u32 %v5360, 7
    %v5362 = vsub.s32 %v5359, %v5361
    %v5363 = vrot.slane %v5349, %v5362
    %v5364 = vcombine.low %v5340, %v5356
    %v5365 = vcombine.high %v5340, %v5356
    %v5367 = vunpack.c.l.s4 1934713408
    %v5368 = vunpack.c.0.s8 %v5367
    %v5369 = vlaneseq
    %v5370 = vshrl.u32 %v5369, 7
    %v5371 = vsub.s32 %v5368, %v5370
    %v5372 = vrot.slane %v5364, %v5371
    %v5374 = vunpack.c.l.s4 1934713408
    %v5375 = vunpack.c.0.s8 %v5374
    %v5376 = vlaneseq
    %v5377 = vshrl.u32 %v5376, 7
    %v5378 = vsub.s32 %v5375, %v5377
    %v5379 = vrot.slane %v5365, %v5378
    %v5380 = vcombine.low %v5347, %v5363
    %v5381 = vcombine.high %v5347, %v5363
    %v5383 = vunpack.c.l.s4 1934713408
    %v5384 = vunpack.c.0.s8 %v5383
    %v5385 = vlaneseq
    %v5386 = vshrl.u32 %v5385, 7
    %v5387 = vsub.s32 %v5384, %v5386
    %v5388 = vrot.slane %v5380, %v5387
    %v5390 = vunpack.c.l.s4 1934713408
    %v5391 = vunpack.c.0.s8 %v5390
    %v5392 = vlaneseq
    %v5393 = vshrl.u32 %v5392, 7
    %v5394 = vsub.s32 %v5391, %v5393
    %v5395 = vrot.slane %v5381, %v5394
    %v5396 = vcombine.high %v5372, 0.0
    %v5397 = vcombine.high %v5379, 0.0
    %v5398 = vcombine.high %v5388, 0.0
    %v5399 = vcombine.high %v5395, 0.0
    %v5400 = vcombine.low %v5304, %v5311
    %v5402 = vunpack.c.l.s4 1983009808
    %v5403 = vunpack.c.0.s8 %v5402
    %v5404 = vlaneseq
    %v5405 = vshrl.u32 %v5404, 7
    %v5406 = vsub.s32 %v5403, %v5405
    %v5407 = vrot.slane %v5400, %v5406
    %v5408 = vcombine.low %v5328, %v5329
    %v5410 = vunpack.c.l.s4 1983009808
    %v5411 = vunpack.c.0.s8 %v5410
    %v5412 = vlaneseq
    %v5413 = vshrl.u32 %v5412, 7
    %v5414 = vsub.s32 %v5411, %v5413
    %v5415 = vrot.slane %v5408, %v5414
    %v5416 = vcombine.low %v5320, %v5327
    %v5418 = vunpack.c.l.s4 1983009808
    %v5419 = vunpack.c.0.s8 %v5418
    %v5420 = vlaneseq
    %v5421 = vshrl.u32 %v5420, 7
    %v5422 = vsub.s32 %v5419, %v5421
    %v5423 = vrot.slane %v5416, %v5422
    %v5424 = vcombine.low %v5330, %v5331
    %v5426 = vunpack.c.l.s4 1983009808
    %v5427 = vunpack.c.0.s8 %v5426
    %v5428 = vlaneseq
    %v5429 = vshrl.u32 %v5428, 7
    %v5430 = vsub.s32 %v5427, %v5429
    %v5431 = vrot.slane %v5424, %v5430
    %v5432 = vcombine.low %v5407, %v5415
    %v5433 = vcombine.high %v5407, %v5415
    %v5435 = vunpack.c.l.s4 1934713408
    %v5436 = vunpack.c.0.s8 %v5435
    %v5437 = vlaneseq
    %v5438 = vshrl.u32 %v5437, 7
    %v5439 = vsub.s32 %v5436, %v5438
    %v5440 = vrot.slane %v5432, %v5439
    %v5442 = vunpack.c.l.s4 1934713408
    %v5443 = vunpack.c.0.s8 %v5442
    %v5444 = vlaneseq
    %v5445 = vshrl.u32 %v5444, 7
    %v5446 = vsub.s32 %v5443, %v5445
    %v5447 = vrot.slane %v5433, %v5446
    %v5448 = vcombine.low %v5423, %v5431
    %v5449 = vcombine.high %v5423, %v5431
    %v5451 = vunpack.c.l.s4 1934713408
    %v5452 = vunpack.c.0.s8 %v5451
    %v5453 = vlaneseq
    %v5454 = vshrl.u32 %v5453, 7
    %v5455 = vsub.s32 %v5452, %v5454
    %v5456 = vrot.slane %v5448, %v5455
    %v5458 = vunpack.c.l.s4 1934713408
    %v5459 = vunpack.c.0.s8 %v5458
    %v5460 = vlaneseq
    %v5461 = vshrl.u32 %v5460, 7
    %v5462 = vsub.s32 %v5459, %v5461
    %v5463 = vrot.slane %v5449, %v5462
    %v5464 = vcombine.low %v5440, %v5456
    %v5465 = vcombine.high %v5440, %v5456
    %v5466 = vcombine.low %v5447, %v5463
    %v5467 = vcombine.high %v5447, %v5463
    %v5468 = vcombine.low %v5372, %v5379
    %v5470 = vunpack.c.l.s4 1983009808
    %v5471 = vunpack.c.0.s8 %v5470
    %v5472 = vlaneseq
    %v5473 = vshrl.u32 %v5472, 7
    %v5474 = vsub.s32 %v5471, %v5473
    %v5475 = vrot.slane %v5468, %v5474
    %v5476 = vcombine.low %v5396, %v5397
    %v5478 = vunpack.c.l.s4 1983009808
    %v5479 = vunpack.c.0.s8 %v5478
    %v5480 = vlaneseq
    %v5481 = vshrl.u32 %v5480, 7
    %v5482 = vsub.s32 %v5479, %v5481
    %v5483 = vrot.slane %v5476, %v5482
    %v5484 = vcombine.low %v5388, %v5395
    %v5486 = vunpack.c.l.s4 1983009808
    %v5487 = vunpack.c.0.s8 %v5486
    %v5488 = vlaneseq
    %v5489 = vshrl.u32 %v5488, 7
    %v5490 = vsub.s32 %v5487, %v5489
    %v5491 = vrot.slane %v5484, %v5490
    %v5492 = vcombine.low %v5398, %v5399
    %v5494 = vunpack.c.l.s4 1983009808
    %v5495 = vunpack.c.0.s8 %v5494
    %v5496 = vlaneseq
    %v5497 = vshrl.u32 %v5496, 7
    %v5498 = vsub.s32 %v5495, %v5497
    %v5499 = vrot.slane %v5492, %v5498
    %v5500 = vcombine.low %v5475, %v5483
    %v5501 = vcombine.high %v5475, %v5483
    %v5503 = vunpack.c.l.s4 1934713408
    %v5504 = vunpack.c.0.s8 %v5503
    %v5505 = vlaneseq
    %v5506 = vshrl.u32 %v5505, 7
    %v5507 = vsub.s32 %v5504, %v5506
    %v5508 = vrot.slane %v5500, %v5507
    %v5510 = vunpack.c.l.s4 1934713408
    %v5511 = vunpack.c.0.s8 %v5510
    %v5512 = vlaneseq
    %v5513 = vshrl.u32 %v5512, 7
    %v5514 = vsub.s32 %v5511, %v5513
    %v5515 = vrot.slane %v5501, %v5514
    %v5516 = vcombine.low %v5491, %v5499
    %v5517 = vcombine.high %v5491, %v5499
    %v5519 = vunpack.c.l.s4 1934713408
    %v5520 = vunpack.c.0.s8 %v5519
    %v5521 = vlaneseq
    %v5522 = vshrl.u32 %v5521, 7
    %v5523 = vsub.s32 %v5520, %v5522
    %v5524 = vrot.slane %v5516, %v5523
    %v5526 = vunpack.c.l.s4 1934713408
    %v5527 = vunpack.c.0.s8 %v5526
    %v5528 = vlaneseq
    %v5529 = vshrl.u32 %v5528, 7
    %v5530 = vsub.s32 %v5527, %v5529
    %v5531 = vrot.slane %v5517, %v5530
    %v5532 = vcombine.low %v5508, %v5524
    %v5533 = vcombine.high %v5508, %v5524
    %v5534 = vcombine.low %v5515, %v5531
    %v5535 = vcombine.high %v5515, %v5531
    %5538 = vrot.lane.b32.xlu0 %v5465, 8
    %v5539 = vpop.permute.xlu0 %5538
    %5540 = vrot.lane.b32.xlu0 %v5533, 8
    %v5541 = vpop.permute.xlu0 %5540
    %5546 = vrot.lane.b32.xlu0 %v5466, 16
    %v5547 = vpop.permute.xlu0 %5546
    %5548 = vrot.lane.b32.xlu0 %v5534, 16
    %v5549 = vpop.permute.xlu0 %5548
    %5554 = vrot.lane.b32.xlu0 %v5467, 24
    %v5555 = vpop.permute.xlu0 %5554
    %5556 = vrot.lane.b32.xlu0 %v5535, 24
    %v5557 = vpop.permute.xlu0 %5556
    %v5560 = vsel %vm1014, %v5464, %v5539
    %v5561 = vsel %vm1014, %v5532, %v5541
    %v5562 = vsel %vm2593, %v5560, %v5547
    %v5563 = vsel %vm2593, %v5561, %v5549
    %v5564 = vsel %vm2596, %v5562, %v5555
    %v5565 = vsel %vm2596, %v5563, %v5557
    %v5566 = vlaneseq
    %v5567 = vshrl.u32 %v5566, 7
    %v5568 = vsub.s32 1, %v5567
    %v5569 = vrot.slane %v3014, %v5568
    %5574 = vrot.lane.b32.xlu0 %v3004, 32
    %v5575 = vpop.permute.xlu0 %5574
    %5576 = vrot.lane.b32.xlu0 %v3006, 32
    %v5577 = vpop.permute.xlu0 %5576
    %5578 = vrot.lane.b32.xlu0 %v3008, 32
    %v5579 = vpop.permute.xlu0 %5578
    %5580 = vrot.lane.b32.xlu0 %v3010, 32
    %v5581 = vpop.permute.xlu0 %5580
    %v5587 = vsel %vm48, %v5564, 0
    %v5590 = vsel %vm48, %v5565, 0
    %5592 = vmatprep.subr.mxu0 0.0
    %5593 = vmatpush1.msra.mxu0 0.0
    %5594 = vmatprep.subr.mxu0 0.0
    %5595 = vmatpush1.msra.mxu0 0.0
    %5596 = vmatprep.subr.mxu0 0.0
    %5597 = vmatpush1.msra.mxu0 0.0
    %5598 = vmatprep.subr.mxu0 0.0
    %5599 = vmatpush1.msra.mxu0 0.0
    %5600 = vmatprep.subr.mxu0 0.0
    %5601 = vmatpush1.msra.mxu0 0.0
    %5602 = vmatprep.subr.mxu0 0.0
    %5603 = vmatpush1.msra.mxu0 0.0
    %5604 = vmatprep.subr.mxu0 0.0
    %5605 = vmatpush1.msra.mxu0 0.0
    %5606 = vmatprep.subr.mxu0 0.0
    %5607 = vmatpush1.msra.mxu0 0.0
    %5608 = vmatprep.subr.mxu0 0.0
    %5609 = vmatpush1.msra.mxu0 0.0
    %5610 = vmatprep.subr.mxu0 0.0
    %5611 = vmatpush1.msra.mxu0 0.0
    %5612 = vmatprep.subr.mxu0 0.0
    %5613 = vmatpush1.msra.mxu0 0.0
    %5614 = vmatprep.subr.mxu0 0.0
    %5615 = vmatpush1.msra.mxu0 0.0
    %5616 = vmatprep.subr.mxu0 0.0
    %5617 = vmatpush1.msra.mxu0 %v5581
    %5618 = vmatprep.subr.mxu0 0.0
    %5619 = vmatpush1.msra.mxu0 %v5579
    %5620 = vmatprep.subr.mxu0 0.0
    %5621 = vmatpush1.msra.mxu0 %v5577
    %5622 = vmatprep.subr.mxu0 0.0
    %5623 = vmatpush1.msra.mxu0 %v5575
    %5624 = vmatprep.subr.mxu0 0.0
    %5625 = vmatpush2.msra.mxu0 0.0
    %5626 = vmatprep.subr.mxu0 0.0
    %5627 = vmatpush2.msra.mxu0 0.0
    %5628 = vmatprep.subr.mxu0 0.0
    %5629 = vmatpush2.msra.mxu0 0.0
    %5630 = vmatprep.subr.mxu0 0.0
    %5631 = vmatpush2.msra.mxu0 0.0
    %5632 = vmatprep.subr.mxu0 0.0
    %5633 = vmatpush2.msra.mxu0 0.0
    %5634 = vmatprep.subr.mxu0 0.0
    %5635 = vmatpush2.msra.mxu0 0.0
    %5636 = vmatprep.subr.mxu0 0.0
    %5637 = vmatpush2.msra.mxu0 0.0
    %5638 = vmatprep.subr.mxu0 0.0
    %5639 = vmatpush2.msra.mxu0 0.0
    %5640 = vmatprep.subr.mxu0 0.0
    %5641 = vmatpush2.msra.mxu0 0.0
    %5642 = vmatprep.subr.mxu0 0.0
    %5643 = vmatpush2.msra.mxu0 0.0
    %5644 = vmatprep.subr.mxu0 0.0
    %5645 = vmatpush2.msra.mxu0 0.0
    %5646 = vmatprep.subr.mxu0 0.0
    %5647 = vmatpush2.msra.mxu0 0.0
    %5648 = vmatprep.subr.mxu0 0.0
    %5649 = vmatpush2.msra.mxu0 0.0
    %5650 = vmatprep.subr.mxu0 0.0
    %5651 = vmatpush2.msra.mxu0 0.0
    %5652 = vmatprep.subr.mxu0 0.0
    %5653 = vmatpush2.msra.mxu0 0.0
    %5654 = vmatprep.subr.mxu0 0.0
    %5655 = vmatpush2.msra.mxu0 0.0
    %5656 = vmatprep.mubr.f32.mxu0 0.0
    %5657 = vmatmul.mubr.f32.gmra.mxu0 %v5587
    %v5658 = vpop.f32.mrf.mxu0
    %v5659 = vadd.f32 %v5569, %v5658
    %v5660 = vpop.f32.mrf.mxu0
    %5661 = vmatprep.mubr.f32.mxu0 0.0
    %5662 = vmatmul.mubr.f32.gmra.mxu0 %v5590
    %v5663 = vpop.f32.mrf.mxu0
    %v5664 = vadd.f32 %v5569, %v5663
    %v5665 = vpop.f32.mrf.mxu0
    %5666 = vdwg.mxu0
    %v5667 = vadd.f32 %v3001, %v5659
    %v5668 = vadd.f32 %v3002, %v5664
    %v5669 = vsel %vm48, %v5667, 0.0
    %5670 = vadd.xlane.f32.xlu0 %v5669
    %v5671 = vpop.xlane.xlu0 %5670
    %v5672 = vsel %vm48, %v5668, 0.0
    %5673 = vadd.xlane.f32.xlu0 %v5672
    %v5674 = vpop.xlane.xlu0 %5673
    %v5675 = vmul.f32 %v5671, %v2708
    %v5676 = vmul.f32 %v5674, %v2708
    %v5677 = vsub.f32 %v5667, %v5675
    %v5678 = vsub.f32 %v5668, %v5676
    %v5679 = vmul.f32 %v5677, %v5677
    %v5680 = vmul.f32 %v5678, %v5678
    %v5681 = vsel %vm48, %v5679, 0.0
    %5682 = vadd.xlane.f32.xlu0 %v5681
    %v5683 = vpop.xlane.xlu0 %5682
    %v5684 = vsel %vm48, %v5680, 0.0
    %5685 = vadd.xlane.f32.xlu0 %v5684
    %v5686 = vpop.xlane.xlu0 %5685
    %v5687 = vmul.f32 %v5683, %v2708
    %v5688 = vmul.f32 %v5686, %v2708
    %v5689 = vadd.f32 %v5687, 1e-05
    %v5690 = vadd.f32 %v5688, 1e-05
    %v5691 = vrsqrt.pop %v5689
    %v5692 = vrsqrt.pop %v5690
    %v5693 = vmul.f32 %v5677, %v5691
    %v5694 = vmul.f32 %v5678, %v5692
    %v5695 = vlaneseq
    %v5696 = vshrl.u32 %v5695, 7
    %v5697 = vsub.s32 2, %v5696
    %v5698 = vrot.slane %v3014, %v5697
    %v5699 = vmul.f32 %v5693, %v5698
    %v5700 = vmul.f32 %v5694, %v5698
    %v5701 = vlaneseq
    %v5702 = vshrl.u32 %v5701, 7
    %v5703 = vsub.s32 3, %v5702
    %v5704 = vrot.slane %v3014, %v5703
    %v5705 = vadd.f32 %v5699, %v5704
    %v5706 = vadd.f32 %v5700, %v5704
    %v5707 = vlaneseq
    %v5708 = vshrl.u32 %v5707, 7
    %v5709 = vsub.s32 4, %v5708
    %v5710 = vrot.slane %v3014, %v5709
    %v5712 = vsel %vm48, %v5705, 0
    %v5715 = vsel %vm48, %v5706, 0
    %5717 = vmatprep.subr.mxu0 0.0
    %5718 = vmatpush1.msra.mxu0 0.0
    %5719 = vmatprep.subr.mxu0 0.0
    %5720 = vmatpush1.msra.mxu0 0.0
    %5721 = vmatprep.subr.mxu0 0.0
    %5722 = vmatpush1.msra.mxu0 0.0
    %5723 = vmatprep.subr.mxu0 0.0
    %5724 = vmatpush1.msra.mxu0 0.0
    %5725 = vmatprep.subr.mxu0 0.0
    %5726 = vmatpush1.msra.mxu0 0.0
    %5727 = vmatprep.subr.mxu0 0.0
    %5728 = vmatpush1.msra.mxu0 0.0
    %5729 = vmatprep.subr.mxu0 0.0
    %5730 = vmatpush1.msra.mxu0 0.0
    %5731 = vmatprep.subr.mxu0 0.0
    %5732 = vmatpush1.msra.mxu0 0.0
    %5733 = vmatprep.subr.mxu0 0.0
    %5734 = vmatpush1.msra.mxu0 0.0
    %5735 = vmatprep.subr.mxu0 0.0
    %5736 = vmatpush1.msra.mxu0 0.0
    %5737 = vmatprep.subr.mxu0 0.0
    %5738 = vmatpush1.msra.mxu0 0.0
    %5739 = vmatprep.subr.mxu0 0.0
    %5740 = vmatpush1.msra.mxu0 0.0
    %5741 = vmatprep.subr.mxu0 0.0
    %5742 = vmatpush1.msra.mxu0 %v3011
    %5743 = vmatprep.subr.mxu0 0.0
    %5744 = vmatpush1.msra.mxu0 %v3009
    %5745 = vmatprep.subr.mxu0 0.0
    %5746 = vmatpush1.msra.mxu0 %v3007
    %5747 = vmatprep.subr.mxu0 0.0
    %5748 = vmatpush1.msra.mxu0 %v3005
    %5749 = vmatprep.subr.mxu0 0.0
    %5750 = vmatpush2.msra.mxu0 0.0
    %5751 = vmatprep.subr.mxu0 0.0
    %5752 = vmatpush2.msra.mxu0 0.0
    %5753 = vmatprep.subr.mxu0 0.0
    %5754 = vmatpush2.msra.mxu0 0.0
    %5755 = vmatprep.subr.mxu0 0.0
    %5756 = vmatpush2.msra.mxu0 0.0
    %5757 = vmatprep.subr.mxu0 0.0
    %5758 = vmatpush2.msra.mxu0 0.0
    %5759 = vmatprep.subr.mxu0 0.0
    %5760 = vmatpush2.msra.mxu0 0.0
    %5761 = vmatprep.subr.mxu0 0.0
    %5762 = vmatpush2.msra.mxu0 0.0
    %5763 = vmatprep.subr.mxu0 0.0
    %5764 = vmatpush2.msra.mxu0 0.0
    %5765 = vmatprep.subr.mxu0 0.0
    %5766 = vmatpush2.msra.mxu0 0.0
    %5767 = vmatprep.subr.mxu0 0.0
    %5768 = vmatpush2.msra.mxu0 0.0
    %5769 = vmatprep.subr.mxu0 0.0
    %5770 = vmatpush2.msra.mxu0 0.0
    %5771 = vmatprep.subr.mxu0 0.0
    %5772 = vmatpush2.msra.mxu0 0.0
    %5773 = vmatprep.subr.mxu0 0.0
    %5774 = vmatpush2.msra.mxu0 0.0
    %5775 = vmatprep.subr.mxu0 0.0
    %5776 = vmatpush2.msra.mxu0 0.0
    %5777 = vmatprep.subr.mxu0 0.0
    %5778 = vmatpush2.msra.mxu0 0.0
    %5779 = vmatprep.subr.mxu0 0.0
    %5780 = vmatpush2.msra.mxu0 0.0
    %5781 = vmatprep.mubr.f32.mxu0 0.0
    %5782 = vmatmul.mubr.f32.gmra.mxu0 %v5712
    %v5783 = vpop.f32.mrf.mxu0
    %v5784 = vadd.f32 %v5710, %v5783
    %v5785 = vpop.f32.mrf.mxu0
    %5786 = vmatprep.mubr.f32.mxu0 0.0
    %5787 = vmatmul.mubr.f32.gmra.mxu0 %v5715
    %v5788 = vpop.f32.mrf.mxu0
    %v5789 = vadd.f32 %v5710, %v5788
    %v5790 = vpop.f32.mrf.mxu0
    %5791 = vdwg.mxu0
    %v5792 = vmul.f32 %v5784, 0.5
    %v5793 = vmul.f32 %v5789, 0.5
    %v5794 = vmul.f32 %v5784, 0.70710677
    %v5795 = vmul.f32 %v5789, 0.70710677
    %vm5796 = vcmp.ge.f32.partialorder %v5794, 0.0
    %vm5797 = vcmp.ge.f32.partialorder %v5795, 0.0
    %v5798 = vsel %vm5796, 1.0, -1.0
    %v5799 = vsel %vm5797, 1.0, -1.0
    %v5800 = vand.u32 2147483647, %v5794
    %v5801 = vand.u32 2147483647, %v5795
    %v5802 = vmul.f32 %v5800, 0.3275911
    %v5803 = vmul.f32 %v5801, 0.3275911
    %v5804 = vadd.f32 %v5802, 1.0
    %v5805 = vadd.f32 %v5803, 1.0
    %v5806 = vrcp.pop %v5804
    %v5807 = vrcp.pop %v5805
    %v5808 = vmul.f32 %v5806, 1.0614054
    %v5809 = vmul.f32 %v5807, 1.0614054
    %v5810 = vadd.f32 %v5808, -1.4531521
    %v5811 = vadd.f32 %v5809, -1.4531521
    %v5812 = vmul.f32 %v5810, %v5806
    %v5813 = vmul.f32 %v5811, %v5807
    %v5814 = vadd.f32 %v5812, 1.4214138
    %v5815 = vadd.f32 %v5813, 1.4214138
    %v5816 = vmul.f32 %v5814, %v5806
    %v5817 = vmul.f32 %v5815, %v5807
    %v5818 = vadd.f32 %v5816, -0.28449672
    %v5819 = vadd.f32 %v5817, -0.28449672
    %v5820 = vmul.f32 %v5818, %v5806
    %v5821 = vmul.f32 %v5819, %v5807
    %v5822 = vadd.f32 %v5820, 0.2548296
    %v5823 = vadd.f32 %v5821, 0.2548296
    %v5824 = vmul.f32 %v5822, %v5806
    %v5825 = vmul.f32 %v5823, %v5807
    %v5826 = vsub.f32 0.0, %v5800
    %v5827 = vsub.f32 0.0, %v5801
    %v5828 = vmul.f32 %v5826, %v5800
    %v5829 = vmul.f32 %v5827, %v5801
    %v5830 = vmul.f32 %v5828, 1.442695
    %v5831 = vpow.pop %v5830
    %v5832 = vmul.f32 %v5829, 1.442695
    %v5833 = vpow.pop %v5832
    %v5834 = vmul.f32 %v5824, %v5831
    %v5835 = vmul.f32 %v5825, %v5833
    %v5836 = vsub.f32 1.0, %v5834
    %v5837 = vsub.f32 1.0, %v5835
    %v5838 = vmul.f32 %v5798, %v5836
    %v5839 = vmul.f32 %v5799, %v5837
    %v5840 = vadd.f32 %v5838, 1.0
    %v5841 = vadd.f32 %v5839, 1.0
    %v5842 = vmul.f32 %v5792, %v5840
    %v5843 = vmul.f32 %v5793, %v5841
    %v5844 = vlaneseq
    %v5845 = vshrl.u32 %v5844, 7
    %v5846 = vsub.s32 5, %v5845
    %v5847 = vrot.slane %v3014, %v5846
    %v5849 = vsel %vm1014, %v5842, 0
    %v5852 = vsel %vm1014, %v5843, 0
    %5854 = vmatprep.subr.mxu0 0.0
    %5855 = vmatpush1.msra.mxu0 0.0
    %5856 = vmatprep.subr.mxu0 0.0
    %5857 = vmatpush1.msra.mxu0 0.0
    %5858 = vmatprep.subr.mxu0 0.0
    %5859 = vmatpush1.msra.mxu0 0.0
    %5860 = vmatprep.subr.mxu0 0.0
    %5861 = vmatpush1.msra.mxu0 0.0
    %5862 = vmatprep.subr.mxu0 0.0
    %5863 = vmatpush1.msra.mxu0 0.0
    %5864 = vmatprep.subr.mxu0 0.0
    %5865 = vmatpush1.msra.mxu0 0.0
    %5866 = vmatprep.subr.mxu0 0.0
    %5867 = vmatpush1.msra.mxu0 0.0
    %5868 = vmatprep.subr.mxu0 0.0
    %5869 = vmatpush1.msra.mxu0 0.0
    %5870 = vmatprep.subr.mxu0 0.0
    %5871 = vmatpush1.msra.mxu0 0.0
    %5872 = vmatprep.subr.mxu0 0.0
    %5873 = vmatpush1.msra.mxu0 0.0
    %5874 = vmatprep.subr.mxu0 0.0
    %5875 = vmatpush1.msra.mxu0 0.0
    %5876 = vmatprep.subr.mxu0 0.0
    %5877 = vmatpush1.msra.mxu0 0.0
    %5878 = vmatprep.subr.mxu0 0.0
    %5879 = vmatpush1.msra.mxu0 0.0
    %5880 = vmatprep.subr.mxu0 0.0
    %5881 = vmatpush1.msra.mxu0 0.0
    %5882 = vmatprep.subr.mxu0 0.0
    %5883 = vmatpush1.msra.mxu0 0.0
    %5884 = vmatprep.subr.mxu0 0.0
    %5885 = vmatpush1.msra.mxu0 %v3012
    %5886 = vmatprep.subr.mxu0 0.0
    %5887 = vmatpush2.msra.mxu0 0.0
    %5888 = vmatprep.subr.mxu0 0.0
    %5889 = vmatpush2.msra.mxu0 0.0
    %5890 = vmatprep.subr.mxu0 0.0
    %5891 = vmatpush2.msra.mxu0 0.0
    %5892 = vmatprep.subr.mxu0 0.0
    %5893 = vmatpush2.msra.mxu0 0.0
    %5894 = vmatprep.subr.mxu0 0.0
    %5895 = vmatpush2.msra.mxu0 0.0
    %5896 = vmatprep.subr.mxu0 0.0
    %5897 = vmatpush2.msra.mxu0 0.0
    %5898 = vmatprep.subr.mxu0 0.0
    %5899 = vmatpush2.msra.mxu0 0.0
    %5900 = vmatprep.subr.mxu0 0.0
    %5901 = vmatpush2.msra.mxu0 0.0
    %5902 = vmatprep.subr.mxu0 0.0
    %5903 = vmatpush2.msra.mxu0 0.0
    %5904 = vmatprep.subr.mxu0 0.0
    %5905 = vmatpush2.msra.mxu0 0.0
    %5906 = vmatprep.subr.mxu0 0.0
    %5907 = vmatpush2.msra.mxu0 0.0
    %5908 = vmatprep.subr.mxu0 0.0
    %5909 = vmatpush2.msra.mxu0 0.0
    %5910 = vmatprep.subr.mxu0 0.0
    %5911 = vmatpush2.msra.mxu0 0.0
    %5912 = vmatprep.subr.mxu0 0.0
    %5913 = vmatpush2.msra.mxu0 0.0
    %5914 = vmatprep.subr.mxu0 0.0
    %5915 = vmatpush2.msra.mxu0 0.0
    %5916 = vmatprep.subr.mxu0 0.0
    %5917 = vmatpush2.msra.mxu0 0.0
    %5918 = vmatprep.mubr.f32.mxu0 0.0
    %5919 = vmatmul.mubr.f32.gmra.mxu0 %v5849
    %v5920 = vpop.f32.mrf.mxu0
    %v5921 = vadd.f32 %v5847, %v5920
    %v5922 = vpop.f32.mrf.mxu0
    %5923 = vmatprep.mubr.f32.mxu0 0.0
    %5924 = vmatmul.mubr.f32.gmra.mxu0 %v5852
    %v5925 = vpop.f32.mrf.mxu0
    %v5926 = vadd.f32 %v5847, %v5925
    %v5927 = vpop.f32.mrf.mxu0
    %5928 = vdwg.mxu0
    %v5929 = vadd.f32 %v5705, %v5921
    %v5930 = vadd.f32 %v5706, %v5926
    %v5931 = vsel %vm48, %v5929, 0.0
    %5932 = vadd.xlane.f32.xlu0 %v5931
    %v5933 = vpop.xlane.xlu0 %5932
    %v5934 = vsel %vm48, %v5930, 0.0
    %5935 = vadd.xlane.f32.xlu0 %v5934
    %v5936 = vpop.xlane.xlu0 %5935
    %v5937 = vmul.f32 %v5933, %v2708
    %v5938 = vmul.f32 %v5936, %v2708
    %v5939 = vsub.f32 %v5929, %v5937
    %v5940 = vsub.f32 %v5930, %v5938
    %v5941 = vmul.f32 %v5939, %v5939
    %v5942 = vmul.f32 %v5940, %v5940
    %v5943 = vsel %vm48, %v5941, 0.0
    %5944 = vadd.xlane.f32.xlu0 %v5943
    %v5945 = vpop.xlane.xlu0 %5944
    %v5946 = vsel %vm48, %v5942, 0.0
    %5947 = vadd.xlane.f32.xlu0 %v5946
    %v5948 = vpop.xlane.xlu0 %5947
    %v5949 = vmul.f32 %v5945, %v2708
    %v5950 = vmul.f32 %v5948, %v2708
    %v5951 = vadd.f32 %v5949, 1e-05
    %v5952 = vadd.f32 %v5950, 1e-05
    %v5953 = vrsqrt.pop %v5951
    %v5954 = vrsqrt.pop %v5952
    %v5955 = vmul.f32 %v5939, %v5953
    %v5956 = vmul.f32 %v5940, %v5954
    %v5957 = vlaneseq
    %v5958 = vshrl.u32 %v5957, 7
    %v5959 = vsub.s32 6, %v5958
    %v5960 = vrot.slane %v3014, %v5959
    %v5961 = vmul.f32 %v5955, %v5960
    %v5962 = vmul.f32 %v5956, %v5960
    %v5963 = vlaneseq
    %v5964 = vshrl.u32 %v5963, 7
    %v5965 = vsub.s32 7, %v5964
    %v5966 = vrot.slane %v3014, %v5965
    %v5967 = vadd.f32 %v5961, %v5966
    %v5968 = vadd.f32 %v5962, %v5966
    %v5969 = vld [vmem:[%s3] sm:$0xff]
    %v5970 = vld [vmem:[%s3 + $0x8] sm:$0xff]
    %v5971 = vld [vmem:[%s3 + $0x10] sm:$0xff]
    %v5972 = vld [vmem:[%s3 + $0x18] sm:$0xff]
    %v5973 = vld [vmem:[%s3 + $0x20] sm:$0xff]
    %v5976 = vrot.slane %v5968, 7
    %vm5977 = vcmask 1041409
    %v5978 = vsel %vm5977, %v5976, %v5967
    %vm5980 = vcmask 254976
    %v5981 = vsel %vm5980, %v5978, 0.0
    %5982 = vadd.xlane.f32.xlu0 %v5981
    %v5983 = vpop.xlane.xlu0 %5982
    %v5984 = vmul.f32 %v5983, %v2708
    %v5986 = vrot.slane %v5984, 1
    %v5989 = vsub.f32 %v5967, %v5984
    %v5990 = vsub.f32 %v5968, %v5986
    %v5991 = vmul.f32 %v5989, %v5989
    %v5992 = vmul.f32 %v5990, %v5990
    %v5995 = vrot.slane %v5992, 7
    %v5996 = vsel %vm5977, %v5995, %v5991
    %v5998 = vsel %vm5980, %v5996, 0.0
    %5999 = vadd.xlane.f32.xlu0 %v5998
    %v6000 = vpop.xlane.xlu0 %5999
    %v6001 = vmul.f32 %v6000, %v2708
    %v6002 = vadd.f32 %v6001, 1e-05
    %v6003 = vrsqrt.pop %v6002
    %v6005 = vrot.slane %v6003, 1
    %v6008 = vmul.f32 %v5989, %v6003
    %v6009 = vmul.f32 %v5990, %v6005
    %v6010 = vlaneseq
    %v6011 = vshrl.u32 %v6010, 7
    %v6012 = vsub.s32 0, %v6011
    %v6013 = vrot.slane %v5973, %v6012
    %v6014 = vmul.f32 %v6008, %v6013
    %v6015 = vmul.f32 %v6009, %v6013
    %v6016 = vlaneseq
    %v6017 = vshrl.u32 %v6016, 7
    %v6018 = vsub.s32 1, %v6017
    %v6019 = vrot.slane %v5973, %v6018
    %v6020 = vadd.f32 %v6014, %v6019
    %v6021 = vadd.f32 %v6015, %v6019
    %v6022 = vlaneseq
    %v6023 = vshrl.u32 %v6022, 7
    %v6024 = vsub.s32 2, %v6023
    %v6025 = vrot.slane %v5973, %v6024
    %v6028 = vrot.slane %v6021, 7
    %v6029 = vsel %vm5977, %v6028, %v6020
    %v6030 = vsel %vm48, %v6029, 0
    %6032 = vmatprep.subr.mxu0 0.0
    %6033 = vmatpush1.msra.mxu0 0.0
    %6034 = vmatprep.subr.mxu0 0.0
    %6035 = vmatpush1.msra.mxu0 0.0
    %6036 = vmatprep.subr.mxu0 0.0
    %6037 = vmatpush1.msra.mxu0 0.0
    %6038 = vmatprep.subr.mxu0 0.0
    %6039 = vmatpush1.msra.mxu0 0.0
    %6040 = vmatprep.subr.mxu0 0.0
    %6041 = vmatpush1.msra.mxu0 0.0
    %6042 = vmatprep.subr.mxu0 0.0
    %6043 = vmatpush1.msra.mxu0 0.0
    %6044 = vmatprep.subr.mxu0 0.0
    %6045 = vmatpush1.msra.mxu0 0.0
    %6046 = vmatprep.subr.mxu0 0.0
    %6047 = vmatpush1.msra.mxu0 0.0
    %6048 = vmatprep.subr.mxu0 0.0
    %6049 = vmatpush1.msra.mxu0 0.0
    %6050 = vmatprep.subr.mxu0 0.0
    %6051 = vmatpush1.msra.mxu0 0.0
    %6052 = vmatprep.subr.mxu0 0.0
    %6053 = vmatpush1.msra.mxu0 0.0
    %6054 = vmatprep.subr.mxu0 0.0
    %6055 = vmatpush1.msra.mxu0 0.0
    %6056 = vmatprep.subr.mxu0 0.0
    %6057 = vmatpush1.msra.mxu0 %v5972
    %6058 = vmatprep.subr.mxu0 0.0
    %6059 = vmatpush1.msra.mxu0 %v5971
    %6060 = vmatprep.subr.mxu0 0.0
    %6061 = vmatpush1.msra.mxu0 %v5970
    %6062 = vmatprep.subr.mxu0 0.0
    %6063 = vmatpush1.msra.mxu0 %v5969
    %6064 = vmatprep.subr.mxu0 0.0
    %6065 = vmatpush2.msra.mxu0 0.0
    %6066 = vmatprep.subr.mxu0 0.0
    %6067 = vmatpush2.msra.mxu0 0.0
    %6068 = vmatprep.subr.mxu0 0.0
    %6069 = vmatpush2.msra.mxu0 0.0
    %6070 = vmatprep.subr.mxu0 0.0
    %6071 = vmatpush2.msra.mxu0 0.0
    %6072 = vmatprep.subr.mxu0 0.0
    %6073 = vmatpush2.msra.mxu0 0.0
    %6074 = vmatprep.subr.mxu0 0.0
    %6075 = vmatpush2.msra.mxu0 0.0
    %6076 = vmatprep.subr.mxu0 0.0
    %6077 = vmatpush2.msra.mxu0 0.0
    %6078 = vmatprep.subr.mxu0 0.0
    %6079 = vmatpush2.msra.mxu0 0.0
    %6080 = vmatprep.subr.mxu0 0.0
    %6081 = vmatpush2.msra.mxu0 0.0
    %6082 = vmatprep.subr.mxu0 0.0
    %6083 = vmatpush2.msra.mxu0 0.0
    %6084 = vmatprep.subr.mxu0 0.0
    %6085 = vmatpush2.msra.mxu0 0.0
    %6086 = vmatprep.subr.mxu0 0.0
    %6087 = vmatpush2.msra.mxu0 0.0
    %6088 = vmatprep.subr.mxu0 0.0
    %6089 = vmatpush2.msra.mxu0 0.0
    %6090 = vmatprep.subr.mxu0 0.0
    %6091 = vmatpush2.msra.mxu0 0.0
    %6092 = vmatprep.subr.mxu0 0.0
    %6093 = vmatpush2.msra.mxu0 0.0
    %6094 = vmatprep.subr.mxu0 0.0
    %6095 = vmatpush2.msra.mxu0 0.0
    %6096 = vmatprep.mubr.f32.mxu0 0.0
    %6097 = vmatmul.mubr.f32.gmra.mxu0 %v6030
    %v6098 = vpop.f32.mrf.mxu0
    %v6099 = vadd.f32 %v6025, %v6098
    %v6100 = vpop.f32.mrf.mxu0
    %6101 = vdwg.mxu0
    %6102 = vst.msk [vmem:[#allocation5] sm:$0x3] %vm5980, %v6099
    // Predicated region
    $region22: #{tpu_custom_call.1} parent=1 // pred_check
      _
    $region23: #{tpu_custom_call.1} parent=1 // pred_check_branch
      %6104 = sbr.rel (0) target = $region25
    $region24: #{tpu_custom_call.1} parent=1 // pred_region
      %s6106 = ssub.s32 32, 32
      %6107 = vsyncadd [#allocation4], %s6106
      %s6109 = sshll.u32 [#allocation5], 4
      %s6110 = int_to_ptr.vmem [resolvable:$true] %s6109
      %6112 = dma.vmem_to_hbm [thread:$0]  %s6110, 32, %s4, [#allocation4]
    $region25: #{tpu_custom_call.1} parent=1 // pred_fallthru
      _
    // Predicated region
    $region26: #{tpu_custom_call.1} parent=1 // pred_check
      _
    $region27: #{tpu_custom_call.1} parent=1 // pred_check_branch
      %6114 = sbr.rel (0) target = $region29
    $region28: #{tpu_custom_call.1} parent=1 // pred_region
      %6115 = dma.done [#allocation4], 32
    $region29: #{tpu_custom_call.1} parent=1 // pred_fallthru
      _
    %6116 = vsyncpa [#allocation3], 1
    %6117 = vsyncpa [#allocation4], 1

</llo_original>
